<compile_context>
chip_gen: v6e
topology: v6e:2x2x1
jax: 0.10.0
libtpu: 0.0.40
codegen_flags: <defaults>
</compile_context>

<pallas_src>
import functools

import jax
import jax.numpy as jnp
import numpy as np
from jax import lax
from jax.experimental import pallas as pl
from jax.experimental.pallas import tpu as pltpu


# ----------------------------------------------------------------------------
# Pallas kernel: whole residual block for one batch element.
#   x_ref     : (D+2, H+2, W*Cin)      bf16, D/H zero-padded input (W folded into lanes)
#   w1_ref    : (3, 3, W*Cin,  W*Cout) bf16, banded conv1 weight (kw folded into K/N)
#   w2_ref    : (3, 3, W*Cout, W*Cout) bf16, banded conv2 weight
#   wres_ref  : (W*Cin, W*Cout)        bf16, block-diag 1x1x1 residual conv (only if present)
#   s*/b*_ref : (1, W*Cout)            f32, folded BN scale / bias (tiled over W)
#   out_ref   : (D*H, W*Cout)          bf16, lane-dense output
#   y1pad_ref : (D+2, H+2, W*Cout)     bf16 scratch (D/H-padded conv1 activation)
# ----------------------------------------------------------------------------
def _res_block_kernel(has_res, *refs):
    if has_res:
        (x_ref, w1_ref, w2_ref, wres_ref,
         s1_ref, b1_ref, s2_ref, b2_ref,
         out_ref, y1pad_ref) = refs
    else:
        (x_ref, w1_ref, w2_ref,
         s1_ref, b1_ref, s2_ref, b2_ref,
         out_ref, y1pad_ref) = refs
        wres_ref = None

    Dp, Hp, WCin = x_ref.shape
    D, H = Dp - 2, Hp - 2
    WCout = out_ref.shape[-1]
    flat = D * H
    act_dt = y1pad_ref.dtype

    # ---- zero only the D/H halo of the activation scratch (interior is fully
    #      overwritten below; no full zero fill, no cross-step dependence) ----
    y1pad_ref[0:1, :, :] = jnp.zeros((1, Hp, WCout), act_dt)
    y1pad_ref[Dp - 1:Dp, :, :] = jnp.zeros((1, Hp, WCout), act_dt)
    y1pad_ref[:, 0:1, :] = jnp.zeros((Dp, 1, WCout), act_dt)
    y1pad_ref[:, Hp - 1:Hp, :] = jnp.zeros((Dp, 1, WCout), act_dt)

    # ---- hoisted kh-shifted slabs for conv1 (3 slab copies instead of 9) ----
    x_sl = [x_ref[:, kh:kh + H, :].reshape(Dp * H, WCin) for kh in range(3)]

    # ---- conv1: 9 banded matmuls, register (value) accumulation, one VMEM write ----
    acc = None
    for kd in range(3):
        row0 = kd * H                      # multiple of 8 when H % 8 == 0 -> aligned slice
        for kh in range(3):
            slab = x_sl[kh][row0:row0 + flat]
            c = jnp.dot(slab, w1_ref[kd, kh], preferred_element_type=jnp.float32)
            acc = c if acc is None else acc + c

    # ---- bn1 + relu, single bf16 store of the interior ----
    y1 = jnp.maximum(acc * s1_ref[...] + b1_ref[...], 0.0)
    y1pad_ref[1:1 + D, 1:1 + H, :] = y1.reshape(D, H, WCout).astype(act_dt)

    # ---- residual path (reuse kh=1 slab; skip the matmul when Cin == Cout) ----
    x_center = x_sl[1][H:H + flat]
    if has_res:
        acc = jnp.dot(x_center, wres_ref[...], preferred_element_type=jnp.float32)
    else:
        acc = x_center.astype(jnp.float32)

    # ---- conv2: hoisted slabs + 9 banded matmuls accumulated on top of the residual ----
    y1_sl = [y1pad_ref[:, kh:kh + H, :].reshape(Dp * H, WCout) for kh in range(3)]
    for kd in range(3):
        row0 = kd * H
        for kh in range(3):
            slab = y1_sl[kh][row0:row0 + flat]
            acc = acc + jnp.dot(slab, w2_ref[kd, kh], preferred_element_type=jnp.float32)

    # ---- bn2 + relu, single lane-dense bf16 store ----
    y = jnp.maximum(acc * s2_ref[...] + b2_ref[...], 0.0)
    out_ref[...] = y.astype(out_ref.dtype)


# ----------------------------------------------------------------------------
# Wrapper helpers
# ----------------------------------------------------------------------------
def _fold_bn(gamma, beta, mean, var, eps=1e-5):
    scale = gamma / jnp.sqrt(var + eps)
    bias = beta - mean * scale
    return scale.astype(jnp.float32), bias.astype(jnp.float32)


def _band_matrix(W):
    """band[kw, iw, w] = 1 iff input position iw == w + kw - 1 (zero-pad implicit)."""
    band = np.zeros((3, W, W), np.float32)
    for kw in range(3):
        for w in range(W):
            iw = w + kw - 1
            if 0 <= iw < W:
                band[kw, iw, w] = 1.0
    return jnp.asarray(band)


def _banded_conv_weight(w_oidhw, W):
    """PyTorch (Cout, Cin, 3,3,3) -> (3, 3, W*Cin, W*Cout), kw folded into K/N."""
    w_dhwio = jnp.transpose(w_oidhw, (2, 3, 4, 1, 0))       # (kd, kh, kw, Cin, Cout)
    Ci, Co = w_dhwio.shape[3], w_dhwio.shape[4]
    band = _band_matrix(W)                                    # (kw, iw, w)
    big = jnp.einsum("dhkio,kvw->dhviwo", w_dhwio, band)      # (3, 3, W, Ci, W, Co)
    return big.reshape(3, 3, W * Ci, W * Co)


def _blockdiag_res_weight(wres_io, W):
    """(Cin, Cout) 1x1x1 conv weight -> (W*Cin, W*Cout) block-diagonal."""
    Ci, Co = wres_io.shape
    big = jnp.einsum("vw,io->viwo", jnp.eye(W, dtype=wres_io.dtype), wres_io)
    return big.reshape(W * Ci, W * Co)


# ----------------------------------------------------------------------------
# Wrapper
# ----------------------------------------------------------------------------
@jax.jit
def basic3d_resblock_pallas(x_ncdhw, params):
    N, Cin, D, H, W = x_ncdhw.shape
    Cout = params["w1"].shape[0]
    has_res = "wres" in params                      # static (pytree structure)
    WCin, WCout = W * Cin, W * Cout
    Dp, Hp = D + 2, H + 2

    # NCDHW -> (N, D, H, W*Cin) bf16, pad only D/H by 1 (W halo handled by banded weights).
    x = jnp.transpose(x_ncdhw, (0, 2, 3, 4, 1)).reshape(N, D, H, WCin)
    xp = jnp.pad(x.astype(jnp.bfloat16), ((0, 0), (1, 1), (1, 1), (0, 0)))

    w1b = _banded_conv_weight(params["w1"], W).astype(jnp.bfloat16)   # (3,3,WCin,WCout)
    w2b = _banded_conv_weight(params["w2"], W).astype(jnp.bfloat16)   # (3,3,WCout,WCout)

    s1, b1 = _fold_bn(params["g1"], params["be1"], params["m1"], params["v1"])
    s2, b2 = _fold_bn(params["g2"], params["be2"], params["m2"], params["v2"])
    s1r = jnp.tile(s1, W).reshape(1, WCout)
    b1r = jnp.tile(b1, W).reshape(1, WCout)
    s2r = jnp.tile(s2, W).reshape(1, WCout)
    b2r = jnp.tile(b2, W).reshape(1, WCout)

    inputs = [xp, w1b, w2b]
    in_specs = [
        pl.BlockSpec((None, Dp, Hp, WCin), lambda n: (n, 0, 0, 0)),
        pl.BlockSpec((3, 3, WCin, WCout), lambda n: (0, 0, 0, 0)),
        pl.BlockSpec((3, 3, WCout, WCout), lambda n: (0, 0, 0, 0)),
    ]
    if has_res:
        wrb = _blockdiag_res_weight(params["wres"].astype(jnp.float32), W)
        inputs.append(wrb.astype(jnp.bfloat16))
        in_specs.append(pl.BlockSpec((WCin, WCout), lambda n: (0, 0)))
    inputs += [s1r, b1r, s2r, b2r]
    in_specs += [pl.BlockSpec((1, WCout), lambda n: (0, 0))] * 4

    # FLOPs actually executed by the banded matmuls (not the ideal 27*Cin*Cout conv count).
    flops = 2 * N * 9 * D * H * (WCin * WCout + WCout * WCout)
    if has_res:
        flops += 2 * N * D * H * WCin * WCout
    bytes_accessed = (xp.size * 2 + w1b.size * 2 + w2b.size * 2
                      + (WCin * WCout * 2 if has_res else 0)
                      + 4 * WCout * 4
                      + N * D * H * WCout * 2)                 # bf16 output

    out = pl.pallas_call(
        functools.partial(_res_block_kernel, has_res),
        out_shape=jax.ShapeDtypeStruct((N, D * H, WCout), jnp.bfloat16),
        grid=(N,),
        in_specs=in_specs,
        out_specs=pl.BlockSpec((None, D * H, WCout), lambda n: (n, 0, 0)),
        scratch_shapes=[
            pltpu.VMEM((Dp, Hp, WCout), jnp.bfloat16),   # D/H-padded conv1 activation
        ],
        compiler_params=pltpu.CompilerParams(dimension_semantics=("parallel",)),
        cost_estimate=pl.CostEstimate(flops=flops, transcendentals=0,
                                      bytes_accessed=bytes_accessed),
    )(*inputs)

    # (N, D*H, W*Cout) -> NCDHW
    out = out.reshape(N, D, H, W, Cout)
    return jnp.transpose(out, (0, 4, 1, 2, 3))


# ----------------------------------------------------------------------------
# Deterministic parameter init (shapes follow Basic3DResBlock.__init__, stride=(1,1,1))
# ----------------------------------------------------------------------------
def init_params(key, in_planes, out_planes):
    ks = jax.random.split(key, 11)
    p = {}
    p["w1"] = 0.1 * jax.random.normal(ks[0], (out_planes, in_planes, 3, 3, 3), jnp.float32)
    p["w2"] = 0.1 * jax.random.normal(ks[1], (out_planes, out_planes, 3, 3, 3), jnp.float32)
    if in_planes != out_planes:
        wres_t = 0.1 * jax.random.normal(ks[2], (out_planes, in_planes, 1, 1, 1), jnp.float32)
        p["wres"] = jnp.transpose(wres_t[:, :, 0, 0, 0], (1, 0))   # (Cin, Cout)
    p["g1"] = 1.0 + 0.1 * jax.random.normal(ks[3], (out_planes,), jnp.float32)
    p["be1"] = 0.1 * jax.random.normal(ks[4], (out_planes,), jnp.float32)
    p["m1"] = 0.05 * jax.random.normal(ks[5], (out_planes,), jnp.float32)
    p["v1"] = jax.random.uniform(ks[6], (out_planes,), jnp.float32, 0.5, 1.5)
    p["g2"] = 1.0 + 0.1 * jax.random.normal(ks[7], (out_planes,), jnp.float32)
    p["be2"] = 0.1 * jax.random.normal(ks[8], (out_planes,), jnp.float32)
    p["m2"] = 0.05 * jax.random.normal(ks[9], (out_planes,), jnp.float32)
    p["v2"] = jax.random.uniform(ks[10], (out_planes,), jnp.float32, 0.5, 1.5)
    return p


# ----------------------------------------------------------------------------
# Pure-JAX reference (same bf16 storage / f32 accumulation policy as the kernel)
# ----------------------------------------------------------------------------
def basic3d_resblock_ref(x_ncdhw, params, eps=1e-5):
    x = jnp.transpose(x_ncdhw, (0, 2, 3, 4, 1)).astype(jnp.bfloat16)   # NDHWC
    w1 = jnp.transpose(params["w1"], (2, 3, 4, 1, 0)).astype(jnp.bfloat16)
    w2 = jnp.transpose(params["w2"], (2, 3, 4, 1, 0)).astype(jnp.bfloat16)

    def conv3(a, w):
        return lax.conv_general_dilated(
            a, w, (1, 1, 1), [(1, 1)] * 3,
            dimension_numbers=("NDHWC", "DHWIO", "NDHWC"),
            preferred_element_type=jnp.float32)

    s1, b1 = _fold_bn(params["g1"], params["be1"], params["m1"], params["v1"], eps)
    s2, b2 = _fold_bn(params["g2"], params["be2"], params["m2"], params["v2"], eps)

    y1 = jnp.maximum(conv3(x, w1) * s1 + b1, 0.0).astype(jnp.bfloat16)
    x_main = conv3(y1, w2)
    if "wres" in params:
        x_res = jnp.einsum("ndhwi,io->ndhwo", x, params["wres"].astype(jnp.bfloat16),
                           preferred_element_type=jnp.float32)
    else:
        x_res = x.astype(jnp.float32)
    y = jnp.maximum((x_main + x_res) * s2 + b2, 0.0)
    return jnp.transpose(y, (0, 4, 1, 2, 3))


if __name__ == "__main__":
    key = jax.random.PRNGKey(0)
    # W*Cout = 8*16 = 128 -> lane-dense (unmasked) output / activation stores.
    N, D, H, W = 2, 8, 8, 8

    # (Cin != Cout) exercises the 1x1x1 residual conv; (Cin == Cout) the identity path.
    for (Cin, Cout) in [(4, 16), (16, 16)]:
        key, kx, kp = jax.random.split(key, 3)
        x = jax.random.normal(kx, (N, Cin, D, H, W), jnp.float32)   # NCDHW like PyTorch
        params = init_params(kp, Cin, Cout)

        out = jax.block_until_ready(basic3d_resblock_pallas(x, params))
        ref = basic3d_resblock_ref(x, params).astype(jnp.bfloat16)
        np.testing.assert_allclose(np.asarray(out).astype(np.float32),
                                   np.asarray(ref).astype(np.float32),
                                   rtol=2e-2, atol=2e-2)

    print("KERNEL_OK")
</pallas_src>

<mosaic_0001>
module attributes {stable_mosaic.version = 11 : i64} {
  func.func @_res_block_kernel(%arg0: i32, %arg1: memref<1x10x10x32xbf16, #tpu.memory_space<vmem>>, %arg2: memref<3x3x32x128xbf16, #tpu.memory_space<vmem>>, %arg3: memref<3x3x128x128xbf16, #tpu.memory_space<vmem>>, %arg4: memref<32x128xbf16, #tpu.memory_space<vmem>>, %arg5: memref<1x128xf32, #tpu.memory_space<vmem>>, %arg6: memref<1x128xf32, #tpu.memory_space<vmem>>, %arg7: memref<1x128xf32, #tpu.memory_space<vmem>>, %arg8: memref<1x128xf32, #tpu.memory_space<vmem>>, %arg9: memref<1x64x128xbf16, #tpu.memory_space<vmem>>, %arg10: memref<10x10x128xbf16, #tpu.memory_space<vmem>>) attributes {dimension_semantics = [#tpu.dimension_semantics<parallel>], iteration_bounds = array<i64: 2>, scalar_prefetch = 0 : i64, scratch_operands = 1 : i64, tpu.core_type = #tpu.core_type<tc>, window_params = [{transform_indices = @transform_0, window_bounds = array<i64: 1, 10, 10, 32>}, {pipeline_mode = #tpu.pipeline_mode<synchronous>, transform_indices = @transform_1, window_bounds = array<i64: 3, 3, 32, 128>}, {pipeline_mode = #tpu.pipeline_mode<synchronous>, transform_indices = @transform_2, window_bounds = array<i64: 3, 3, 128, 128>}, {pipeline_mode = #tpu.pipeline_mode<synchronous>, transform_indices = @transform_3, window_bounds = array<i64: 32, 128>}, {pipeline_mode = #tpu.pipeline_mode<synchronous>, transform_indices = @transform_4, window_bounds = array<i64: 1, 128>}, {pipeline_mode = #tpu.pipeline_mode<synchronous>, transform_indices = @transform_5, window_bounds = array<i64: 1, 128>}, {pipeline_mode = #tpu.pipeline_mode<synchronous>, transform_indices = @transform_6, window_bounds = array<i64: 1, 128>}, {pipeline_mode = #tpu.pipeline_mode<synchronous>, transform_indices = @transform_7, window_bounds = array<i64: 1, 128>}, {transform_indices = @transform_8, window_bounds = array<i64: 1, 64, 128>}]} {
    %cst = arith.constant 0.000000e+00 : bf16
    %0 = vector.broadcast %cst : bf16 to vector<1x10x128xbf16>
    %c0 = arith.constant 0 : index
    %c0_0 = arith.constant 0 : index
    %c0_1 = arith.constant 0 : index
    %1 = vector.load %arg10[%c0, %c0_0, %c0_1] : memref<10x10x128xbf16, #tpu.memory_space<vmem>>, vector<1x10x128xbf16>
    tpu.vector_store %arg10[%c0, %c0_0, %c0_1], %0 {strides = array<i32>} : memref<10x10x128xbf16, #tpu.memory_space<vmem>>, vector<1x10x128xbf16>,
    %cst_2 = arith.constant 0.000000e+00 : bf16
    %2 = vector.broadcast %cst_2 : bf16 to vector<1x10x128xbf16>
    %c9 = arith.constant 9 : index
    %c0_3 = arith.constant 0 : index
    %c0_4 = arith.constant 0 : index
    %3 = vector.load %arg10[%c9, %c0_3, %c0_4] : memref<10x10x128xbf16, #tpu.memory_space<vmem>>, vector<1x10x128xbf16>
    tpu.vector_store %arg10[%c9, %c0_3, %c0_4], %2 {strides = array<i32>} : memref<10x10x128xbf16, #tpu.memory_space<vmem>>, vector<1x10x128xbf16>,
    %cst_5 = arith.constant 0.000000e+00 : bf16
    %4 = vector.broadcast %cst_5 : bf16 to vector<10x1x128xbf16>
    %c0_6 = arith.constant 0 : index
    %c0_7 = arith.constant 0 : index
    %c0_8 = arith.constant 0 : index
    %5 = vector.load %arg10[%c0_6, %c0_7, %c0_8] : memref<10x10x128xbf16, #tpu.memory_space<vmem>>, vector<10x1x128xbf16>
    tpu.vector_store %arg10[%c0_6, %c0_7, %c0_8], %4 {strides = array<i32>} : memref<10x10x128xbf16, #tpu.memory_space<vmem>>, vector<10x1x128xbf16>,
    %cst_9 = arith.constant 0.000000e+00 : bf16
    %6 = vector.broadcast %cst_9 : bf16 to vector<10x1x128xbf16>
    %c0_10 = arith.constant 0 : index
    %c9_11 = arith.constant 9 : index
    %c0_12 = arith.constant 0 : index
    %7 = vector.load %arg10[%c0_10, %c9_11, %c0_12] : memref<10x10x128xbf16, #tpu.memory_space<vmem>>, vector<10x1x128xbf16>
    tpu.vector_store %arg10[%c0_10, %c9_11, %c0_12], %6 {strides = array<i32>} : memref<10x10x128xbf16, #tpu.memory_space<vmem>>, vector<10x1x128xbf16>,
    %c0_13 = arith.constant 0 : index
    %c0_14 = arith.constant 0 : index
    %c0_15 = arith.constant 0 : index
    %c0_16 = arith.constant 0 : index
    %8 = vector.load %arg1[%c0_13, %c0_14, %c0_15, %c0_16] : memref<1x10x10x32xbf16, #tpu.memory_space<vmem>>, vector<1x10x8x32xbf16>
    %9 = vector.shape_cast %8 : vector<1x10x8x32xbf16> to vector<10x8x32xbf16>
    %10 = vector.shape_cast %9 : vector<10x8x32xbf16> to vector<80x32xbf16>
    %c0_17 = arith.constant 0 : index
    %c0_18 = arith.constant 0 : index
    %c1 = arith.constant 1 : index
    %c0_19 = arith.constant 0 : index
    %11 = vector.load %arg1[%c0_17, %c0_18, %c1, %c0_19] : memref<1x10x10x32xbf16, #tpu.memory_space<vmem>>, vector<1x10x8x32xbf16>
    %12 = vector.shape_cast %11 : vector<1x10x8x32xbf16> to vector<10x8x32xbf16>
    %13 = vector.shape_cast %12 : vector<10x8x32xbf16> to vector<80x32xbf16>
    %c0_20 = arith.constant 0 : index
    %c0_21 = arith.constant 0 : index
    %c2 = arith.constant 2 : index
    %c0_22 = arith.constant 0 : index
    %14 = vector.load %arg1[%c0_20, %c0_21, %c2, %c0_22] : memref<1x10x10x32xbf16, #tpu.memory_space<vmem>>, vector<1x10x8x32xbf16>
    %15 = vector.shape_cast %14 : vector<1x10x8x32xbf16> to vector<10x8x32xbf16>
    %16 = vector.shape_cast %15 : vector<10x8x32xbf16> to vector<80x32xbf16>
    %17 = vector.extract_strided_slice %10 {offsets = [0, 0], sizes = [64, 32], strides = [1, 1]} : vector<80x32xbf16> to vector<64x32xbf16>
    %c0_23 = arith.constant 0 : index
    %c0_24 = arith.constant 0 : index
    %c0_25 = arith.constant 0 : index
    %c0_26 = arith.constant 0 : index
    %18 = vector.load %arg2[%c0_23, %c0_24, %c0_25, %c0_26] : memref<3x3x32x128xbf16, #tpu.memory_space<vmem>>, vector<1x1x32x128xbf16>
    %19 = vector.shape_cast %18 : vector<1x1x32x128xbf16> to vector<32x128xbf16>
    %cst_27 = arith.constant dense<0.000000e+00> : vector<64x128xf32>
    %20 = tpu.matmul %17, %19, %cst_27 {dimension_numbers = #tpu.dot_dimension_numbers<[1], [0], [0], [1], [0, 0, 1, 1], [], []>} : vector<64x32xbf16>, vector<32x128xbf16>, vector<64x128xf32> -> vector<64x128xf32>
    %21 = vector.extract_strided_slice %13 {offsets = [0, 0], sizes = [64, 32], strides = [1, 1]} : vector<80x32xbf16> to vector<64x32xbf16>
    %c0_28 = arith.constant 0 : index
    %c1_29 = arith.constant 1 : index
    %c0_30 = arith.constant 0 : index
    %c0_31 = arith.constant 0 : index
    %22 = vector.load %arg2[%c0_28, %c1_29, %c0_30, %c0_31] : memref<3x3x32x128xbf16, #tpu.memory_space<vmem>>, vector<1x1x32x128xbf16>
    %23 = vector.shape_cast %22 : vector<1x1x32x128xbf16> to vector<32x128xbf16>
    %cst_32 = arith.constant dense<0.000000e+00> : vector<64x128xf32>
    %24 = tpu.matmul %21, %23, %cst_32 {dimension_numbers = #tpu.dot_dimension_numbers<[1], [0], [0], [1], [0, 0, 1, 1], [], []>} : vector<64x32xbf16>, vector<32x128xbf16>, vector<64x128xf32> -> vector<64x128xf32>
    %25 = arith.addf %20, %24 : vector<64x128xf32>
    %26 = vector.extract_strided_slice %16 {offsets = [0, 0], sizes = [64, 32], strides = [1, 1]} : vector<80x32xbf16> to vector<64x32xbf16>
    %c0_33 = arith.constant 0 : index
    %c2_34 = arith.constant 2 : index
    %c0_35 = arith.constant 0 : index
    %c0_36 = arith.constant 0 : index
    %27 = vector.load %arg2[%c0_33, %c2_34, %c0_35, %c0_36] : memref<3x3x32x128xbf16, #tpu.memory_space<vmem>>, vector<1x1x32x128xbf16>
    %28 = vector.shape_cast %27 : vector<1x1x32x128xbf16> to vector<32x128xbf16>
    %cst_37 = arith.constant dense<0.000000e+00> : vector<64x128xf32>
    %29 = tpu.matmul %26, %28, %cst_37 {dimension_numbers = #tpu.dot_dimension_numbers<[1], [0], [0], [1], [0, 0, 1, 1], [], []>} : vector<64x32xbf16>, vector<32x128xbf16>, vector<64x128xf32> -> vector<64x128xf32>
    %30 = arith.addf %25, %29 : vector<64x128xf32>
    %31 = vector.extract_strided_slice %10 {offsets = [8, 0], sizes = [64, 32], strides = [1, 1]} : vector<80x32xbf16> to vector<64x32xbf16>
    %c1_38 = arith.constant 1 : index
    %c0_39 = arith.constant 0 : index
    %c0_40 = arith.constant 0 : index
    %c0_41 = arith.constant 0 : index
    %32 = vector.load %arg2[%c1_38, %c0_39, %c0_40, %c0_41] : memref<3x3x32x128xbf16, #tpu.memory_space<vmem>>, vector<1x1x32x128xbf16>
    %33 = vector.shape_cast %32 : vector<1x1x32x128xbf16> to vector<32x128xbf16>
    %cst_42 = arith.constant dense<0.000000e+00> : vector<64x128xf32>
    %34 = tpu.matmul %31, %33, %cst_42 {dimension_numbers = #tpu.dot_dimension_numbers<[1], [0], [0], [1], [0, 0, 1, 1], [], []>} : vector<64x32xbf16>, vector<32x128xbf16>, vector<64x128xf32> -> vector<64x128xf32>
    %35 = arith.addf %30, %34 : vector<64x128xf32>
    %36 = vector.extract_strided_slice %13 {offsets = [8, 0], sizes = [64, 32], strides = [1, 1]} : vector<80x32xbf16> to vector<64x32xbf16>
    %c1_43 = arith.constant 1 : index
    %c1_44 = arith.constant 1 : index
    %c0_45 = arith.constant 0 : index
    %c0_46 = arith.constant 0 : index
    %37 = vector.load %arg2[%c1_43, %c1_44, %c0_45, %c0_46] : memref<3x3x32x128xbf16, #tpu.memory_space<vmem>>, vector<1x1x32x128xbf16>
    %38 = vector.shape_cast %37 : vector<1x1x32x128xbf16> to vector<32x128xbf16>
    %cst_47 = arith.constant dense<0.000000e+00> : vector<64x128xf32>
    %39 = tpu.matmul %36, %38, %cst_47 {dimension_numbers = #tpu.dot_dimension_numbers<[1], [0], [0], [1], [0, 0, 1, 1], [], []>} : vector<64x32xbf16>, vector<32x128xbf16>, vector<64x128xf32> -> vector<64x128xf32>
    %40 = arith.addf %35, %39 : vector<64x128xf32>
    %41 = vector.extract_strided_slice %16 {offsets = [8, 0], sizes = [64, 32], strides = [1, 1]} : vector<80x32xbf16> to vector<64x32xbf16>
    %c1_48 = arith.constant 1 : index
    %c2_49 = arith.constant 2 : index
    %c0_50 = arith.constant 0 : index
    %c0_51 = arith.constant 0 : index
    %42 = vector.load %arg2[%c1_48, %c2_49, %c0_50, %c0_51] : memref<3x3x32x128xbf16, #tpu.memory_space<vmem>>, vector<1x1x32x128xbf16>
    %43 = vector.shape_cast %42 : vector<1x1x32x128xbf16> to vector<32x128xbf16>
    %cst_52 = arith.constant dense<0.000000e+00> : vector<64x128xf32>
    %44 = tpu.matmul %41, %43, %cst_52 {dimension_numbers = #tpu.dot_dimension_numbers<[1], [0], [0], [1], [0, 0, 1, 1], [], []>} : vector<64x32xbf16>, vector<32x128xbf16>, vector<64x128xf32> -> vector<64x128xf32>
    %45 = arith.addf %40, %44 : vector<64x128xf32>
    %46 = vector.extract_strided_slice %10 {offsets = [16, 0], sizes = [64, 32], strides = [1, 1]} : vector<80x32xbf16> to vector<64x32xbf16>
    %c2_53 = arith.constant 2 : index
    %c0_54 = arith.constant 0 : index
    %c0_55 = arith.constant 0 : index
    %c0_56 = arith.constant 0 : index
    %47 = vector.load %arg2[%c2_53, %c0_54, %c0_55, %c0_56] : memref<3x3x32x128xbf16, #tpu.memory_space<vmem>>, vector<1x1x32x128xbf16>
    %48 = vector.shape_cast %47 : vector<1x1x32x128xbf16> to vector<32x128xbf16>
    %cst_57 = arith.constant dense<0.000000e+00> : vector<64x128xf32>
    %49 = tpu.matmul %46, %48, %cst_57 {dimension_numbers = #tpu.dot_dimension_numbers<[1], [0], [0], [1], [0, 0, 1, 1], [], []>} : vector<64x32xbf16>, vector<32x128xbf16>, vector<64x128xf32> -> vector<64x128xf32>
    %50 = arith.addf %45, %49 : vector<64x128xf32>
    %51 = vector.extract_strided_slice %13 {offsets = [16, 0], sizes = [64, 32], strides = [1, 1]} : vector<80x32xbf16> to vector<64x32xbf16>
    %c2_58 = arith.constant 2 : index
    %c1_59 = arith.constant 1 : index
    %c0_60 = arith.constant 0 : index
    %c0_61 = arith.constant 0 : index
    %52 = vector.load %arg2[%c2_58, %c1_59, %c0_60, %c0_61] : memref<3x3x32x128xbf16, #tpu.memory_space<vmem>>, vector<1x1x32x128xbf16>
    %53 = vector.shape_cast %52 : vector<1x1x32x128xbf16> to vector<32x128xbf16>
    %cst_62 = arith.constant dense<0.000000e+00> : vector<64x128xf32>
    %54 = tpu.matmul %51, %53, %cst_62 {dimension_numbers = #tpu.dot_dimension_numbers<[1], [0], [0], [1], [0, 0, 1, 1], [], []>} : vector<64x32xbf16>, vector<32x128xbf16>, vector<64x128xf32> -> vector<64x128xf32>
    %55 = arith.addf %50, %54 : vector<64x128xf32>
    %56 = vector.extract_strided_slice %16 {offsets = [16, 0], sizes = [64, 32], strides = [1, 1]} : vector<80x32xbf16> to vector<64x32xbf16>
    %c2_63 = arith.constant 2 : index
    %c2_64 = arith.constant 2 : index
    %c0_65 = arith.constant 0 : index
    %c0_66 = arith.constant 0 : index
    %57 = vector.load %arg2[%c2_63, %c2_64, %c0_65, %c0_66] : memref<3x3x32x128xbf16, #tpu.memory_space<vmem>>, vector<1x1x32x128xbf16>
    %58 = vector.shape_cast %57 : vector<1x1x32x128xbf16> to vector<32x128xbf16>
    %cst_67 = arith.constant dense<0.000000e+00> : vector<64x128xf32>
    %59 = tpu.matmul %56, %58, %cst_67 {dimension_numbers = #tpu.dot_dimension_numbers<[1], [0], [0], [1], [0, 0, 1, 1], [], []>} : vector<64x32xbf16>, vector<32x128xbf16>, vector<64x128xf32> -> vector<64x128xf32>
    %60 = arith.addf %55, %59 : vector<64x128xf32>
    %c0_68 = arith.constant 0 : index
    %c0_69 = arith.constant 0 : index
    %61 = vector.load %arg5[%c0_68, %c0_69] : memref<1x128xf32, #tpu.memory_space<vmem>>, vector<1x128xf32>
    %62 = vector.broadcast %61 : vector<1x128xf32> to vector<64x128xf32>
    %63 = arith.mulf %60, %62 : vector<64x128xf32>
    %c0_70 = arith.constant 0 : index
    %c0_71 = arith.constant 0 : index
    %64 = vector.load %arg6[%c0_70, %c0_71] : memref<1x128xf32, #tpu.memory_space<vmem>>, vector<1x128xf32>
    %65 = vector.broadcast %64 : vector<1x128xf32> to vector<64x128xf32>
    %66 = arith.addf %63, %65 : vector<64x128xf32>
    %cst_72 = arith.constant 0.000000e+00 : f32
    %67 = vector.broadcast %cst_72 : f32 to vector<64x128xf32>
    %68 = arith.maximumf %66, %67 : vector<64x128xf32>
    %69 = vector.shape_cast %68 : vector<64x128xf32> to vector<8x8x128xf32>
    %70 = arith.truncf %69 : vector<8x8x128xf32> to vector<8x8x128xbf16>
    %c1_73 = arith.constant 1 : index
    %c1_74 = arith.constant 1 : index
    %c0_75 = arith.constant 0 : index
    %71 = vector.load %arg10[%c1_73, %c1_74, %c0_75] : memref<10x10x128xbf16, #tpu.memory_space<vmem>>, vector<8x8x128xbf16>
    tpu.vector_store %arg10[%c1_73, %c1_74, %c0_75], %70 {strides = array<i32>} : memref<10x10x128xbf16, #tpu.memory_space<vmem>>, vector<8x8x128xbf16>,
    %72 = vector.extract_strided_slice %13 {offsets = [8, 0], sizes = [64, 32], strides = [1, 1]} : vector<80x32xbf16> to vector<64x32xbf16>
    %c0_76 = arith.constant 0 : index
    %c0_77 = arith.constant 0 : index
    %73 = vector.load %arg4[%c0_76, %c0_77] : memref<32x128xbf16, #tpu.memory_space<vmem>>, vector<32x128xbf16>
    %cst_78 = arith.constant dense<0.000000e+00> : vector<64x128xf32>
    %74 = tpu.matmul %72, %73, %cst_78 {dimension_numbers = #tpu.dot_dimension_numbers<[1], [0], [0], [1], [0, 0, 1, 1], [], []>} : vector<64x32xbf16>, vector<32x128xbf16>, vector<64x128xf32> -> vector<64x128xf32>
    %c0_79 = arith.constant 0 : index
    %c0_80 = arith.constant 0 : index
    %c0_81 = arith.constant 0 : index
    %75 = vector.load %arg10[%c0_79, %c0_80, %c0_81] : memref<10x10x128xbf16, #tpu.memory_space<vmem>>, vector<10x8x128xbf16>
    %76 = vector.shape_cast %75 : vector<10x8x128xbf16> to vector<80x128xbf16>
    %c0_82 = arith.constant 0 : index
    %c1_83 = arith.constant 1 : index
    %c0_84 = arith.constant 0 : index
    %77 = vector.load %arg10[%c0_82, %c1_83, %c0_84] : memref<10x10x128xbf16, #tpu.memory_space<vmem>>, vector<10x8x128xbf16>
    %78 = vector.shape_cast %77 : vector<10x8x128xbf16> to vector<80x128xbf16>
    %c0_85 = arith.constant 0 : index
    %c2_86 = arith.constant 2 : index
    %c0_87 = arith.constant 0 : index
    %79 = vector.load %arg10[%c0_85, %c2_86, %c0_87] : memref<10x10x128xbf16, #tpu.memory_space<vmem>>, vector<10x8x128xbf16>
    %80 = vector.shape_cast %79 : vector<10x8x128xbf16> to vector<80x128xbf16>
    %81 = vector.extract_strided_slice %76 {offsets = [0, 0], sizes = [64, 128], strides = [1, 1]} : vector<80x128xbf16> to vector<64x128xbf16>
    %c0_88 = arith.constant 0 : index
    %c0_89 = arith.constant 0 : index
    %c0_90 = arith.constant 0 : index
    %c0_91 = arith.constant 0 : index
    %82 = vector.load %arg3[%c0_88, %c0_89, %c0_90, %c0_91] : memref<3x3x128x128xbf16, #tpu.memory_space<vmem>>, vector<1x1x128x128xbf16>
    %83 = vector.shape_cast %82 : vector<1x1x128x128xbf16> to vector<128x128xbf16>
    %cst_92 = arith.constant dense<0.000000e+00> : vector<64x128xf32>
    %84 = tpu.matmul %81, %83, %cst_92 {dimension_numbers = #tpu.dot_dimension_numbers<[1], [0], [0], [1], [0, 0, 1, 1], [], []>} : vector<64x128xbf16>, vector<128x128xbf16>, vector<64x128xf32> -> vector<64x128xf32>
    %85 = arith.addf %74, %84 : vector<64x128xf32>
    %86 = vector.extract_strided_slice %78 {offsets = [0, 0], sizes = [64, 128], strides = [1, 1]} : vector<80x128xbf16> to vector<64x128xbf16>
    %c0_93 = arith.constant 0 : index
    %c1_94 = arith.constant 1 : index
    %c0_95 = arith.constant 0 : index
    %c0_96 = arith.constant 0 : index
    %87 = vector.load %arg3[%c0_93, %c1_94, %c0_95, %c0_96] : memref<3x3x128x128xbf16, #tpu.memory_space<vmem>>, vector<1x1x128x128xbf16>
    %88 = vector.shape_cast %87 : vector<1x1x128x128xbf16> to vector<128x128xbf16>
    %cst_97 = arith.constant dense<0.000000e+00> : vector<64x128xf32>
    %89 = tpu.matmul %86, %88, %cst_97 {dimension_numbers = #tpu.dot_dimension_numbers<[1], [0], [0], [1], [0, 0, 1, 1], [], []>} : vector<64x128xbf16>, vector<128x128xbf16>, vector<64x128xf32> -> vector<64x128xf32>
    %90 = arith.addf %85, %89 : vector<64x128xf32>
    %91 = vector.extract_strided_slice %80 {offsets = [0, 0], sizes = [64, 128], strides = [1, 1]} : vector<80x128xbf16> to vector<64x128xbf16>
    %c0_98 = arith.constant 0 : index
    %c2_99 = arith.constant 2 : index
    %c0_100 = arith.constant 0 : index
    %c0_101 = arith.constant 0 : index
    %92 = vector.load %arg3[%c0_98, %c2_99, %c0_100, %c0_101] : memref<3x3x128x128xbf16, #tpu.memory_space<vmem>>, vector<1x1x128x128xbf16>
    %93 = vector.shape_cast %92 : vector<1x1x128x128xbf16> to vector<128x128xbf16>
    %cst_102 = arith.constant dense<0.000000e+00> : vector<64x128xf32>
    %94 = tpu.matmul %91, %93, %cst_102 {dimension_numbers = #tpu.dot_dimension_numbers<[1], [0], [0], [1], [0, 0, 1, 1], [], []>} : vector<64x128xbf16>, vector<128x128xbf16>, vector<64x128xf32> -> vector<64x128xf32>
    %95 = arith.addf %90, %94 : vector<64x128xf32>
    %96 = vector.extract_strided_slice %76 {offsets = [8, 0], sizes = [64, 128], strides = [1, 1]} : vector<80x128xbf16> to vector<64x128xbf16>
    %c1_103 = arith.constant 1 : index
    %c0_104 = arith.constant 0 : index
    %c0_105 = arith.constant 0 : index
    %c0_106 = arith.constant 0 : index
    %97 = vector.load %arg3[%c1_103, %c0_104, %c0_105, %c0_106] : memref<3x3x128x128xbf16, #tpu.memory_space<vmem>>, vector<1x1x128x128xbf16>
    %98 = vector.shape_cast %97 : vector<1x1x128x128xbf16> to vector<128x128xbf16>
    %cst_107 = arith.constant dense<0.000000e+00> : vector<64x128xf32>
    %99 = tpu.matmul %96, %98, %cst_107 {dimension_numbers = #tpu.dot_dimension_numbers<[1], [0], [0], [1], [0, 0, 1, 1], [], []>} : vector<64x128xbf16>, vector<128x128xbf16>, vector<64x128xf32> -> vector<64x128xf32>
    %100 = arith.addf %95, %99 : vector<64x128xf32>
    %101 = vector.extract_strided_slice %78 {offsets = [8, 0], sizes = [64, 128], strides = [1, 1]} : vector<80x128xbf16> to vector<64x128xbf16>
    %c1_108 = arith.constant 1 : index
    %c1_109 = arith.constant 1 : index
    %c0_110 = arith.constant 0 : index
    %c0_111 = arith.constant 0 : index
    %102 = vector.load %arg3[%c1_108, %c1_109, %c0_110, %c0_111] : memref<3x3x128x128xbf16, #tpu.memory_space<vmem>>, vector<1x1x128x128xbf16>
    %103 = vector.shape_cast %102 : vector<1x1x128x128xbf16> to vector<128x128xbf16>
    %cst_112 = arith.constant dense<0.000000e+00> : vector<64x128xf32>
    %104 = tpu.matmul %101, %103, %cst_112 {dimension_numbers = #tpu.dot_dimension_numbers<[1], [0], [0], [1], [0, 0, 1, 1], [], []>} : vector<64x128xbf16>, vector<128x128xbf16>, vector<64x128xf32> -> vector<64x128xf32>
    %105 = arith.addf %100, %104 : vector<64x128xf32>
    %106 = vector.extract_strided_slice %80 {offsets = [8, 0], sizes = [64, 128], strides = [1, 1]} : vector<80x128xbf16> to vector<64x128xbf16>
    %c1_113 = arith.constant 1 : index
    %c2_114 = arith.constant 2 : index
    %c0_115 = arith.constant 0 : index
    %c0_116 = arith.constant 0 : index
    %107 = vector.load %arg3[%c1_113, %c2_114, %c0_115, %c0_116] : memref<3x3x128x128xbf16, #tpu.memory_space<vmem>>, vector<1x1x128x128xbf16>
    %108 = vector.shape_cast %107 : vector<1x1x128x128xbf16> to vector<128x128xbf16>
    %cst_117 = arith.constant dense<0.000000e+00> : vector<64x128xf32>
    %109 = tpu.matmul %106, %108, %cst_117 {dimension_numbers = #tpu.dot_dimension_numbers<[1], [0], [0], [1], [0, 0, 1, 1], [], []>} : vector<64x128xbf16>, vector<128x128xbf16>, vector<64x128xf32> -> vector<64x128xf32>
    %110 = arith.addf %105, %109 : vector<64x128xf32>
    %111 = vector.extract_strided_slice %76 {offsets = [16, 0], sizes = [64, 128], strides = [1, 1]} : vector<80x128xbf16> to vector<64x128xbf16>
    %c2_118 = arith.constant 2 : index
    %c0_119 = arith.constant 0 : index
    %c0_120 = arith.constant 0 : index
    %c0_121 = arith.constant 0 : index
    %112 = vector.load %arg3[%c2_118, %c0_119, %c0_120, %c0_121] : memref<3x3x128x128xbf16, #tpu.memory_space<vmem>>, vector<1x1x128x128xbf16>
    %113 = vector.shape_cast %112 : vector<1x1x128x128xbf16> to vector<128x128xbf16>
    %cst_122 = arith.constant dense<0.000000e+00> : vector<64x128xf32>
    %114 = tpu.matmul %111, %113, %cst_122 {dimension_numbers = #tpu.dot_dimension_numbers<[1], [0], [0], [1], [0, 0, 1, 1], [], []>} : vector<64x128xbf16>, vector<128x128xbf16>, vector<64x128xf32> -> vector<64x128xf32>
    %115 = arith.addf %110, %114 : vector<64x128xf32>
    %116 = vector.extract_strided_slice %78 {offsets = [16, 0], sizes = [64, 128], strides = [1, 1]} : vector<80x128xbf16> to vector<64x128xbf16>
    %c2_123 = arith.constant 2 : index
    %c1_124 = arith.constant 1 : index
    %c0_125 = arith.constant 0 : index
    %c0_126 = arith.constant 0 : index
    %117 = vector.load %arg3[%c2_123, %c1_124, %c0_125, %c0_126] : memref<3x3x128x128xbf16, #tpu.memory_space<vmem>>, vector<1x1x128x128xbf16>
    %118 = vector.shape_cast %117 : vector<1x1x128x128xbf16> to vector<128x128xbf16>
    %cst_127 = arith.constant dense<0.000000e+00> : vector<64x128xf32>
    %119 = tpu.matmul %116, %118, %cst_127 {dimension_numbers = #tpu.dot_dimension_numbers<[1], [0], [0], [1], [0, 0, 1, 1], [], []>} : vector<64x128xbf16>, vector<128x128xbf16>, vector<64x128xf32> -> vector<64x128xf32>
    %120 = arith.addf %115, %119 : vector<64x128xf32>
    %121 = vector.extract_strided_slice %80 {offsets = [16, 0], sizes = [64, 128], strides = [1, 1]} : vector<80x128xbf16> to vector<64x128xbf16>
    %c2_128 = arith.constant 2 : index
    %c2_129 = arith.constant 2 : index
    %c0_130 = arith.constant 0 : index
    %c0_131 = arith.constant 0 : index
    %122 = vector.load %arg3[%c2_128, %c2_129, %c0_130, %c0_131] : memref<3x3x128x128xbf16, #tpu.memory_space<vmem>>, vector<1x1x128x128xbf16>
    %123 = vector.shape_cast %122 : vector<1x1x128x128xbf16> to vector<128x128xbf16>
    %cst_132 = arith.constant dense<0.000000e+00> : vector<64x128xf32>
    %124 = tpu.matmul %121, %123, %cst_132 {dimension_numbers = #tpu.dot_dimension_numbers<[1], [0], [0], [1], [0, 0, 1, 1], [], []>} : vector<64x128xbf16>, vector<128x128xbf16>, vector<64x128xf32> -> vector<64x128xf32>
    %125 = arith.addf %120, %124 : vector<64x128xf32>
    %c0_133 = arith.constant 0 : index
    %c0_134 = arith.constant 0 : index
    %126 = vector.load %arg7[%c0_133, %c0_134] : memref<1x128xf32, #tpu.memory_space<vmem>>, vector<1x128xf32>
    %127 = vector.broadcast %126 : vector<1x128xf32> to vector<64x128xf32>
    %128 = arith.mulf %125, %127 : vector<64x128xf32>
    %c0_135 = arith.constant 0 : index
    %c0_136 = arith.constant 0 : index
    %129 = vector.load %arg8[%c0_135, %c0_136] : memref<1x128xf32, #tpu.memory_space<vmem>>, vector<1x128xf32>
    %130 = vector.broadcast %129 : vector<1x128xf32> to vector<64x128xf32>
    %131 = arith.addf %128, %130 : vector<64x128xf32>
    %cst_137 = arith.constant 0.000000e+00 : f32
    %132 = vector.broadcast %cst_137 : f32 to vector<64x128xf32>
    %133 = arith.maximumf %131, %132 : vector<64x128xf32>
    %134 = arith.truncf %133 : vector<64x128xf32> to vector<64x128xbf16>
    %c0_138 = arith.constant 0 : index
    %c0_139 = arith.constant 0 : index
    %c0_140 = arith.constant 0 : index
    %135 = vector.load %arg9[%c0_138, %c0_139, %c0_140] : memref<1x64x128xbf16, #tpu.memory_space<vmem>>, vector<1x64x128xbf16>
    %136 = vector.shape_cast %135 : vector<1x64x128xbf16> to vector<64x128xbf16>
    %137 = vector.shape_cast %134 : vector<64x128xbf16> to vector<1x64x128xbf16>
    tpu.vector_store %arg9[%c0_138, %c0_139, %c0_140], %137 {strides = array<i32>} : memref<1x64x128xbf16, #tpu.memory_space<vmem>>, vector<1x64x128xbf16>,
    return
  }
  func.func @transform_0(%arg0: i32) -> (i32, i32, i32, i32) {
    %c0_i32 = arith.constant 0 : i32
    %c0_i32_0 = arith.constant 0 : i32
    %c0_i32_1 = arith.constant 0 : i32
    %c0_i32_2 = arith.constant 0 : i32
    return %arg0, %c0_i32, %c0_i32_0, %c0_i32_1 : i32, i32, i32, i32
  }
  func.func @transform_1(%arg0: i32) -> (i32, i32, i32, i32) {
    %c0_i32 = arith.constant 0 : i32
    %c0_i32_0 = arith.constant 0 : i32
    %c0_i32_1 = arith.constant 0 : i32
    %c0_i32_2 = arith.constant 0 : i32
    %c0_i32_3 = arith.constant 0 : i32
    return %c0_i32, %c0_i32_0, %c0_i32_1, %c0_i32_2 : i32, i32, i32, i32
  }
  func.func @transform_2(%arg0: i32) -> (i32, i32, i32, i32) {
    %c0_i32 = arith.constant 0 : i32
    %c0_i32_0 = arith.constant 0 : i32
    %c0_i32_1 = arith.constant 0 : i32
    %c0_i32_2 = arith.constant 0 : i32
    %c0_i32_3 = arith.constant 0 : i32
    return %c0_i32, %c0_i32_0, %c0_i32_1, %c0_i32_2 : i32, i32, i32, i32
  }
  func.func @transform_3(%arg0: i32) -> (i32, i32) {
    %c0_i32 = arith.constant 0 : i32
    %c0_i32_0 = arith.constant 0 : i32
    %c0_i32_1 = arith.constant 0 : i32
    return %c0_i32, %c0_i32_0 : i32, i32
  }
  func.func @transform_4(%arg0: i32) -> (i32, i32) {
    %c0_i32 = arith.constant 0 : i32
    %c0_i32_0 = arith.constant 0 : i32
    %c0_i32_1 = arith.constant 0 : i32
    return %c0_i32, %c0_i32_0 : i32, i32
  }
  func.func @transform_5(%arg0: i32) -> (i32, i32) {
    %c0_i32 = arith.constant 0 : i32
    %c0_i32_0 = arith.constant 0 : i32
    %c0_i32_1 = arith.constant 0 : i32
    return %c0_i32, %c0_i32_0 : i32, i32
  }
  func.func @transform_6(%arg0: i32) -> (i32, i32) {
    %c0_i32 = arith.constant 0 : i32
    %c0_i32_0 = arith.constant 0 : i32
    %c0_i32_1 = arith.constant 0 : i32
    return %c0_i32, %c0_i32_0 : i32, i32
  }
  func.func @transform_7(%arg0: i32) -> (i32, i32) {
    %c0_i32 = arith.constant 0 : i32
    %c0_i32_0 = arith.constant 0 : i32
    %c0_i32_1 = arith.constant 0 : i32
    return %c0_i32, %c0_i32_0 : i32, i32
  }
  func.func @transform_8(%arg0: i32) -> (i32, i32, i32) {
    %c0_i32 = arith.constant 0 : i32
    %c0_i32_0 = arith.constant 0 : i32
    %c0_i32_1 = arith.constant 0 : i32
    return %arg0, %c0_i32, %c0_i32_0 : i32, i32, i32
  }
}

</mosaic_0001>

<llo_original>
// kernel: tile.24
$region0: #{tile.24}
  %s0 = inlined_call_operand.vmem [shape: f32[8,16], index: 0, kind: input, shape index: {}]
  %s1 = inlined_call_operand.vmem [shape: f32[1,128], index: 1, kind: output, shape index: {}]
  $region1: #{tile.24} parent=0
    #allocation0 [shape = 'u8[4096]{0}', space=vmem, size = 0x1000, scoped, tag = 'scoped mem for output reshape']
    %v2 = vld [vmem:[%s0] sm:$0x1]
    %vm3 = vcmask 130048
    %4 = vst.msk [vmem:[#allocation0] sm:$0x1] %vm3, %v2
    %s5 = scalar_lea.vmem %s0, 7
    %v6 = vld [vmem:[%s5] sm:$0x1]
    %7 = vrot.lane.b32.xlu0 %v6, 112
    %v8 = vpop.permute.xlu0 %7
    %vm9 = vcmask 1048448
    %10 = vst.msk [vmem:[#allocation0] sm:$0x1] %vm9, %v8
    %s11 = scalar_lea.vmem %s0, 6
    %v12 = vld [vmem:[%s11] sm:$0x1]
    %13 = vrot.lane.b32.xlu0 %v12, 96
    %v14 = vpop.permute.xlu0 %13
    %vm15 = vcmask 917248
    %16 = vst.msk [vmem:[#allocation0] sm:$0x1] %vm15, %v14
    %s17 = scalar_lea.vmem %s0, 5
    %v18 = vld [vmem:[%s17] sm:$0x1]
    %19 = vrot.lane.b32.xlu0 %v18, 80
    %v20 = vpop.permute.xlu0 %19
    %vm21 = vcmask 786048
    %22 = vst.msk [vmem:[#allocation0] sm:$0x1] %vm21, %v20
    %s23 = scalar_lea.vmem %s0, 4
    %v24 = vld [vmem:[%s23] sm:$0x1]
    %25 = vrot.lane.b32.xlu0 %v24, 64
    %v26 = vpop.permute.xlu0 %25
    %vm27 = vcmask 654848
    %28 = vst.msk [vmem:[#allocation0] sm:$0x1] %vm27, %v26
    %s29 = scalar_lea.vmem %s0, 3
    %v30 = vld [vmem:[%s29] sm:$0x1]
    %31 = vrot.lane.b32.xlu0 %v30, 48
    %v32 = vpop.permute.xlu0 %31
    %vm33 = vcmask 523648
    %34 = vst.msk [vmem:[#allocation0] sm:$0x1] %vm33, %v32
    %s35 = scalar_lea.vmem %s0, 2
    %v36 = vld [vmem:[%s35] sm:$0x1]
    %37 = vrot.lane.b32.xlu0 %v36, 32
    %v38 = vpop.permute.xlu0 %37
    %vm39 = vcmask 392448
    %40 = vst.msk [vmem:[#allocation0] sm:$0x1] %vm39, %v38
    %s41 = scalar_lea.vmem %s0, 1
    %v42 = vld [vmem:[%s41] sm:$0x1]
    %43 = vrot.lane.b32.xlu0 %v42, 16
    %v44 = vpop.permute.xlu0 %43
    %vm45 = vcmask 261248
    %46 = vst.msk [vmem:[#allocation0] sm:$0x1] %vm45, %v44
    %s48 = sshll.u32 1, 1
    %s49 = ssub.s32 %s48, 1
    %v51 = vld [vmem:[#allocation0] sm:%s49]
    %s52 = sshll.u32 1, 1
    %s53 = ssub.s32 %s52, 1
    %54 = vst [vmem:[%s1] sm:%s53] %v51

// kernel: tile.23
$region0: #{tile.23}
  #allocation0 [shape = 's32[1]{0}', space=sflag, size = 0x4, scoped, tag = 'scoped memory for tile.23']
  %s0 = inlined_call_operand.vmem [shape: f32[16], index: 0, kind: input, shape index: {}]
  %s1 = inlined_call_operand.vmem [shape: f32[8,16], index: 1, kind: output, shape index: {}]
  // Predicated region
  $region2: #{tile.23} parent=0 // pred_check
    _
  $region3: #{tile.23} parent=0 // pred_check_branch
    %3 = sbr.rel (0) target = $region5
  $region4: #{tile.23} parent=0 // pred_region
    _
  $region5: #{tile.23} parent=0 // pred_fallthru
    _
  %v4 = vld [vmem:[%s0] ss:$0 sm:$0xff]
  %5 = vst [vmem:[%s1] sm:$0xff] %v4

// kernel: basic3d_resblock_pallas.1
$region0: #{basic3d_resblock_pallas.1}
  #allocation0 [shape = 'u32[]', space=smem, size = 0x4, offset = 0x4, fixed_abs, tag = 'smem constant byte address 0x4 - core index']
  #allocation1 [shape = 'u32[144,128]{1,0:T(1,128)}', space=vmem, size = 0x12000, scoped, tag = 'internal scratch']
  #allocation2 [shape = 'bf16[10,10,128]{2,1,0:T(8,128)(2,1)}', space=vmem, size = 0xa000, scoped, tag = 'scratch operand']
  %s0 = inlined_call_operand.vmem [shape: bf16[2,10,10,32], index: 0, kind: input, shape index: {}]
  %s1 = inlined_call_operand.vmem [shape: bf16[3,3,32,128], index: 1, kind: input, shape index: {}]
  %s2 = inlined_call_operand.vmem [shape: bf16[3,3,128,128], index: 2, kind: input, shape index: {}]
  %s3 = inlined_call_operand.vmem [shape: bf16[32,128], index: 3, kind: input, shape index: {}]
  %s4 = inlined_call_operand.vmem [shape: f32[1,128], index: 4, kind: input, shape index: {}]
  %s5 = inlined_call_operand.vmem [shape: f32[1,128], index: 5, kind: input, shape index: {}]
  %s6 = inlined_call_operand.vmem [shape: f32[1,128], index: 6, kind: input, shape index: {}]
  %s7 = inlined_call_operand.vmem [shape: f32[1,128], index: 7, kind: input, shape index: {}]
  %s8 = inlined_call_operand.vmem [shape: bf16[2,64,128], index: 8, kind: output, shape index: {}]
  %s9 = sld [smem:[#allocation0]]
  $region65: #{basic3d_resblock_pallas.1} parent=0
    _
  %s11 = ssub.s32 1, %s9
  %s12 = scalar_select 0, %s11, %s9
  loop: start=0, step=1, limit=4
  $region2: #{basic3d_resblock_pallas.1} parent=0 // loop_pre_header
    _
  $region3: #{basic3d_resblock_pallas.1} parent=0 // loop_header
    %s14 = sphi 0, %s18
    %p15 = scmp.ge.s32.totalorder %s14, 4
    %s24 = sphi 0, %s26
    %s27 = sphi 0, %s24
    %s28 = sphi 0, %s27
    %s44 = sphi 0, %s28
    %s48 = sphi 0, %s48
    %s50 = sphi 0, %s48
    %s51 = sphi 0, %s50
    %s65 = sphi 0, %s51
    %s69 = sphi 0, %s69
    %s71 = sphi 0, %s69
    %s72 = sphi 0, %s71
    %s86 = sphi 0, %s72
    %s90 = sphi 0, %s90
    %s92 = sphi 0, %s90
    %s93 = sphi 0, %s92
    %s107 = sphi 0, %s93
    %s111 = sphi 0, %s111
    %s113 = sphi 0, %s111
    %s114 = sphi 0, %s113
    %s128 = sphi 0, %s114
    %s132 = sphi 0, %s132
    %s134 = sphi 0, %s132
    %s135 = sphi 0, %s134
    %s149 = sphi 0, %s135
    %s153 = sphi 0, %s153
    %s155 = sphi 0, %s153
    %s156 = sphi 0, %s155
    %s170 = sphi 0, %s156
    %s174 = sphi 0, %s174
    %s176 = sphi 0, %s174
    %s177 = sphi 0, %s176
    %s191 = sphi 0, %s177
    %s197 = sphi 0, %s199
    %s200 = sphi 0, %s197
    %s201 = sphi 0, %s200
    %s217 = sphi 0, %s201
  $region4: #{basic3d_resblock_pallas.1} parent=0 // loop_header_branch
    %17 = sbr.rel (%p15) target = $region8
  $region5: #{basic3d_resblock_pallas.1} parent=0 // loop_body
    %s19 = ssub.s32 %s14, 1
    %s20 = ssub.s32 %s14, 2
    %s21 = sadd.s32 %s14, 1
    %s22 = ssub.s32 %s14, %s21
    %p23 = scmp.eq.s32.totalorder %s22, 0
    %s25 = sadd.s32 %s24, 1
    %s26 = scalar_select %p23, %s24, %s25
    %p29 = pneg %p23
    %p30 = scmp.eq.s32.totalorder %s14, 1
    %p31 = por %p29, %p30
    %p32 = scmp.ne.s32.totalorder %s24, %s27
    %p33 = scmp.eq.s32.totalorder %s14, 0
    %p34 = por %p32, %p33
    %p35 = scmp.ne.s32.totalorder %s24, %s27
    %p36 = scmp.eq.s32.totalorder %s19, 1
    %p37 = por %p35, %p36
    %p38 = scmp.ne.s32.totalorder %s27, %s28
    %p39 = scmp.eq.s32.totalorder %s19, 0
    %p40 = por %p38, %p39
    %p41 = scmp.ne.s32.totalorder %s27, %s28
    %p42 = scmp.eq.s32.totalorder %s20, 1
    %p43 = por %p41, %p42
    %p45 = scmp.ne.s32.totalorder %s28, %s44
    %p46 = scmp.eq.s32.totalorder %s20, 0
    %p47 = por %p45, %p46
    %s49 = sadd.s32 %s48, 1
    %p52 = scmp.eq.s32.totalorder %s14, 1
    %p53 = scmp.ne.s32.totalorder %s48, %s50
    %p54 = scmp.eq.s32.totalorder %s14, 0
    %p55 = por %p53, %p54
    %p56 = scmp.ne.s32.totalorder %s48, %s50
    %p57 = scmp.eq.s32.totalorder %s19, 1
    %p58 = por %p56, %p57
    %p59 = scmp.ne.s32.totalorder %s50, %s51
    %p60 = scmp.eq.s32.totalorder %s19, 0
    %p61 = por %p59, %p60
    %p62 = scmp.ne.s32.totalorder %s50, %s51
    %p63 = scmp.eq.s32.totalorder %s20, 1
    %p64 = por %p62, %p63
    %p66 = scmp.ne.s32.totalorder %s51, %s65
    %p67 = scmp.eq.s32.totalorder %s20, 0
    %p68 = por %p66, %p67
    %s70 = sadd.s32 %s69, 1
    %p73 = scmp.eq.s32.totalorder %s14, 1
    %p74 = scmp.ne.s32.totalorder %s69, %s71
    %p75 = scmp.eq.s32.totalorder %s14, 0
    %p76 = por %p74, %p75
    %p77 = scmp.ne.s32.totalorder %s69, %s71
    %p78 = scmp.eq.s32.totalorder %s19, 1
    %p79 = por %p77, %p78
    %p80 = scmp.ne.s32.totalorder %s71, %s72
    %p81 = scmp.eq.s32.totalorder %s19, 0
    %p82 = por %p80, %p81
    %p83 = scmp.ne.s32.totalorder %s71, %s72
    %p84 = scmp.eq.s32.totalorder %s20, 1
    %p85 = por %p83, %p84
    %p87 = scmp.ne.s32.totalorder %s72, %s86
    %p88 = scmp.eq.s32.totalorder %s20, 0
    %p89 = por %p87, %p88
    %s91 = sadd.s32 %s90, 1
    %p94 = scmp.eq.s32.totalorder %s14, 1
    %p95 = scmp.ne.s32.totalorder %s90, %s92
    %p96 = scmp.eq.s32.totalorder %s14, 0
    %p97 = por %p95, %p96
    %p98 = scmp.ne.s32.totalorder %s90, %s92
    %p99 = scmp.eq.s32.totalorder %s19, 1
    %p100 = por %p98, %p99
    %p101 = scmp.ne.s32.totalorder %s92, %s93
    %p102 = scmp.eq.s32.totalorder %s19, 0
    %p103 = por %p101, %p102
    %p104 = scmp.ne.s32.totalorder %s92, %s93
    %p105 = scmp.eq.s32.totalorder %s20, 1
    %p106 = por %p104, %p105
    %p108 = scmp.ne.s32.totalorder %s93, %s107
    %p109 = scmp.eq.s32.totalorder %s20, 0
    %p110 = por %p108, %p109
    %s112 = sadd.s32 %s111, 1
    %p115 = scmp.eq.s32.totalorder %s14, 1
    %p116 = scmp.ne.s32.totalorder %s111, %s113
    %p117 = scmp.eq.s32.totalorder %s14, 0
    %p118 = por %p116, %p117
    %p119 = scmp.ne.s32.totalorder %s111, %s113
    %p120 = scmp.eq.s32.totalorder %s19, 1
    %p121 = por %p119, %p120
    %p122 = scmp.ne.s32.totalorder %s113, %s114
    %p123 = scmp.eq.s32.totalorder %s19, 0
    %p124 = por %p122, %p123
    %p125 = scmp.ne.s32.totalorder %s113, %s114
    %p126 = scmp.eq.s32.totalorder %s20, 1
    %p127 = por %p125, %p126
    %p129 = scmp.ne.s32.totalorder %s114, %s128
    %p130 = scmp.eq.s32.totalorder %s20, 0
    %p131 = por %p129, %p130
    %s133 = sadd.s32 %s132, 1
    %p136 = scmp.eq.s32.totalorder %s14, 1
    %p137 = scmp.ne.s32.totalorder %s132, %s134
    %p138 = scmp.eq.s32.totalorder %s14, 0
    %p139 = por %p137, %p138
    %p140 = scmp.ne.s32.totalorder %s132, %s134
    %p141 = scmp.eq.s32.totalorder %s19, 1
    %p142 = por %p140, %p141
    %p143 = scmp.ne.s32.totalorder %s134, %s135
    %p144 = scmp.eq.s32.totalorder %s19, 0
    %p145 = por %p143, %p144
    %p146 = scmp.ne.s32.totalorder %s134, %s135
    %p147 = scmp.eq.s32.totalorder %s20, 1
    %p148 = por %p146, %p147
    %p150 = scmp.ne.s32.totalorder %s135, %s149
    %p151 = scmp.eq.s32.totalorder %s20, 0
    %p152 = por %p150, %p151
    %s154 = sadd.s32 %s153, 1
    %p157 = scmp.eq.s32.totalorder %s14, 1
    %p158 = scmp.ne.s32.totalorder %s153, %s155
    %p159 = scmp.eq.s32.totalorder %s14, 0
    %p160 = por %p158, %p159
    %p161 = scmp.ne.s32.totalorder %s153, %s155
    %p162 = scmp.eq.s32.totalorder %s19, 1
    %p163 = por %p161, %p162
    %p164 = scmp.ne.s32.totalorder %s155, %s156
    %p165 = scmp.eq.s32.totalorder %s19, 0
    %p166 = por %p164, %p165
    %p167 = scmp.ne.s32.totalorder %s155, %s156
    %p168 = scmp.eq.s32.totalorder %s20, 1
    %p169 = por %p167, %p168
    %p171 = scmp.ne.s32.totalorder %s156, %s170
    %p172 = scmp.eq.s32.totalorder %s20, 0
    %p173 = por %p171, %p172
    %s175 = sadd.s32 %s174, 1
    %p178 = scmp.eq.s32.totalorder %s14, 1
    %p179 = scmp.ne.s32.totalorder %s174, %s176
    %p180 = scmp.eq.s32.totalorder %s14, 0
    %p181 = por %p179, %p180
    %p182 = scmp.ne.s32.totalorder %s174, %s176
    %p183 = scmp.eq.s32.totalorder %s19, 1
    %p184 = por %p182, %p183
    %p185 = scmp.ne.s32.totalorder %s176, %s177
    %p186 = scmp.eq.s32.totalorder %s19, 0
    %p187 = por %p185, %p186
    %p188 = scmp.ne.s32.totalorder %s176, %s177
    %p189 = scmp.eq.s32.totalorder %s20, 1
    %p190 = por %p188, %p189
    %p192 = scmp.ne.s32.totalorder %s177, %s191
    %p193 = scmp.eq.s32.totalorder %s20, 0
    %p194 = por %p192, %p193
    %s195 = ssub.s32 %s14, %s21
    %p196 = scmp.eq.s32.totalorder %s195, 0
    %s198 = sadd.s32 %s197, 1
    %s199 = scalar_select %p196, %s197, %s198
    %p202 = pneg %p196
    %p203 = scmp.eq.s32.totalorder %s14, 1
    %p204 = por %p202, %p203
    %p205 = scmp.ne.s32.totalorder %s197, %s200
    %p206 = scmp.eq.s32.totalorder %s14, 0
    %p207 = por %p205, %p206
    %p208 = scmp.ne.s32.totalorder %s197, %s200
    %p209 = scmp.eq.s32.totalorder %s19, 1
    %p210 = por %p208, %p209
    %p211 = scmp.ne.s32.totalorder %s200, %s201
    %p212 = scmp.eq.s32.totalorder %s19, 0
    %p213 = por %p211, %p212
    %p214 = scmp.ne.s32.totalorder %s200, %s201
    %p215 = scmp.eq.s32.totalorder %s20, 1
    %p216 = por %p214, %p215
    %p218 = scmp.ne.s32.totalorder %s201, %s217
    %p219 = scmp.eq.s32.totalorder %s20, 0
    %p220 = por %p218, %p219
    %p221 = scmp.le.s32.totalorder 1, %s14
    %p222 = scmp.lt.s32.totalorder %s14, 3
    %p223 = pnand %p221, %p222
    %p224 = pneg %p223
    // Predicated region
    $region9: #{basic3d_resblock_pallas.1} parent=5 // pred_check
      _
    $region10: #{basic3d_resblock_pallas.1} parent=5 // pred_check_branch
      %226 = sbr.rel (%p223) target = $region12
    $region11: #{basic3d_resblock_pallas.1} parent=5 // pred_region
      %s227 = ssub.s32 %s14, 1
      // Predicated region
      $region13: #{basic3d_resblock_pallas.1} parent=11 // pred_check
        %p228 = pneg %p61
      $region14: #{basic3d_resblock_pallas.1} parent=11 // pred_check_branch
        %230 = sbr.rel (%p228) target = $region16
      $region15: #{basic3d_resblock_pallas.1} parent=11 // pred_region
        _
      $region16: #{basic3d_resblock_pallas.1} parent=11 // pred_fallthru
        _
      // Predicated region
      $region17: #{basic3d_resblock_pallas.1} parent=11 // pred_check
        %p231 = pneg %p82
      $region18: #{basic3d_resblock_pallas.1} parent=11 // pred_check_branch
        %233 = sbr.rel (%p231) target = $region20
      $region19: #{basic3d_resblock_pallas.1} parent=11 // pred_region
        _
      $region20: #{basic3d_resblock_pallas.1} parent=11 // pred_fallthru
        _
      // Predicated region
      $region21: #{basic3d_resblock_pallas.1} parent=11 // pred_check
        %p234 = pneg %p103
      $region22: #{basic3d_resblock_pallas.1} parent=11 // pred_check_branch
        %236 = sbr.rel (%p234) target = $region24
      $region23: #{basic3d_resblock_pallas.1} parent=11 // pred_region
        _
      $region24: #{basic3d_resblock_pallas.1} parent=11 // pred_fallthru
        _
      // Predicated region
      $region25: #{basic3d_resblock_pallas.1} parent=11 // pred_check
        %p237 = pneg %p124
      $region26: #{basic3d_resblock_pallas.1} parent=11 // pred_check_branch
        %239 = sbr.rel (%p237) target = $region28
      $region27: #{basic3d_resblock_pallas.1} parent=11 // pred_region
        _
      $region28: #{basic3d_resblock_pallas.1} parent=11 // pred_fallthru
        _
      // Predicated region
      $region29: #{basic3d_resblock_pallas.1} parent=11 // pred_check
        %p240 = pneg %p145
      $region30: #{basic3d_resblock_pallas.1} parent=11 // pred_check_branch
        %242 = sbr.rel (%p240) target = $region32
      $region31: #{basic3d_resblock_pallas.1} parent=11 // pred_region
        _
      $region32: #{basic3d_resblock_pallas.1} parent=11 // pred_fallthru
        _
      // Predicated region
      $region33: #{basic3d_resblock_pallas.1} parent=11 // pred_check
        %p243 = pneg %p166
      $region34: #{basic3d_resblock_pallas.1} parent=11 // pred_check_branch
        %245 = sbr.rel (%p243) target = $region36
      $region35: #{basic3d_resblock_pallas.1} parent=11 // pred_region
        _
      $region36: #{basic3d_resblock_pallas.1} parent=11 // pred_fallthru
        _
      // Predicated region
      $region37: #{basic3d_resblock_pallas.1} parent=11 // pred_check
        %p246 = pneg %p187
      $region38: #{basic3d_resblock_pallas.1} parent=11 // pred_check_branch
        %248 = sbr.rel (%p246) target = $region40
      $region39: #{basic3d_resblock_pallas.1} parent=11 // pred_region
        _
      $region40: #{basic3d_resblock_pallas.1} parent=11 // pred_fallthru
        _
    $region12: #{basic3d_resblock_pallas.1} parent=5 // pred_fallthru
      _
    %p249 = scmp.lt.s32.totalorder %s14, 2
    // Predicated region
    $region41: #{basic3d_resblock_pallas.1} parent=5 // pred_check
      %p250 = pneg %p249
    $region42: #{basic3d_resblock_pallas.1} parent=5 // pred_check_branch
      %252 = sbr.rel (%p250) target = $region44
    $region43: #{basic3d_resblock_pallas.1} parent=5 // pred_region
      // Predicated region
      $region45: #{basic3d_resblock_pallas.1} parent=43 // pred_check
        %p253 = pneg %p34
      $region46: #{basic3d_resblock_pallas.1} parent=43 // pred_check_branch
        %255 = sbr.rel (%p253) target = $region48
      $region47: #{basic3d_resblock_pallas.1} parent=43 // pred_region
        %p256 = scmp.lt.s32.totalorder %s14, 1
        %s257 = scalar_select %p256, %s14, 1
        %s258 = smul.addr %s257, 20
        %s259 = smul.addr %s258, 4
        %s260 = scalar_lea.vmem %s0, %s259
      $region48: #{basic3d_resblock_pallas.1} parent=43 // pred_fallthru
        _
    $region44: #{basic3d_resblock_pallas.1} parent=5 // pred_fallthru
      _
    %p261 = scmp.le.s32.totalorder 1, %s14
    %p262 = scmp.lt.s32.totalorder %s14, 3
    %p263 = pnand %p261, %p262
    %p264 = pneg %p263
    // Predicated region
    $region49: #{basic3d_resblock_pallas.1} parent=5 // pred_check
      _
    $region50: #{basic3d_resblock_pallas.1} parent=5 // pred_check_branch
      %266 = sbr.rel (%p263) target = $region52
    $region51: #{basic3d_resblock_pallas.1} parent=5 // pred_region
      %s267 = ssub.s32 %s14, 1
      %p268 = scmp.lt.s32.totalorder %s19, 1
      %s269 = scalar_select %p268, %s19, 1
      %s270 = smul.addr %s269, 20
      %s271 = smul.addr %s270, 4
      %s272 = scalar_lea.vmem %s0, %s271
      %p273 = pneg %p40
      %p274 = pneg %p37
      %p275 = pneg %p61
      %p276 = pneg %p58
      %p277 = pneg %p82
      %p278 = pneg %p79
      %p279 = pneg %p103
      %p280 = pneg %p100
      %p281 = pneg %p124
      %p282 = pneg %p121
      %p283 = pneg %p145
      %p284 = pneg %p142
      %p285 = pneg %p166
      %p286 = pneg %p163
      %p287 = pneg %p187
      %p288 = pneg %p184
      %p289 = pneg %p213
      %p290 = pneg %p210
      %p291 = scmp.lt.s32.totalorder %s19, 1
      %s292 = scalar_select %p291, %s19, 1
      %s293 = smul.addr %s292, 8
      %s294 = smul.addr %s293, 4
      %s295 = scalar_lea.vmem %s8, %s294
      %p296 = scmp.lt.s32.totalorder %s19, 1
      %s297 = scalar_select %p296, %s19, 1
      %s298 = smul.addr %s297, 20
      %s299 = smul.addr %s298, 4
      %s300 = scalar_lea.vmem %s0, %s299
      %p301 = scmp.lt.s32.totalorder %s19, 1
      %s302 = scalar_select %p301, %s19, 1
      %s303 = smul.addr %s302, 8
      %s304 = smul.addr %s303, 4
      %s305 = scalar_lea.vmem %s8, %s304
      %307 = vst [vmem:[#allocation2] sm:$0xf] 0
      %308 = vst [vmem:[#allocation2 + $0x4] sm:$0x1] 0
      %s309 = scalar_lea.vmem [#allocation2], 72
      %310 = vst [vmem:[%s309] sm:$0xf] 0
      %311 = vst [vmem:[%s309 + $0x4] sm:$0x1] 0
      %vm312 = vcmask 1040384
      %vm313 = vsmask.f32 256
      %vm314 = vmand %vm312, %vm313
      %v315 = vld [vmem:[#allocation2] sm:$0x1]
      %v316 = vsel %vm314, 0, %v315
      %317 = vst [vmem:[#allocation2] sm:$0x1] %v316
      %v318 = vld [vmem:[#allocation2 + $0x8] sm:$0x1]
      %v319 = vsel %vm314, 0, %v318
      %320 = vst [vmem:[#allocation2 + $0x8] sm:$0x1] %v319
      %v321 = vld [vmem:[#allocation2 + $0x10] sm:$0x1]
      %v322 = vsel %vm314, 0, %v321
      %323 = vst [vmem:[#allocation2 + $0x10] sm:$0x1] %v322
      %v324 = vld [vmem:[#allocation2 + $0x18] sm:$0x1]
      %v325 = vsel %vm314, 0, %v324
      %326 = vst [vmem:[#allocation2 + $0x18] sm:$0x1] %v325
      %v327 = vld [vmem:[#allocation2 + $0x20] sm:$0x1]
      %v328 = vsel %vm314, 0, %v327
      %329 = vst [vmem:[#allocation2 + $0x20] sm:$0x1] %v328
      %v330 = vld [vmem:[#allocation2 + $0x28] sm:$0x1]
      %v331 = vsel %vm314, 0, %v330
      %332 = vst [vmem:[#allocation2 + $0x28] sm:$0x1] %v331
      %v333 = vld [vmem:[#allocation2 + $0x30] sm:$0x1]
      %v334 = vsel %vm314, 0, %v333
      %335 = vst [vmem:[#allocation2 + $0x30] sm:$0x1] %v334
      %v336 = vld [vmem:[#allocation2 + $0x38] sm:$0x1]
      %v337 = vsel %vm314, 0, %v336
      %338 = vst [vmem:[#allocation2 + $0x38] sm:$0x1] %v337
      %v339 = vld [vmem:[#allocation2 + $0x40] sm:$0x1]
      %v340 = vsel %vm314, 0, %v339
      %341 = vst [vmem:[#allocation2 + $0x40] sm:$0x1] %v340
      %v342 = vld [vmem:[#allocation2 + $0x48] sm:$0x1]
      %v343 = vsel %vm314, 0, %v342
      %344 = vst [vmem:[#allocation2 + $0x48] sm:$0x1] %v343
      %vm345 = vsmask.f32 7938
      %vm346 = vmand %vm312, %vm345
      %v347 = vld [vmem:[#allocation2 + $0x4] sm:$0x1]
      %v348 = vsel %vm346, 0, %v347
      %349 = vst [vmem:[#allocation2 + $0x4] sm:$0x1] %v348
      %v350 = vld [vmem:[#allocation2 + $0xc] sm:$0x1]
      %v351 = vsel %vm346, 0, %v350
      %352 = vst [vmem:[#allocation2 + $0xc] sm:$0x1] %v351
      %v353 = vld [vmem:[#allocation2 + $0x14] sm:$0x1]
      %v354 = vsel %vm346, 0, %v353
      %355 = vst [vmem:[#allocation2 + $0x14] sm:$0x1] %v354
      %v356 = vld [vmem:[#allocation2 + $0x1c] sm:$0x1]
      %v357 = vsel %vm346, 0, %v356
      %358 = vst [vmem:[#allocation2 + $0x1c] sm:$0x1] %v357
      %v359 = vld [vmem:[#allocation2 + $0x24] sm:$0x1]
      %v360 = vsel %vm346, 0, %v359
      %361 = vst [vmem:[#allocation2 + $0x24] sm:$0x1] %v360
      %v362 = vld [vmem:[#allocation2 + $0x2c] sm:$0x1]
      %v363 = vsel %vm346, 0, %v362
      %364 = vst [vmem:[#allocation2 + $0x2c] sm:$0x1] %v363
      %v365 = vld [vmem:[#allocation2 + $0x34] sm:$0x1]
      %v366 = vsel %vm346, 0, %v365
      %367 = vst [vmem:[#allocation2 + $0x34] sm:$0x1] %v366
      %v368 = vld [vmem:[#allocation2 + $0x3c] sm:$0x1]
      %v369 = vsel %vm346, 0, %v368
      %370 = vst [vmem:[#allocation2 + $0x3c] sm:$0x1] %v369
      %v371 = vld [vmem:[#allocation2 + $0x44] sm:$0x1]
      %v372 = vsel %vm346, 0, %v371
      %373 = vst [vmem:[#allocation2 + $0x44] sm:$0x1] %v372
      %v374 = vld [vmem:[#allocation2 + $0x4c] sm:$0x1]
      %v375 = vsel %vm346, 0, %v374
      %376 = vst [vmem:[#allocation2 + $0x4c] sm:$0x1] %v375
      %v377 = vld [vmem:[%s300] sm:$0xf]
      %v378 = vld [vmem:[%s300 + $0x8] sm:$0xf]
      %v379 = vld [vmem:[%s300 + $0x10] sm:$0xf]
      %v380 = vld [vmem:[%s300 + $0x18] sm:$0xf]
      %v381 = vld [vmem:[%s300 + $0x20] sm:$0xf]
      %v382 = vld [vmem:[%s300 + $0x28] sm:$0xf]
      %v383 = vld [vmem:[%s300 + $0x30] sm:$0xf]
      %v384 = vld [vmem:[%s300 + $0x38] sm:$0xf]
      %v385 = vld [vmem:[%s300 + $0x40] sm:$0xf]
      %v386 = vld [vmem:[%s300 + $0x48] sm:$0xf]
      %v387 = vld [vmem:[%s300 + $0x4] sm:$0x1]
      %v388 = vld [vmem:[%s300 + $0xc] sm:$0x1]
      %v389 = vld [vmem:[%s300 + $0x14] sm:$0x1]
      %v390 = vld [vmem:[%s300 + $0x1c] sm:$0x1]
      %v391 = vld [vmem:[%s300 + $0x24] sm:$0x1]
      %v392 = vld [vmem:[%s300 + $0x2c] sm:$0x1]
      %v393 = vld [vmem:[%s300 + $0x34] sm:$0x1]
      %v394 = vld [vmem:[%s300 + $0x3c] sm:$0x1]
      %v395 = vld [vmem:[%s300 + $0x44] sm:$0x1]
      %v396 = vld [vmem:[%s300 + $0x4c] sm:$0x1]
      %vm397 = vsmask.f32 3328
      %vm398 = vsmask.f32 7440
      %vm399 = vmor %vm397, %vm398
      %v401 = vshrl.u32 %v377, 16
      %v403 = vrot.slane %v401, 4
      %v404 = vshll.u32 %v377, 16
      %v406 = vrot.slane %v404, 5
      %v407 = vor.u32 %v403, %v406
      %v408 = vrot.slane %v407, 4
      %v410 = vshll.u32 %v387, 16
      %v412 = vrot.slane %v410, 5
      %v413 = vsel %vm399, %v408, %v412
      %v415 = vshrl.u32 %v378, 16
      %v417 = vrot.slane %v415, 4
      %v418 = vshll.u32 %v378, 16
      %v420 = vrot.slane %v418, 5
      %v421 = vor.u32 %v417, %v420
      %v422 = vrot.slane %v421, 4
      %v424 = vshll.u32 %v388, 16
      %v426 = vrot.slane %v424, 5
      %v427 = vsel %vm399, %v422, %v426
      %v429 = vshrl.u32 %v379, 16
      %v431 = vrot.slane %v429, 4
      %v432 = vshll.u32 %v379, 16
      %v434 = vrot.slane %v432, 5
      %v435 = vor.u32 %v431, %v434
      %v436 = vrot.slane %v435, 4
      %v438 = vshll.u32 %v389, 16
      %v440 = vrot.slane %v438, 5
      %v441 = vsel %vm399, %v436, %v440
      %v443 = vshrl.u32 %v380, 16
      %v445 = vrot.slane %v443, 4
      %v446 = vshll.u32 %v380, 16
      %v448 = vrot.slane %v446, 5
      %v449 = vor.u32 %v445, %v448
      %v450 = vrot.slane %v449, 4
      %v452 = vshll.u32 %v390, 16
      %v454 = vrot.slane %v452, 5
      %v455 = vsel %vm399, %v450, %v454
      %v457 = vshrl.u32 %v381, 16
      %v459 = vrot.slane %v457, 4
      %v460 = vshll.u32 %v381, 16
      %v462 = vrot.slane %v460, 5
      %v463 = vor.u32 %v459, %v462
      %v464 = vrot.slane %v463, 4
      %v466 = vshll.u32 %v391, 16
      %v468 = vrot.slane %v466, 5
      %v469 = vsel %vm399, %v464, %v468
      %v471 = vshrl.u32 %v382, 16
      %v473 = vrot.slane %v471, 4
      %v474 = vshll.u32 %v382, 16
      %v476 = vrot.slane %v474, 5
      %v477 = vor.u32 %v473, %v476
      %v478 = vrot.slane %v477, 4
      %v480 = vshll.u32 %v392, 16
      %v482 = vrot.slane %v480, 5
      %v483 = vsel %vm399, %v478, %v482
      %v485 = vshrl.u32 %v383, 16
      %v487 = vrot.slane %v485, 4
      %v488 = vshll.u32 %v383, 16
      %v490 = vrot.slane %v488, 5
      %v491 = vor.u32 %v487, %v490
      %v492 = vrot.slane %v491, 4
      %v494 = vshll.u32 %v393, 16
      %v496 = vrot.slane %v494, 5
      %v497 = vsel %vm399, %v492, %v496
      %v499 = vshrl.u32 %v384, 16
      %v501 = vrot.slane %v499, 4
      %v502 = vshll.u32 %v384, 16
      %v504 = vrot.slane %v502, 5
      %v505 = vor.u32 %v501, %v504
      %v506 = vrot.slane %v505, 4
      %v508 = vshll.u32 %v394, 16
      %v510 = vrot.slane %v508, 5
      %v511 = vsel %vm399, %v506, %v510
      %v513 = vshrl.u32 %v385, 16
      %v515 = vrot.slane %v513, 4
      %v516 = vshll.u32 %v385, 16
      %v518 = vrot.slane %v516, 5
      %v519 = vor.u32 %v515, %v518
      %v520 = vrot.slane %v519, 4
      %v522 = vshll.u32 %v395, 16
      %v524 = vrot.slane %v522, 5
      %v525 = vsel %vm399, %v520, %v524
      %v527 = vshrl.u32 %v386, 16
      %v529 = vrot.slane %v527, 4
      %v530 = vshll.u32 %v386, 16
      %v532 = vrot.slane %v530, 5
      %v533 = vor.u32 %v529, %v532
      %v534 = vrot.slane %v533, 4
      %v536 = vshll.u32 %v396, 16
      %v538 = vrot.slane %v536, 5
      %v539 = vsel %vm399, %v534, %v538
      %v540 = vld [vmem:[%s300] sm:$0xe]
      %v541 = vld [vmem:[%s300 + $0x8] sm:$0xe]
      %v542 = vld [vmem:[%s300 + $0x10] sm:$0xe]
      %v543 = vld [vmem:[%s300 + $0x18] sm:$0xe]
      %v544 = vld [vmem:[%s300 + $0x20] sm:$0xe]
      %v545 = vld [vmem:[%s300 + $0x28] sm:$0xe]
      %v546 = vld [vmem:[%s300 + $0x30] sm:$0xe]
      %v547 = vld [vmem:[%s300 + $0x38] sm:$0xe]
      %v548 = vld [vmem:[%s300 + $0x40] sm:$0xe]
      %v549 = vld [vmem:[%s300 + $0x48] sm:$0xe]
      %vm570 = vcmask 1042432
      %vm571 = vcmask 1046532
      %vm572 = vmor %vm570, %vm571
      %v573 = vrot.slane %v540, 5
      %v574 = vrot.slane %v573, 4
      %v575 = vrot.slane %v387, 5
      %v576 = vsel %vm572, %v574, %v575
      %v577 = vrot.slane %v541, 5
      %v578 = vrot.slane %v577, 4
      %v579 = vrot.slane %v388, 5
      %v580 = vsel %vm572, %v578, %v579
      %v581 = vrot.slane %v542, 5
      %v582 = vrot.slane %v581, 4
      %v583 = vrot.slane %v389, 5
      %v584 = vsel %vm572, %v582, %v583
      %v585 = vrot.slane %v543, 5
      %v586 = vrot.slane %v585, 4
      %v587 = vrot.slane %v390, 5
      %v588 = vsel %vm572, %v586, %v587
      %v589 = vrot.slane %v544, 5
      %v590 = vrot.slane %v589, 4
      %v591 = vrot.slane %v391, 5
      %v592 = vsel %vm572, %v590, %v591
      %v593 = vrot.slane %v545, 5
      %v594 = vrot.slane %v593, 4
      %v595 = vrot.slane %v392, 5
      %v596 = vsel %vm572, %v594, %v595
      %v597 = vrot.slane %v546, 5
      %v598 = vrot.slane %v597, 4
      %v599 = vrot.slane %v393, 5
      %v600 = vsel %vm572, %v598, %v599
      %v601 = vrot.slane %v547, 5
      %v602 = vrot.slane %v601, 4
      %v603 = vrot.slane %v394, 5
      %v604 = vsel %vm572, %v602, %v603
      %v605 = vrot.slane %v548, 5
      %v606 = vrot.slane %v605, 4
      %v607 = vrot.slane %v395, 5
      %v608 = vsel %vm572, %v606, %v607
      %v609 = vrot.slane %v549, 5
      %v610 = vrot.slane %v609, 4
      %v611 = vrot.slane %v396, 5
      %v612 = vsel %vm572, %v610, %v611
      %v613 = vld [vmem:[%s1] sm:$0xf]
      %v614 = vld [vmem:[%s1 + $0x4] sm:$0xf]
      %v615 = vld [vmem:[%s1 + $0x8] sm:$0xf]
      %v616 = vld [vmem:[%s1 + $0xc] sm:$0xf]
      %s617 = scalar_lea.vmem %s1, 16
      %v618 = vld [vmem:[%s617] sm:$0xf]
      %v619 = vld [vmem:[%s617 + $0x4] sm:$0xf]
      %v620 = vld [vmem:[%s617 + $0x8] sm:$0xf]
      %v621 = vld [vmem:[%s617 + $0xc] sm:$0xf]
      %v622 = vunpack.c.l.b16 %v413
      %v623 = vunpack.c.l.b16 %v427
      %v624 = vunpack.c.l.b16 %v441
      %v625 = vunpack.c.l.b16 %v455
      %v626 = vunpack.c.l.b16 %v469
      %v627 = vunpack.c.l.b16 %v483
      %v628 = vunpack.c.l.b16 %v497
      %v629 = vunpack.c.l.b16 %v511
      %v630 = vpack.c.b16 %v623, %v622
      %v631 = vpack.c.b16 %v625, %v624
      %v632 = vpack.c.b16 %v627, %v626
      %v633 = vpack.c.b16 %v629, %v628
      %v638 = vunpack.c.l.b16 %v618
      %v639 = vunpack.c.l.b16 %v619
      %v640 = vunpack.c.l.b16 %v620
      %v641 = vunpack.c.l.b16 %v621
      %v642 = vpack.c.b16 %v639, %v638
      %v643 = vpack.c.b16 %v641, %v640
      %vm646 = vcmask 261120
      %v648 = vsel %vm646, %v630, 0
      %v651 = vsel %vm646, %v631, 0
      %v654 = vsel %vm646, %v632, 0
      %v657 = vsel %vm646, %v633, 0
      %659 = vmatprep.subr.bf16.mxu0 0
      %660 = vmatpush1.bf16.msra.mxu0 0
      %661 = vmatprep.subr.bf16.mxu0 0
      %662 = vmatpush1.bf16.msra.mxu0 0
      %663 = vmatprep.subr.bf16.mxu0 0
      %664 = vmatpush1.bf16.msra.mxu0 0
      %665 = vmatprep.subr.bf16.mxu0 0
      %666 = vmatpush1.bf16.msra.mxu0 0
      %667 = vmatprep.subr.bf16.mxu0 0
      %668 = vmatpush1.bf16.msra.mxu0 0
      %669 = vmatprep.subr.bf16.mxu0 0
      %670 = vmatpush1.bf16.msra.mxu0 0
      %671 = vmatprep.subr.bf16.mxu0 0
      %672 = vmatpush1.bf16.msra.mxu0 %v643
      %673 = vmatprep.subr.bf16.mxu0 0
      %674 = vmatpush1.bf16.msra.mxu0 %v642
      %675 = vmatprep.subr.bf16.mxu0 0
      %676 = vmatpush2.bf16.msra.mxu0 0
      %677 = vmatprep.subr.bf16.mxu0 0
      %678 = vmatpush2.bf16.msra.mxu0 0
      %679 = vmatprep.subr.bf16.mxu0 0
      %680 = vmatpush2.bf16.msra.mxu0 0
      %681 = vmatprep.subr.bf16.mxu0 0
      %682 = vmatpush2.bf16.msra.mxu0 0
      %683 = vmatprep.subr.bf16.mxu0 0
      %684 = vmatpush2.bf16.msra.mxu0 0
      %685 = vmatprep.subr.bf16.mxu0 0
      %686 = vmatpush2.bf16.msra.mxu0 0
      %687 = vmatprep.subr.bf16.mxu0 0
      %688 = vmatpush2.bf16.msra.mxu0 0
      %689 = vmatprep.subr.bf16.mxu0 0
      %690 = vmatpush2.bf16.msra.mxu0 0
      %691 = vmatprep.mubr.bf16.mxu0 0
      %692 = vmatmul.mubr.bf16.gmra.mxu0 %v648
      %v693 = vpop.f32.mrf.mxu0
      %v694 = vadd.f32 0.0, %v693
      %v695 = vpop.f32.mrf.mxu0
      %v696 = vpop.f32.mrf.mxu0
      %v697 = vadd.f32 0.0, %v696
      %v698 = vpop.f32.mrf.mxu0
      %699 = vmatprep.mubr.bf16.mxu0 0
      %700 = vmatmul.mubr.bf16.gmra.mxu0 %v651
      %v701 = vpop.f32.mrf.mxu0
      %v702 = vadd.f32 0.0, %v701
      %v703 = vpop.f32.mrf.mxu0
      %v704 = vpop.f32.mrf.mxu0
      %v705 = vadd.f32 0.0, %v704
      %v706 = vpop.f32.mrf.mxu0
      %707 = vmatprep.mubr.bf16.mxu0 0
      %708 = vmatmul.mubr.bf16.gmra.mxu0 %v654
      %v709 = vpop.f32.mrf.mxu0
      %v710 = vadd.f32 0.0, %v709
      %v711 = vpop.f32.mrf.mxu0
      %v712 = vpop.f32.mrf.mxu0
      %v713 = vadd.f32 0.0, %v712
      %v714 = vpop.f32.mrf.mxu0
      %715 = vmatprep.mubr.bf16.mxu0 0
      %716 = vmatmul.mubr.bf16.gmra.mxu0 %v657
      %v717 = vpop.f32.mrf.mxu0
      %v718 = vadd.f32 0.0, %v717
      %v719 = vpop.f32.mrf.mxu0
      %v720 = vpop.f32.mrf.mxu0
      %v721 = vadd.f32 0.0, %v720
      %v722 = vpop.f32.mrf.mxu0
      %723 = vdwg.mxu0
      %v732 = vunpack.c.l.b16 %v377
      %v733 = vunpack.c.l.b16 %v378
      %v734 = vunpack.c.l.b16 %v379
      %v735 = vunpack.c.l.b16 %v380
      %v736 = vunpack.c.l.b16 %v381
      %v737 = vunpack.c.l.b16 %v382
      %v738 = vunpack.c.l.b16 %v383
      %v739 = vunpack.c.l.b16 %v384
      %v740 = vpack.c.b16 %v733, %v732
      %v741 = vpack.c.b16 %v735, %v734
      %v742 = vpack.c.b16 %v737, %v736
      %v743 = vpack.c.b16 %v739, %v738
      %v748 = vunpack.c.l.b16 %v613
      %v749 = vunpack.c.l.b16 %v614
      %v750 = vunpack.c.l.b16 %v615
      %v751 = vunpack.c.l.b16 %v616
      %v752 = vpack.c.b16 %v749, %v748
      %v753 = vpack.c.b16 %v751, %v750
      %v757 = vsel %vm646, %v740, 0
      %v760 = vsel %vm646, %v741, 0
      %v763 = vsel %vm646, %v742, 0
      %v766 = vsel %vm646, %v743, 0
      %768 = vmatprep.subr.bf16.mxu0 0
      %769 = vmatpush1.bf16.msra.mxu0 0
      %770 = vmatprep.subr.bf16.mxu0 0
      %771 = vmatpush1.bf16.msra.mxu0 0
      %772 = vmatprep.subr.bf16.mxu0 0
      %773 = vmatpush1.bf16.msra.mxu0 0
      %774 = vmatprep.subr.bf16.mxu0 0
      %775 = vmatpush1.bf16.msra.mxu0 0
      %776 = vmatprep.subr.bf16.mxu0 0
      %777 = vmatpush1.bf16.msra.mxu0 0
      %778 = vmatprep.subr.bf16.mxu0 0
      %779 = vmatpush1.bf16.msra.mxu0 0
      %780 = vmatprep.subr.bf16.mxu0 0
      %781 = vmatpush1.bf16.msra.mxu0 %v753
      %782 = vmatprep.subr.bf16.mxu0 0
      %783 = vmatpush1.bf16.msra.mxu0 %v752
      %784 = vmatprep.subr.bf16.mxu0 0
      %785 = vmatpush2.bf16.msra.mxu0 0
      %786 = vmatprep.subr.bf16.mxu0 0
      %787 = vmatpush2.bf16.msra.mxu0 0
      %788 = vmatprep.subr.bf16.mxu0 0
      %789 = vmatpush2.bf16.msra.mxu0 0
      %790 = vmatprep.subr.bf16.mxu0 0
      %791 = vmatpush2.bf16.msra.mxu0 0
      %792 = vmatprep.subr.bf16.mxu0 0
      %793 = vmatpush2.bf16.msra.mxu0 0
      %794 = vmatprep.subr.bf16.mxu0 0
      %795 = vmatpush2.bf16.msra.mxu0 0
      %796 = vmatprep.subr.bf16.mxu0 0
      %797 = vmatpush2.bf16.msra.mxu0 0
      %798 = vmatprep.subr.bf16.mxu0 0
      %799 = vmatpush2.bf16.msra.mxu0 0
      %800 = vmatprep.mubr.bf16.mxu0 0
      %801 = vmatmul.mubr.bf16.gmra.mxu0 %v757
      %v802 = vpop.f32.mrf.mxu0
      %v803 = vadd.f32 %v694, %v802
      %v804 = vpop.f32.mrf.mxu0
      %v805 = vpop.f32.mrf.mxu0
      %v806 = vadd.f32 %v697, %v805
      %v807 = vpop.f32.mrf.mxu0
      %808 = vmatprep.mubr.bf16.mxu0 0
      %809 = vmatmul.mubr.bf16.gmra.mxu0 %v760
      %v810 = vpop.f32.mrf.mxu0
      %v811 = vadd.f32 %v702, %v810
      %v812 = vpop.f32.mrf.mxu0
      %v813 = vpop.f32.mrf.mxu0
      %v814 = vadd.f32 %v705, %v813
      %v815 = vpop.f32.mrf.mxu0
      %816 = vmatprep.mubr.bf16.mxu0 0
      %817 = vmatmul.mubr.bf16.gmra.mxu0 %v763
      %v818 = vpop.f32.mrf.mxu0
      %v819 = vadd.f32 %v710, %v818
      %v820 = vpop.f32.mrf.mxu0
      %v821 = vpop.f32.mrf.mxu0
      %v822 = vadd.f32 %v713, %v821
      %v823 = vpop.f32.mrf.mxu0
      %824 = vmatprep.mubr.bf16.mxu0 0
      %825 = vmatmul.mubr.bf16.gmra.mxu0 %v766
      %v826 = vpop.f32.mrf.mxu0
      %v827 = vadd.f32 %v718, %v826
      %v828 = vpop.f32.mrf.mxu0
      %v829 = vpop.f32.mrf.mxu0
      %v830 = vadd.f32 %v721, %v829
      %v831 = vpop.f32.mrf.mxu0
      %832 = vdwg.mxu0
      %s833 = scalar_lea.vmem %s1, 32
      %v834 = vld [vmem:[%s833] sm:$0xf]
      %v835 = vld [vmem:[%s833 + $0x4] sm:$0xf]
      %v836 = vld [vmem:[%s833 + $0x8] sm:$0xf]
      %v837 = vld [vmem:[%s833 + $0xc] sm:$0xf]
      %v838 = vunpack.c.l.b16 %v576
      %v839 = vunpack.c.l.b16 %v580
      %v840 = vunpack.c.l.b16 %v584
      %v841 = vunpack.c.l.b16 %v588
      %v842 = vunpack.c.l.b16 %v592
      %v843 = vunpack.c.l.b16 %v596
      %v844 = vunpack.c.l.b16 %v600
      %v845 = vunpack.c.l.b16 %v604
      %v846 = vpack.c.b16 %v839, %v838
      %v847 = vpack.c.b16 %v841, %v840
      %v848 = vpack.c.b16 %v843, %v842
      %v849 = vpack.c.b16 %v845, %v844
      %v854 = vunpack.c.l.b16 %v834
      %v855 = vunpack.c.l.b16 %v835
      %v856 = vunpack.c.l.b16 %v836
      %v857 = vunpack.c.l.b16 %v837
      %v858 = vpack.c.b16 %v855, %v854
      %v859 = vpack.c.b16 %v857, %v856
      %v863 = vsel %vm646, %v846, 0
      %v866 = vsel %vm646, %v847, 0
      %v869 = vsel %vm646, %v848, 0
      %v872 = vsel %vm646, %v849, 0
      %874 = vmatprep.subr.bf16.mxu0 0
      %875 = vmatpush1.bf16.msra.mxu0 0
      %876 = vmatprep.subr.bf16.mxu0 0
      %877 = vmatpush1.bf16.msra.mxu0 0
      %878 = vmatprep.subr.bf16.mxu0 0
      %879 = vmatpush1.bf16.msra.mxu0 0
      %880 = vmatprep.subr.bf16.mxu0 0
      %881 = vmatpush1.bf16.msra.mxu0 0
      %882 = vmatprep.subr.bf16.mxu0 0
      %883 = vmatpush1.bf16.msra.mxu0 0
      %884 = vmatprep.subr.bf16.mxu0 0
      %885 = vmatpush1.bf16.msra.mxu0 0
      %886 = vmatprep.subr.bf16.mxu0 0
      %887 = vmatpush1.bf16.msra.mxu0 %v859
      %888 = vmatprep.subr.bf16.mxu0 0
      %889 = vmatpush1.bf16.msra.mxu0 %v858
      %890 = vmatprep.subr.bf16.mxu0 0
      %891 = vmatpush2.bf16.msra.mxu0 0
      %892 = vmatprep.subr.bf16.mxu0 0
      %893 = vmatpush2.bf16.msra.mxu0 0
      %894 = vmatprep.subr.bf16.mxu0 0
      %895 = vmatpush2.bf16.msra.mxu0 0
      %896 = vmatprep.subr.bf16.mxu0 0
      %897 = vmatpush2.bf16.msra.mxu0 0
      %898 = vmatprep.subr.bf16.mxu0 0
      %899 = vmatpush2.bf16.msra.mxu0 0
      %900 = vmatprep.subr.bf16.mxu0 0
      %901 = vmatpush2.bf16.msra.mxu0 0
      %902 = vmatprep.subr.bf16.mxu0 0
      %903 = vmatpush2.bf16.msra.mxu0 0
      %904 = vmatprep.subr.bf16.mxu0 0
      %905 = vmatpush2.bf16.msra.mxu0 0
      %906 = vmatprep.mubr.bf16.mxu0 0
      %907 = vmatmul.mubr.bf16.gmra.mxu0 %v863
      %v908 = vpop.f32.mrf.mxu0
      %v909 = vadd.f32 0.0, %v908
      %v910 = vpop.f32.mrf.mxu0
      %v911 = vpop.f32.mrf.mxu0
      %v912 = vadd.f32 0.0, %v911
      %v913 = vpop.f32.mrf.mxu0
      %914 = vmatprep.mubr.bf16.mxu0 0
      %915 = vmatmul.mubr.bf16.gmra.mxu0 %v866
      %v916 = vpop.f32.mrf.mxu0
      %v917 = vadd.f32 0.0, %v916
      %v918 = vpop.f32.mrf.mxu0
      %v919 = vpop.f32.mrf.mxu0
      %v920 = vadd.f32 0.0, %v919
      %v921 = vpop.f32.mrf.mxu0
      %922 = vmatprep.mubr.bf16.mxu0 0
      %923 = vmatmul.mubr.bf16.gmra.mxu0 %v869
      %v924 = vpop.f32.mrf.mxu0
      %v925 = vadd.f32 0.0, %v924
      %v926 = vpop.f32.mrf.mxu0
      %v927 = vpop.f32.mrf.mxu0
      %v928 = vadd.f32 0.0, %v927
      %v929 = vpop.f32.mrf.mxu0
      %930 = vmatprep.mubr.bf16.mxu0 0
      %931 = vmatmul.mubr.bf16.gmra.mxu0 %v872
      %v932 = vpop.f32.mrf.mxu0
      %v933 = vadd.f32 0.0, %v932
      %v934 = vpop.f32.mrf.mxu0
      %v935 = vpop.f32.mrf.mxu0
      %v936 = vadd.f32 0.0, %v935
      %v937 = vpop.f32.mrf.mxu0
      %938 = vdwg.mxu0
      %v939 = vadd.f32 %v803, %v909
      %v940 = vadd.f32 %v806, %v912
      %v941 = vadd.f32 %v811, %v917
      %v942 = vadd.f32 %v814, %v920
      %v943 = vadd.f32 %v819, %v925
      %v944 = vadd.f32 %v822, %v928
      %v945 = vadd.f32 %v827, %v933
      %v946 = vadd.f32 %v830, %v936
      %s947 = scalar_lea.vmem %s1, 48
      %v948 = vld [vmem:[%s947] sm:$0xf]
      %v949 = vld [vmem:[%s947 + $0x4] sm:$0xf]
      %v950 = vld [vmem:[%s947 + $0x8] sm:$0xf]
      %v951 = vld [vmem:[%s947 + $0xc] sm:$0xf]
      %v953 = vunpack.c.l.b16 %v385
      %v954 = vpack.c.b16 %v734, %v733
      %v955 = vpack.c.b16 %v736, %v735
      %v956 = vpack.c.b16 %v738, %v737
      %v957 = vpack.c.b16 %v953, %v739
      %v962 = vunpack.c.l.b16 %v948
      %v963 = vunpack.c.l.b16 %v949
      %v964 = vunpack.c.l.b16 %v950
      %v965 = vunpack.c.l.b16 %v951
      %v966 = vpack.c.b16 %v963, %v962
      %v967 = vpack.c.b16 %v965, %v964
      %v971 = vsel %vm646, %v954, 0
      %v974 = vsel %vm646, %v955, 0
      %v977 = vsel %vm646, %v956, 0
      %v980 = vsel %vm646, %v957, 0
      %982 = vmatprep.subr.bf16.mxu0 0
      %983 = vmatpush1.bf16.msra.mxu0 0
      %984 = vmatprep.subr.bf16.mxu0 0
      %985 = vmatpush1.bf16.msra.mxu0 0
      %986 = vmatprep.subr.bf16.mxu0 0
      %987 = vmatpush1.bf16.msra.mxu0 0
      %988 = vmatprep.subr.bf16.mxu0 0
      %989 = vmatpush1.bf16.msra.mxu0 0
      %990 = vmatprep.subr.bf16.mxu0 0
      %991 = vmatpush1.bf16.msra.mxu0 0
      %992 = vmatprep.subr.bf16.mxu0 0
      %993 = vmatpush1.bf16.msra.mxu0 0
      %994 = vmatprep.subr.bf16.mxu0 0
      %995 = vmatpush1.bf16.msra.mxu0 %v967
      %996 = vmatprep.subr.bf16.mxu0 0
      %997 = vmatpush1.bf16.msra.mxu0 %v966
      %998 = vmatprep.subr.bf16.mxu0 0
      %999 = vmatpush2.bf16.msra.mxu0 0
      %1000 = vmatprep.subr.bf16.mxu0 0
      %1001 = vmatpush2.bf16.msra.mxu0 0
      %1002 = vmatprep.subr.bf16.mxu0 0
      %1003 = vmatpush2.bf16.msra.mxu0 0
      %1004 = vmatprep.subr.bf16.mxu0 0
      %1005 = vmatpush2.bf16.msra.mxu0 0
      %1006 = vmatprep.subr.bf16.mxu0 0
      %1007 = vmatpush2.bf16.msra.mxu0 0
      %1008 = vmatprep.subr.bf16.mxu0 0
      %1009 = vmatpush2.bf16.msra.mxu0 0
      %1010 = vmatprep.subr.bf16.mxu0 0
      %1011 = vmatpush2.bf16.msra.mxu0 0
      %1012 = vmatprep.subr.bf16.mxu0 0
      %1013 = vmatpush2.bf16.msra.mxu0 0
      %1014 = vmatprep.mubr.bf16.mxu0 0
      %1015 = vmatmul.mubr.bf16.gmra.mxu0 %v971
      %v1016 = vpop.f32.mrf.mxu0
      %v1017 = vadd.f32 0.0, %v1016
      %v1018 = vpop.f32.mrf.mxu0
      %v1019 = vpop.f32.mrf.mxu0
      %v1020 = vadd.f32 0.0, %v1019
      %v1021 = vpop.f32.mrf.mxu0
      %1022 = vmatprep.mubr.bf16.mxu0 0
      %1023 = vmatmul.mubr.bf16.gmra.mxu0 %v974
      %v1024 = vpop.f32.mrf.mxu0
      %v1025 = vadd.f32 0.0, %v1024
      %v1026 = vpop.f32.mrf.mxu0
      %v1027 = vpop.f32.mrf.mxu0
      %v1028 = vadd.f32 0.0, %v1027
      %v1029 = vpop.f32.mrf.mxu0
      %1030 = vmatprep.mubr.bf16.mxu0 0
      %1031 = vmatmul.mubr.bf16.gmra.mxu0 %v977
      %v1032 = vpop.f32.mrf.mxu0
      %v1033 = vadd.f32 0.0, %v1032
      %v1034 = vpop.f32.mrf.mxu0
      %v1035 = vpop.f32.mrf.mxu0
      %v1036 = vadd.f32 0.0, %v1035
      %v1037 = vpop.f32.mrf.mxu0
      %1038 = vmatprep.mubr.bf16.mxu0 0
      %1039 = vmatmul.mubr.bf16.gmra.mxu0 %v980
      %v1040 = vpop.f32.mrf.mxu0
      %v1041 = vadd.f32 0.0, %v1040
      %v1042 = vpop.f32.mrf.mxu0
      %v1043 = vpop.f32.mrf.mxu0
      %v1044 = vadd.f32 0.0, %v1043
      %v1045 = vpop.f32.mrf.mxu0
      %1046 = vdwg.mxu0
      %v1047 = vadd.f32 %v939, %v1017
      %v1048 = vadd.f32 %v940, %v1020
      %v1049 = vadd.f32 %v941, %v1025
      %v1050 = vadd.f32 %v942, %v1028
      %v1051 = vadd.f32 %v943, %v1033
      %v1052 = vadd.f32 %v944, %v1036
      %v1053 = vadd.f32 %v945, %v1041
      %v1054 = vadd.f32 %v946, %v1044
      %s1055 = scalar_lea.vmem %s1, 64
      %v1056 = vld [vmem:[%s1055] sm:$0xf]
      %v1057 = vld [vmem:[%s1055 + $0x4] sm:$0xf]
      %v1058 = vld [vmem:[%s1055 + $0x8] sm:$0xf]
      %v1059 = vld [vmem:[%s1055 + $0xc] sm:$0xf]
      %v1060 = vunpack.c.l.b16 %v525
      %v1061 = vpack.c.b16 %v624, %v623
      %v1062 = vpack.c.b16 %v626, %v625
      %v1063 = vpack.c.b16 %v628, %v627
      %v1064 = vpack.c.b16 %v1060, %v629
      %v1069 = vunpack.c.l.b16 %v1056
      %v1070 = vunpack.c.l.b16 %v1057
      %v1071 = vunpack.c.l.b16 %v1058
      %v1072 = vunpack.c.l.b16 %v1059
      %v1073 = vpack.c.b16 %v1070, %v1069
      %v1074 = vpack.c.b16 %v1072, %v1071
      %v1078 = vsel %vm646, %v1061, 0
      %v1081 = vsel %vm646, %v1062, 0
      %v1084 = vsel %vm646, %v1063, 0
      %v1087 = vsel %vm646, %v1064, 0
      %1089 = vmatprep.subr.bf16.mxu0 0
      %1090 = vmatpush1.bf16.msra.mxu0 0
      %1091 = vmatprep.subr.bf16.mxu0 0
      %1092 = vmatpush1.bf16.msra.mxu0 0
      %1093 = vmatprep.subr.bf16.mxu0 0
      %1094 = vmatpush1.bf16.msra.mxu0 0
      %1095 = vmatprep.subr.bf16.mxu0 0
      %1096 = vmatpush1.bf16.msra.mxu0 0
      %1097 = vmatprep.subr.bf16.mxu0 0
      %1098 = vmatpush1.bf16.msra.mxu0 0
      %1099 = vmatprep.subr.bf16.mxu0 0
      %1100 = vmatpush1.bf16.msra.mxu0 0
      %1101 = vmatprep.subr.bf16.mxu0 0
      %1102 = vmatpush1.bf16.msra.mxu0 %v1074
      %1103 = vmatprep.subr.bf16.mxu0 0
      %1104 = vmatpush1.bf16.msra.mxu0 %v1073
      %1105 = vmatprep.subr.bf16.mxu0 0
      %1106 = vmatpush2.bf16.msra.mxu0 0
      %1107 = vmatprep.subr.bf16.mxu0 0
      %1108 = vmatpush2.bf16.msra.mxu0 0
      %1109 = vmatprep.subr.bf16.mxu0 0
      %1110 = vmatpush2.bf16.msra.mxu0 0
      %1111 = vmatprep.subr.bf16.mxu0 0
      %1112 = vmatpush2.bf16.msra.mxu0 0
      %1113 = vmatprep.subr.bf16.mxu0 0
      %1114 = vmatpush2.bf16.msra.mxu0 0
      %1115 = vmatprep.subr.bf16.mxu0 0
      %1116 = vmatpush2.bf16.msra.mxu0 0
      %1117 = vmatprep.subr.bf16.mxu0 0
      %1118 = vmatpush2.bf16.msra.mxu0 0
      %1119 = vmatprep.subr.bf16.mxu0 0
      %1120 = vmatpush2.bf16.msra.mxu0 0
      %1121 = vmatprep.mubr.bf16.mxu0 0
      %1122 = vmatmul.mubr.bf16.gmra.mxu0 %v1078
      %v1123 = vpop.f32.mrf.mxu0
      %v1124 = vadd.f32 0.0, %v1123
      %v1125 = vpop.f32.mrf.mxu0
      %v1126 = vpop.f32.mrf.mxu0
      %v1127 = vadd.f32 0.0, %v1126
      %v1128 = vpop.f32.mrf.mxu0
      %1129 = vmatprep.mubr.bf16.mxu0 0
      %1130 = vmatmul.mubr.bf16.gmra.mxu0 %v1081
      %v1131 = vpop.f32.mrf.mxu0
      %v1132 = vadd.f32 0.0, %v1131
      %v1133 = vpop.f32.mrf.mxu0
      %v1134 = vpop.f32.mrf.mxu0
      %v1135 = vadd.f32 0.0, %v1134
      %v1136 = vpop.f32.mrf.mxu0
      %1137 = vmatprep.mubr.bf16.mxu0 0
      %1138 = vmatmul.mubr.bf16.gmra.mxu0 %v1084
      %v1139 = vpop.f32.mrf.mxu0
      %v1140 = vadd.f32 0.0, %v1139
      %v1141 = vpop.f32.mrf.mxu0
      %v1142 = vpop.f32.mrf.mxu0
      %v1143 = vadd.f32 0.0, %v1142
      %v1144 = vpop.f32.mrf.mxu0
      %1145 = vmatprep.mubr.bf16.mxu0 0
      %1146 = vmatmul.mubr.bf16.gmra.mxu0 %v1087
      %v1147 = vpop.f32.mrf.mxu0
      %v1148 = vadd.f32 0.0, %v1147
      %v1149 = vpop.f32.mrf.mxu0
      %v1150 = vpop.f32.mrf.mxu0
      %v1151 = vadd.f32 0.0, %v1150
      %v1152 = vpop.f32.mrf.mxu0
      %1153 = vdwg.mxu0
      %v1154 = vadd.f32 %v1047, %v1124
      %v1155 = vadd.f32 %v1048, %v1127
      %v1156 = vadd.f32 %v1049, %v1132
      %v1157 = vadd.f32 %v1050, %v1135
      %v1158 = vadd.f32 %v1051, %v1140
      %v1159 = vadd.f32 %v1052, %v1143
      %v1160 = vadd.f32 %v1053, %v1148
      %v1161 = vadd.f32 %v1054, %v1151
      %s1162 = scalar_lea.vmem %s1, 80
      %v1163 = vld [vmem:[%s1162] sm:$0xf]
      %v1164 = vld [vmem:[%s1162 + $0x4] sm:$0xf]
      %v1165 = vld [vmem:[%s1162 + $0x8] sm:$0xf]
      %v1166 = vld [vmem:[%s1162 + $0xc] sm:$0xf]
      %v1167 = vunpack.c.l.b16 %v608
      %v1168 = vpack.c.b16 %v840, %v839
      %v1169 = vpack.c.b16 %v842, %v841
      %v1170 = vpack.c.b16 %v844, %v843
      %v1171 = vpack.c.b16 %v1167, %v845
      %v1176 = vunpack.c.l.b16 %v1163
      %v1177 = vunpack.c.l.b16 %v1164
      %v1178 = vunpack.c.l.b16 %v1165
      %v1179 = vunpack.c.l.b16 %v1166
      %v1180 = vpack.c.b16 %v1177, %v1176
      %v1181 = vpack.c.b16 %v1179, %v1178
      %v1185 = vsel %vm646, %v1168, 0
      %v1188 = vsel %vm646, %v1169, 0
      %v1191 = vsel %vm646, %v1170, 0
      %v1194 = vsel %vm646, %v1171, 0
      %1196 = vmatprep.subr.bf16.mxu0 0
      %1197 = vmatpush1.bf16.msra.mxu0 0
      %1198 = vmatprep.subr.bf16.mxu0 0
      %1199 = vmatpush1.bf16.msra.mxu0 0
      %1200 = vmatprep.subr.bf16.mxu0 0
      %1201 = vmatpush1.bf16.msra.mxu0 0
      %1202 = vmatprep.subr.bf16.mxu0 0
      %1203 = vmatpush1.bf16.msra.mxu0 0
      %1204 = vmatprep.subr.bf16.mxu0 0
      %1205 = vmatpush1.bf16.msra.mxu0 0
      %1206 = vmatprep.subr.bf16.mxu0 0
      %1207 = vmatpush1.bf16.msra.mxu0 0
      %1208 = vmatprep.subr.bf16.mxu0 0
      %1209 = vmatpush1.bf16.msra.mxu0 %v1181
      %1210 = vmatprep.subr.bf16.mxu0 0
      %1211 = vmatpush1.bf16.msra.mxu0 %v1180
      %1212 = vmatprep.subr.bf16.mxu0 0
      %1213 = vmatpush2.bf16.msra.mxu0 0
      %1214 = vmatprep.subr.bf16.mxu0 0
      %1215 = vmatpush2.bf16.msra.mxu0 0
      %1216 = vmatprep.subr.bf16.mxu0 0
      %1217 = vmatpush2.bf16.msra.mxu0 0
      %1218 = vmatprep.subr.bf16.mxu0 0
      %1219 = vmatpush2.bf16.msra.mxu0 0
      %1220 = vmatprep.subr.bf16.mxu0 0
      %1221 = vmatpush2.bf16.msra.mxu0 0
      %1222 = vmatprep.subr.bf16.mxu0 0
      %1223 = vmatpush2.bf16.msra.mxu0 0
      %1224 = vmatprep.subr.bf16.mxu0 0
      %1225 = vmatpush2.bf16.msra.mxu0 0
      %1226 = vmatprep.subr.bf16.mxu0 0
      %1227 = vmatpush2.bf16.msra.mxu0 0
      %1228 = vmatprep.mubr.bf16.mxu0 0
      %1229 = vmatmul.mubr.bf16.gmra.mxu0 %v1185
      %v1230 = vpop.f32.mrf.mxu0
      %v1231 = vadd.f32 0.0, %v1230
      %v1232 = vpop.f32.mrf.mxu0
      %v1233 = vpop.f32.mrf.mxu0
      %v1234 = vadd.f32 0.0, %v1233
      %v1235 = vpop.f32.mrf.mxu0
      %1236 = vmatprep.mubr.bf16.mxu0 0
      %1237 = vmatmul.mubr.bf16.gmra.mxu0 %v1188
      %v1238 = vpop.f32.mrf.mxu0
      %v1239 = vadd.f32 0.0, %v1238
      %v1240 = vpop.f32.mrf.mxu0
      %v1241 = vpop.f32.mrf.mxu0
      %v1242 = vadd.f32 0.0, %v1241
      %v1243 = vpop.f32.mrf.mxu0
      %1244 = vmatprep.mubr.bf16.mxu0 0
      %1245 = vmatmul.mubr.bf16.gmra.mxu0 %v1191
      %v1246 = vpop.f32.mrf.mxu0
      %v1247 = vadd.f32 0.0, %v1246
      %v1248 = vpop.f32.mrf.mxu0
      %v1249 = vpop.f32.mrf.mxu0
      %v1250 = vadd.f32 0.0, %v1249
      %v1251 = vpop.f32.mrf.mxu0
      %1252 = vmatprep.mubr.bf16.mxu0 0
      %1253 = vmatmul.mubr.bf16.gmra.mxu0 %v1194
      %v1254 = vpop.f32.mrf.mxu0
      %v1255 = vadd.f32 0.0, %v1254
      %v1256 = vpop.f32.mrf.mxu0
      %v1257 = vpop.f32.mrf.mxu0
      %v1258 = vadd.f32 0.0, %v1257
      %v1259 = vpop.f32.mrf.mxu0
      %1260 = vdwg.mxu0
      %v1261 = vadd.f32 %v1154, %v1231
      %v1262 = vadd.f32 %v1155, %v1234
      %v1263 = vadd.f32 %v1156, %v1239
      %v1264 = vadd.f32 %v1157, %v1242
      %v1265 = vadd.f32 %v1158, %v1247
      %v1266 = vadd.f32 %v1159, %v1250
      %v1267 = vadd.f32 %v1160, %v1255
      %v1268 = vadd.f32 %v1161, %v1258
      %s1269 = scalar_lea.vmem %s1, 96
      %v1270 = vld [vmem:[%s1269] sm:$0xf]
      %v1271 = vld [vmem:[%s1269 + $0x4] sm:$0xf]
      %v1272 = vld [vmem:[%s1269 + $0x8] sm:$0xf]
      %v1273 = vld [vmem:[%s1269 + $0xc] sm:$0xf]
      %v1275 = vunpack.c.l.b16 %v386
      %v1276 = vpack.c.b16 %v1275, %v953
      %v1281 = vunpack.c.l.b16 %v1270
      %v1282 = vunpack.c.l.b16 %v1271
      %v1283 = vunpack.c.l.b16 %v1272
      %v1284 = vunpack.c.l.b16 %v1273
      %v1285 = vpack.c.b16 %v1282, %v1281
      %v1286 = vpack.c.b16 %v1284, %v1283
      %v1290 = vsel %vm646, %v1276, 0
      %1292 = vmatprep.subr.bf16.mxu0 0
      %1293 = vmatpush1.bf16.msra.mxu0 0
      %1294 = vmatprep.subr.bf16.mxu0 0
      %1295 = vmatpush1.bf16.msra.mxu0 0
      %1296 = vmatprep.subr.bf16.mxu0 0
      %1297 = vmatpush1.bf16.msra.mxu0 0
      %1298 = vmatprep.subr.bf16.mxu0 0
      %1299 = vmatpush1.bf16.msra.mxu0 0
      %1300 = vmatprep.subr.bf16.mxu0 0
      %1301 = vmatpush1.bf16.msra.mxu0 0
      %1302 = vmatprep.subr.bf16.mxu0 0
      %1303 = vmatpush1.bf16.msra.mxu0 0
      %1304 = vmatprep.subr.bf16.mxu0 0
      %1305 = vmatpush1.bf16.msra.mxu0 %v1286
      %1306 = vmatprep.subr.bf16.mxu0 0
      %1307 = vmatpush1.bf16.msra.mxu0 %v1285
      %1308 = vmatprep.subr.bf16.mxu0 0
      %1309 = vmatpush2.bf16.msra.mxu0 0
      %1310 = vmatprep.subr.bf16.mxu0 0
      %1311 = vmatpush2.bf16.msra.mxu0 0
      %1312 = vmatprep.subr.bf16.mxu0 0
      %1313 = vmatpush2.bf16.msra.mxu0 0
      %1314 = vmatprep.subr.bf16.mxu0 0
      %1315 = vmatpush2.bf16.msra.mxu0 0
      %1316 = vmatprep.subr.bf16.mxu0 0
      %1317 = vmatpush2.bf16.msra.mxu0 0
      %1318 = vmatprep.subr.bf16.mxu0 0
      %1319 = vmatpush2.bf16.msra.mxu0 0
      %1320 = vmatprep.subr.bf16.mxu0 0
      %1321 = vmatpush2.bf16.msra.mxu0 0
      %1322 = vmatprep.subr.bf16.mxu0 0
      %1323 = vmatpush2.bf16.msra.mxu0 0
      %1324 = vmatprep.mubr.bf16.mxu0 0
      %1325 = vmatmul.mubr.bf16.gmra.mxu0 %v760
      %v1326 = vpop.f32.mrf.mxu0
      %v1327 = vadd.f32 0.0, %v1326
      %v1328 = vpop.f32.mrf.mxu0
      %v1329 = vpop.f32.mrf.mxu0
      %v1330 = vadd.f32 0.0, %v1329
      %v1331 = vpop.f32.mrf.mxu0
      %1332 = vmatprep.mubr.bf16.mxu0 0
      %1333 = vmatmul.mubr.bf16.gmra.mxu0 %v763
      %v1334 = vpop.f32.mrf.mxu0
      %v1335 = vadd.f32 0.0, %v1334
      %v1336 = vpop.f32.mrf.mxu0
      %v1337 = vpop.f32.mrf.mxu0
      %v1338 = vadd.f32 0.0, %v1337
      %v1339 = vpop.f32.mrf.mxu0
      %1340 = vmatprep.mubr.bf16.mxu0 0
      %1341 = vmatmul.mubr.bf16.gmra.mxu0 %v766
      %v1342 = vpop.f32.mrf.mxu0
      %v1343 = vadd.f32 0.0, %v1342
      %v1344 = vpop.f32.mrf.mxu0
      %v1345 = vpop.f32.mrf.mxu0
      %v1346 = vadd.f32 0.0, %v1345
      %v1347 = vpop.f32.mrf.mxu0
      %1348 = vmatprep.mubr.bf16.mxu0 0
      %1349 = vmatmul.mubr.bf16.gmra.mxu0 %v1290
      %v1350 = vpop.f32.mrf.mxu0
      %v1351 = vadd.f32 0.0, %v1350
      %v1352 = vpop.f32.mrf.mxu0
      %v1353 = vpop.f32.mrf.mxu0
      %v1354 = vadd.f32 0.0, %v1353
      %v1355 = vpop.f32.mrf.mxu0
      %1356 = vdwg.mxu0
      %v1357 = vadd.f32 %v1261, %v1327
      %v1358 = vadd.f32 %v1262, %v1330
      %v1359 = vadd.f32 %v1263, %v1335
      %v1360 = vadd.f32 %v1264, %v1338
      %v1361 = vadd.f32 %v1265, %v1343
      %v1362 = vadd.f32 %v1266, %v1346
      %v1363 = vadd.f32 %v1267, %v1351
      %v1364 = vadd.f32 %v1268, %v1354
      %s1365 = scalar_lea.vmem %s1, 112
      %v1366 = vld [vmem:[%s1365] sm:$0xf]
      %v1367 = vld [vmem:[%s1365 + $0x4] sm:$0xf]
      %v1368 = vld [vmem:[%s1365 + $0x8] sm:$0xf]
      %v1369 = vld [vmem:[%s1365 + $0xc] sm:$0xf]
      %v1370 = vunpack.c.l.b16 %v539
      %v1371 = vpack.c.b16 %v1370, %v1060
      %v1376 = vunpack.c.l.b16 %v1366
      %v1377 = vunpack.c.l.b16 %v1367
      %v1378 = vunpack.c.l.b16 %v1368
      %v1379 = vunpack.c.l.b16 %v1369
      %v1380 = vpack.c.b16 %v1377, %v1376
      %v1381 = vpack.c.b16 %v1379, %v1378
      %v1385 = vsel %vm646, %v1371, 0
      %1387 = vmatprep.subr.bf16.mxu0 0
      %1388 = vmatpush1.bf16.msra.mxu0 0
      %1389 = vmatprep.subr.bf16.mxu0 0
      %1390 = vmatpush1.bf16.msra.mxu0 0
      %1391 = vmatprep.subr.bf16.mxu0 0
      %1392 = vmatpush1.bf16.msra.mxu0 0
      %1393 = vmatprep.subr.bf16.mxu0 0
      %1394 = vmatpush1.bf16.msra.mxu0 0
      %1395 = vmatprep.subr.bf16.mxu0 0
      %1396 = vmatpush1.bf16.msra.mxu0 0
      %1397 = vmatprep.subr.bf16.mxu0 0
      %1398 = vmatpush1.bf16.msra.mxu0 0
      %1399 = vmatprep.subr.bf16.mxu0 0
      %1400 = vmatpush1.bf16.msra.mxu0 %v1381
      %1401 = vmatprep.subr.bf16.mxu0 0
      %1402 = vmatpush1.bf16.msra.mxu0 %v1380
      %1403 = vmatprep.subr.bf16.mxu0 0
      %1404 = vmatpush2.bf16.msra.mxu0 0
      %1405 = vmatprep.subr.bf16.mxu0 0
      %1406 = vmatpush2.bf16.msra.mxu0 0
      %1407 = vmatprep.subr.bf16.mxu0 0
      %1408 = vmatpush2.bf16.msra.mxu0 0
      %1409 = vmatprep.subr.bf16.mxu0 0
      %1410 = vmatpush2.bf16.msra.mxu0 0
      %1411 = vmatprep.subr.bf16.mxu0 0
      %1412 = vmatpush2.bf16.msra.mxu0 0
      %1413 = vmatprep.subr.bf16.mxu0 0
      %1414 = vmatpush2.bf16.msra.mxu0 0
      %1415 = vmatprep.subr.bf16.mxu0 0
      %1416 = vmatpush2.bf16.msra.mxu0 0
      %1417 = vmatprep.subr.bf16.mxu0 0
      %1418 = vmatpush2.bf16.msra.mxu0 0
      %1419 = vmatprep.mubr.bf16.mxu0 0
      %1420 = vmatmul.mubr.bf16.gmra.mxu0 %v651
      %v1421 = vpop.f32.mrf.mxu0
      %v1422 = vadd.f32 0.0, %v1421
      %v1423 = vpop.f32.mrf.mxu0
      %v1424 = vpop.f32.mrf.mxu0
      %v1425 = vadd.f32 0.0, %v1424
      %v1426 = vpop.f32.mrf.mxu0
      %1427 = vmatprep.mubr.bf16.mxu0 0
      %1428 = vmatmul.mubr.bf16.gmra.mxu0 %v654
      %v1429 = vpop.f32.mrf.mxu0
      %v1430 = vadd.f32 0.0, %v1429
      %v1431 = vpop.f32.mrf.mxu0
      %v1432 = vpop.f32.mrf.mxu0
      %v1433 = vadd.f32 0.0, %v1432
      %v1434 = vpop.f32.mrf.mxu0
      %1435 = vmatprep.mubr.bf16.mxu0 0
      %1436 = vmatmul.mubr.bf16.gmra.mxu0 %v657
      %v1437 = vpop.f32.mrf.mxu0
      %v1438 = vadd.f32 0.0, %v1437
      %v1439 = vpop.f32.mrf.mxu0
      %v1440 = vpop.f32.mrf.mxu0
      %v1441 = vadd.f32 0.0, %v1440
      %v1442 = vpop.f32.mrf.mxu0
      %1443 = vmatprep.mubr.bf16.mxu0 0
      %1444 = vmatmul.mubr.bf16.gmra.mxu0 %v1385
      %v1445 = vpop.f32.mrf.mxu0
      %v1446 = vadd.f32 0.0, %v1445
      %v1447 = vpop.f32.mrf.mxu0
      %v1448 = vpop.f32.mrf.mxu0
      %v1449 = vadd.f32 0.0, %v1448
      %v1450 = vpop.f32.mrf.mxu0
      %1451 = vdwg.mxu0
      %v1452 = vadd.f32 %v1357, %v1422
      %v1453 = vadd.f32 %v1358, %v1425
      %v1454 = vadd.f32 %v1359, %v1430
      %v1455 = vadd.f32 %v1360, %v1433
      %v1456 = vadd.f32 %v1361, %v1438
      %v1457 = vadd.f32 %v1362, %v1441
      %v1458 = vadd.f32 %v1363, %v1446
      %v1459 = vadd.f32 %v1364, %v1449
      %s1460 = scalar_lea.vmem %s1, 128
      %v1461 = vld [vmem:[%s1460] sm:$0xf]
      %v1462 = vld [vmem:[%s1460 + $0x4] sm:$0xf]
      %v1463 = vld [vmem:[%s1460 + $0x8] sm:$0xf]
      %v1464 = vld [vmem:[%s1460 + $0xc] sm:$0xf]
      %v1465 = vunpack.c.l.b16 %v612
      %v1466 = vpack.c.b16 %v1465, %v1167
      %v1471 = vunpack.c.l.b16 %v1461
      %v1472 = vunpack.c.l.b16 %v1462
      %v1473 = vunpack.c.l.b16 %v1463
      %v1474 = vunpack.c.l.b16 %v1464
      %v1475 = vpack.c.b16 %v1472, %v1471
      %v1476 = vpack.c.b16 %v1474, %v1473
      %v1480 = vsel %vm646, %v1466, 0
      %1482 = vmatprep.subr.bf16.mxu0 0
      %1483 = vmatpush1.bf16.msra.mxu0 0
      %1484 = vmatprep.subr.bf16.mxu0 0
      %1485 = vmatpush1.bf16.msra.mxu0 0
      %1486 = vmatprep.subr.bf16.mxu0 0
      %1487 = vmatpush1.bf16.msra.mxu0 0
      %1488 = vmatprep.subr.bf16.mxu0 0
      %1489 = vmatpush1.bf16.msra.mxu0 0
      %1490 = vmatprep.subr.bf16.mxu0 0
      %1491 = vmatpush1.bf16.msra.mxu0 0
      %1492 = vmatprep.subr.bf16.mxu0 0
      %1493 = vmatpush1.bf16.msra.mxu0 0
      %1494 = vmatprep.subr.bf16.mxu0 0
      %1495 = vmatpush1.bf16.msra.mxu0 %v1476
      %1496 = vmatprep.subr.bf16.mxu0 0
      %1497 = vmatpush1.bf16.msra.mxu0 %v1475
      %1498 = vmatprep.subr.bf16.mxu0 0
      %1499 = vmatpush2.bf16.msra.mxu0 0
      %1500 = vmatprep.subr.bf16.mxu0 0
      %1501 = vmatpush2.bf16.msra.mxu0 0
      %1502 = vmatprep.subr.bf16.mxu0 0
      %1503 = vmatpush2.bf16.msra.mxu0 0
      %1504 = vmatprep.subr.bf16.mxu0 0
      %1505 = vmatpush2.bf16.msra.mxu0 0
      %1506 = vmatprep.subr.bf16.mxu0 0
      %1507 = vmatpush2.bf16.msra.mxu0 0
      %1508 = vmatprep.subr.bf16.mxu0 0
      %1509 = vmatpush2.bf16.msra.mxu0 0
      %1510 = vmatprep.subr.bf16.mxu0 0
      %1511 = vmatpush2.bf16.msra.mxu0 0
      %1512 = vmatprep.subr.bf16.mxu0 0
      %1513 = vmatpush2.bf16.msra.mxu0 0
      %1514 = vmatprep.mubr.bf16.mxu0 0
      %1515 = vmatmul.mubr.bf16.gmra.mxu0 %v866
      %v1516 = vpop.f32.mrf.mxu0
      %v1517 = vadd.f32 0.0, %v1516
      %v1518 = vpop.f32.mrf.mxu0
      %v1519 = vpop.f32.mrf.mxu0
      %v1520 = vadd.f32 0.0, %v1519
      %v1521 = vpop.f32.mrf.mxu0
      %1522 = vmatprep.mubr.bf16.mxu0 0
      %1523 = vmatmul.mubr.bf16.gmra.mxu0 %v869
      %v1524 = vpop.f32.mrf.mxu0
      %v1525 = vadd.f32 0.0, %v1524
      %v1526 = vpop.f32.mrf.mxu0
      %v1527 = vpop.f32.mrf.mxu0
      %v1528 = vadd.f32 0.0, %v1527
      %v1529 = vpop.f32.mrf.mxu0
      %1530 = vmatprep.mubr.bf16.mxu0 0
      %1531 = vmatmul.mubr.bf16.gmra.mxu0 %v872
      %v1532 = vpop.f32.mrf.mxu0
      %v1533 = vadd.f32 0.0, %v1532
      %v1534 = vpop.f32.mrf.mxu0
      %v1535 = vpop.f32.mrf.mxu0
      %v1536 = vadd.f32 0.0, %v1535
      %v1537 = vpop.f32.mrf.mxu0
      %1538 = vmatprep.mubr.bf16.mxu0 0
      %1539 = vmatmul.mubr.bf16.gmra.mxu0 %v1480
      %v1540 = vpop.f32.mrf.mxu0
      %v1541 = vadd.f32 0.0, %v1540
      %v1542 = vpop.f32.mrf.mxu0
      %v1543 = vpop.f32.mrf.mxu0
      %v1544 = vadd.f32 0.0, %v1543
      %v1545 = vpop.f32.mrf.mxu0
      %1546 = vdwg.mxu0
      %v1547 = vadd.f32 %v1452, %v1517
      %v1548 = vadd.f32 %v1453, %v1520
      %v1549 = vadd.f32 %v1454, %v1525
      %v1550 = vadd.f32 %v1455, %v1528
      %v1551 = vadd.f32 %v1456, %v1533
      %v1552 = vadd.f32 %v1457, %v1536
      %v1553 = vadd.f32 %v1458, %v1541
      %v1554 = vadd.f32 %v1459, %v1544
      %v1555 = vld [vmem:[%s4] sm:$0x1]
      %v1557 = vlaneseq
      %v1558 = vshrl.u32 %v1557, 7
      %v1559 = vsub.s32 0, %v1558
      %v1560 = vrot.slane %v1555, %v1559
      %v1562 = vmul.f32 %v1547, %v1560
      %v1563 = vmul.f32 %v1548, %v1560
      %v1564 = vmul.f32 %v1549, %v1560
      %v1565 = vmul.f32 %v1550, %v1560
      %v1566 = vmul.f32 %v1551, %v1560
      %v1567 = vmul.f32 %v1552, %v1560
      %v1568 = vmul.f32 %v1553, %v1560
      %v1569 = vmul.f32 %v1554, %v1560
      %v1570 = vld [vmem:[%s5] sm:$0x1]
      %v1572 = vlaneseq
      %v1573 = vshrl.u32 %v1572, 7
      %v1574 = vsub.s32 0, %v1573
      %v1575 = vrot.slane %v1570, %v1574
      %v1577 = vadd.f32 %v1562, %v1575
      %v1578 = vadd.f32 %v1563, %v1575
      %v1579 = vadd.f32 %v1564, %v1575
      %v1580 = vadd.f32 %v1565, %v1575
      %v1581 = vadd.f32 %v1566, %v1575
      %v1582 = vadd.f32 %v1567, %v1575
      %v1583 = vadd.f32 %v1568, %v1575
      %v1584 = vadd.f32 %v1569, %v1575
      %v1585 = vmax.f32 %v1577, 0.0
      %v1586 = vmax.f32 %v1578, 0.0
      %v1587 = vmax.f32 %v1579, 0.0
      %v1588 = vmax.f32 %v1580, 0.0
      %v1589 = vmax.f32 %v1581, 0.0
      %v1590 = vmax.f32 %v1582, 0.0
      %v1591 = vmax.f32 %v1583, 0.0
      %v1592 = vmax.f32 %v1584, 0.0
      %v1593 = vpack.c.bf16 %v1585, %v1585
      %v1594 = vpack.c.bf16 %v1586, %v1586
      %v1595 = vpack.c.bf16 %v1587, %v1587
      %v1596 = vpack.c.bf16 %v1588, %v1588
      %v1597 = vpack.c.bf16 %v1589, %v1589
      %v1598 = vpack.c.bf16 %v1590, %v1590
      %v1599 = vpack.c.bf16 %v1591, %v1591
      %v1600 = vpack.c.bf16 %v1592, %v1592
      %v1609 = vunpack.c.l.b16 %v1593
      %v1610 = vunpack.c.l.b16 %v1594
      %v1611 = vunpack.c.l.b16 %v1595
      %v1612 = vunpack.c.l.b16 %v1596
      %v1613 = vunpack.c.l.b16 %v1597
      %v1614 = vunpack.c.l.b16 %v1598
      %v1615 = vunpack.c.l.b16 %v1599
      %v1616 = vunpack.c.l.b16 %v1600
      %v1617 = vpack.c.b16 %v1609, %v1609
      %v1618 = vpack.c.b16 %v1610, %v1610
      %v1619 = vpack.c.b16 %v1611, %v1611
      %v1620 = vpack.c.b16 %v1612, %v1612
      %v1621 = vpack.c.b16 %v1613, %v1613
      %v1622 = vpack.c.b16 %v1614, %v1614
      %v1623 = vpack.c.b16 %v1615, %v1615
      %v1624 = vpack.c.b16 %v1616, %v1616
      %v1626 = vshrl.u32 %v1617, 16
      %v1628 = vrot.slane %v1626, 7
      %v1629 = vshll.u32 %v1617, 16
      %v1631 = vor.u32 %v1628, %v1629
      %v1632 = vrot.slane %v1628, 4
      %v1634 = vshrl.u32 %v1618, 16
      %v1636 = vrot.slane %v1634, 7
      %v1637 = vshll.u32 %v1618, 16
      %v1639 = vor.u32 %v1636, %v1637
      %v1640 = vrot.slane %v1636, 4
      %v1642 = vshrl.u32 %v1619, 16
      %v1644 = vrot.slane %v1642, 7
      %v1645 = vshll.u32 %v1619, 16
      %v1647 = vor.u32 %v1644, %v1645
      %v1648 = vrot.slane %v1644, 4
      %v1650 = vshrl.u32 %v1620, 16
      %v1652 = vrot.slane %v1650, 7
      %v1653 = vshll.u32 %v1620, 16
      %v1655 = vor.u32 %v1652, %v1653
      %v1656 = vrot.slane %v1652, 4
      %v1658 = vshrl.u32 %v1621, 16
      %v1660 = vrot.slane %v1658, 7
      %v1661 = vshll.u32 %v1621, 16
      %v1663 = vor.u32 %v1660, %v1661
      %v1664 = vrot.slane %v1660, 4
      %v1666 = vshrl.u32 %v1622, 16
      %v1668 = vrot.slane %v1666, 7
      %v1669 = vshll.u32 %v1622, 16
      %v1671 = vor.u32 %v1668, %v1669
      %v1672 = vrot.slane %v1668, 4
      %v1674 = vshrl.u32 %v1623, 16
      %v1676 = vrot.slane %v1674, 7
      %v1677 = vshll.u32 %v1623, 16
      %v1679 = vor.u32 %v1676, %v1677
      %v1680 = vrot.slane %v1676, 4
      %v1682 = vshrl.u32 %v1624, 16
      %v1684 = vrot.slane %v1682, 7
      %v1685 = vshll.u32 %v1624, 16
      %v1687 = vor.u32 %v1684, %v1685
      %v1688 = vrot.slane %v1684, 4
      %s1705 = scalar_lea.vmem [#allocation2], 8
      %vm1706 = vcmask 1043456
      %vm1707 = vmand %vm1706, %vm345
      %v1708 = vld [vmem:[%s1705] sm:$0xf]
      %v1709 = vsel %vm1707, %v1631, %v1708
      %1710 = vst [vmem:[%s1705] sm:$0xf] %v1709
      %v1711 = vld [vmem:[%s1705 + $0x4] sm:$0x1]
      %v1712 = vsel %vm314, %v1632, %v1711
      %1713 = vst [vmem:[%s1705 + $0x4] sm:$0x1] %v1712
      %v1714 = vld [vmem:[%s1705 + $0x8] sm:$0xf]
      %v1715 = vsel %vm1707, %v1639, %v1714
      %1716 = vst [vmem:[%s1705 + $0x8] sm:$0xf] %v1715
      %v1717 = vld [vmem:[%s1705 + $0xc] sm:$0x1]
      %v1718 = vsel %vm314, %v1640, %v1717
      %1719 = vst [vmem:[%s1705 + $0xc] sm:$0x1] %v1718
      %v1720 = vld [vmem:[%s1705 + $0x10] sm:$0xf]
      %v1721 = vsel %vm1707, %v1647, %v1720
      %1722 = vst [vmem:[%s1705 + $0x10] sm:$0xf] %v1721
      %v1723 = vld [vmem:[%s1705 + $0x14] sm:$0x1]
      %v1724 = vsel %vm314, %v1648, %v1723
      %1725 = vst [vmem:[%s1705 + $0x14] sm:$0x1] %v1724
      %v1726 = vld [vmem:[%s1705 + $0x18] sm:$0xf]
      %v1727 = vsel %vm1707, %v1655, %v1726
      %1728 = vst [vmem:[%s1705 + $0x18] sm:$0xf] %v1727
      %v1729 = vld [vmem:[%s1705 + $0x1c] sm:$0x1]
      %v1730 = vsel %vm314, %v1656, %v1729
      %1731 = vst [vmem:[%s1705 + $0x1c] sm:$0x1] %v1730
      %v1732 = vld [vmem:[%s1705 + $0x20] sm:$0xf]
      %v1733 = vsel %vm1707, %v1663, %v1732
      %1734 = vst [vmem:[%s1705 + $0x20] sm:$0xf] %v1733
      %v1735 = vld [vmem:[%s1705 + $0x24] sm:$0x1]
      %v1736 = vsel %vm314, %v1664, %v1735
      %1737 = vst [vmem:[%s1705 + $0x24] sm:$0x1] %v1736
      %v1738 = vld [vmem:[%s1705 + $0x28] sm:$0xf]
      %v1739 = vsel %vm1707, %v1671, %v1738
      %1740 = vst [vmem:[%s1705 + $0x28] sm:$0xf] %v1739
      %v1741 = vld [vmem:[%s1705 + $0x2c] sm:$0x1]
      %v1742 = vsel %vm314, %v1672, %v1741
      %1743 = vst [vmem:[%s1705 + $0x2c] sm:$0x1] %v1742
      %v1744 = vld [vmem:[%s1705 + $0x30] sm:$0xf]
      %v1745 = vsel %vm1707, %v1679, %v1744
      %1746 = vst [vmem:[%s1705 + $0x30] sm:$0xf] %v1745
      %v1747 = vld [vmem:[%s1705 + $0x34] sm:$0x1]
      %v1748 = vsel %vm314, %v1680, %v1747
      %1749 = vst [vmem:[%s1705 + $0x34] sm:$0x1] %v1748
      %v1750 = vld [vmem:[%s1705 + $0x38] sm:$0xf]
      %v1751 = vsel %vm1707, %v1687, %v1750
      %1752 = vst [vmem:[%s1705 + $0x38] sm:$0xf] %v1751
      %v1753 = vld [vmem:[%s1705 + $0x3c] sm:$0x1]
      %v1754 = vsel %vm314, %v1688, %v1753
      %1755 = vst [vmem:[%s1705 + $0x3c] sm:$0x1] %v1754
      %v1756 = vld [vmem:[%s3] sm:$0xf]
      %v1757 = vld [vmem:[%s3 + $0x4] sm:$0xf]
      %v1758 = vld [vmem:[%s3 + $0x8] sm:$0xf]
      %v1759 = vld [vmem:[%s3 + $0xc] sm:$0xf]
      %v1760 = vld [vmem:[#allocation2] sm:$0xf]
      %v1761 = vld [vmem:[#allocation2 + $0x8] sm:$0xf]
      %v1762 = vld [vmem:[#allocation2 + $0x10] sm:$0xf]
      %v1763 = vld [vmem:[#allocation2 + $0x18] sm:$0xf]
      %v1764 = vld [vmem:[#allocation2 + $0x20] sm:$0xf]
      %v1765 = vld [vmem:[#allocation2 + $0x28] sm:$0xf]
      %v1766 = vld [vmem:[#allocation2 + $0x30] sm:$0xf]
      %v1767 = vld [vmem:[#allocation2 + $0x38] sm:$0xf]
      %v1768 = vld [vmem:[#allocation2 + $0x40] sm:$0xf]
      %v1769 = vld [vmem:[#allocation2 + $0x48] sm:$0xf]
      %v1770 = vld [vmem:[#allocation2 + $0x4] sm:$0x1]
      %v1771 = vld [vmem:[#allocation2 + $0xc] sm:$0x1]
      %v1772 = vld [vmem:[#allocation2 + $0x14] sm:$0x1]
      %v1773 = vld [vmem:[#allocation2 + $0x1c] sm:$0x1]
      %v1774 = vld [vmem:[#allocation2 + $0x24] sm:$0x1]
      %v1775 = vld [vmem:[#allocation2 + $0x2c] sm:$0x1]
      %v1776 = vld [vmem:[#allocation2 + $0x34] sm:$0x1]
      %v1777 = vld [vmem:[#allocation2 + $0x3c] sm:$0x1]
      %v1778 = vld [vmem:[#allocation2 + $0x44] sm:$0x1]
      %v1779 = vld [vmem:[#allocation2 + $0x4c] sm:$0x1]
      %v1781 = vshrl.u32 %v1760, 16
      %v1783 = vrot.slane %v1781, 4
      %v1784 = vshll.u32 %v1760, 16
      %v1786 = vrot.slane %v1784, 5
      %v1787 = vor.u32 %v1783, %v1786
      %v1788 = vrot.slane %v1787, 4
      %v1790 = vshll.u32 %v1770, 16
      %v1792 = vrot.slane %v1790, 5
      %v1793 = vsel %vm399, %v1788, %v1792
      %v1795 = vshrl.u32 %v1761, 16
      %v1797 = vrot.slane %v1795, 4
      %v1798 = vshll.u32 %v1761, 16
      %v1800 = vrot.slane %v1798, 5
      %v1801 = vor.u32 %v1797, %v1800
      %v1802 = vrot.slane %v1801, 4
      %v1804 = vshll.u32 %v1771, 16
      %v1806 = vrot.slane %v1804, 5
      %v1807 = vsel %vm399, %v1802, %v1806
      %v1809 = vshrl.u32 %v1762, 16
      %v1811 = vrot.slane %v1809, 4
      %v1812 = vshll.u32 %v1762, 16
      %v1814 = vrot.slane %v1812, 5
      %v1815 = vor.u32 %v1811, %v1814
      %v1816 = vrot.slane %v1815, 4
      %v1818 = vshll.u32 %v1772, 16
      %v1820 = vrot.slane %v1818, 5
      %v1821 = vsel %vm399, %v1816, %v1820
      %v1823 = vshrl.u32 %v1763, 16
      %v1825 = vrot.slane %v1823, 4
      %v1826 = vshll.u32 %v1763, 16
      %v1828 = vrot.slane %v1826, 5
      %v1829 = vor.u32 %v1825, %v1828
      %v1830 = vrot.slane %v1829, 4
      %v1832 = vshll.u32 %v1773, 16
      %v1834 = vrot.slane %v1832, 5
      %v1835 = vsel %vm399, %v1830, %v1834
      %v1837 = vshrl.u32 %v1764, 16
      %v1839 = vrot.slane %v1837, 4
      %v1840 = vshll.u32 %v1764, 16
      %v1842 = vrot.slane %v1840, 5
      %v1843 = vor.u32 %v1839, %v1842
      %v1844 = vrot.slane %v1843, 4
      %v1846 = vshll.u32 %v1774, 16
      %v1848 = vrot.slane %v1846, 5
      %v1849 = vsel %vm399, %v1844, %v1848
      %v1851 = vshrl.u32 %v1765, 16
      %v1853 = vrot.slane %v1851, 4
      %v1854 = vshll.u32 %v1765, 16
      %v1856 = vrot.slane %v1854, 5
      %v1857 = vor.u32 %v1853, %v1856
      %v1858 = vrot.slane %v1857, 4
      %v1860 = vshll.u32 %v1775, 16
      %v1862 = vrot.slane %v1860, 5
      %v1863 = vsel %vm399, %v1858, %v1862
      %v1865 = vshrl.u32 %v1766, 16
      %v1867 = vrot.slane %v1865, 4
      %v1868 = vshll.u32 %v1766, 16
      %v1870 = vrot.slane %v1868, 5
      %v1871 = vor.u32 %v1867, %v1870
      %v1872 = vrot.slane %v1871, 4
      %v1874 = vshll.u32 %v1776, 16
      %v1876 = vrot.slane %v1874, 5
      %v1877 = vsel %vm399, %v1872, %v1876
      %v1879 = vshrl.u32 %v1767, 16
      %v1881 = vrot.slane %v1879, 4
      %v1882 = vshll.u32 %v1767, 16
      %v1884 = vrot.slane %v1882, 5
      %v1885 = vor.u32 %v1881, %v1884
      %v1886 = vrot.slane %v1885, 4
      %v1888 = vshll.u32 %v1777, 16
      %v1890 = vrot.slane %v1888, 5
      %v1891 = vsel %vm399, %v1886, %v1890
      %v1893 = vshrl.u32 %v1768, 16
      %v1895 = vrot.slane %v1893, 4
      %v1896 = vshll.u32 %v1768, 16
      %v1898 = vrot.slane %v1896, 5
      %v1899 = vor.u32 %v1895, %v1898
      %v1900 = vrot.slane %v1899, 4
      %v1902 = vshll.u32 %v1778, 16
      %v1904 = vrot.slane %v1902, 5
      %v1905 = vsel %vm399, %v1900, %v1904
      %v1907 = vshrl.u32 %v1769, 16
      %v1909 = vrot.slane %v1907, 4
      %v1910 = vshll.u32 %v1769, 16
      %v1912 = vrot.slane %v1910, 5
      %v1913 = vor.u32 %v1909, %v1912
      %v1914 = vrot.slane %v1913, 4
      %v1916 = vshll.u32 %v1779, 16
      %v1918 = vrot.slane %v1916, 5
      %v1919 = vsel %vm399, %v1914, %v1918
      %v1920 = vld [vmem:[#allocation2] sm:$0xe]
      %v1921 = vld [vmem:[#allocation2 + $0x8] sm:$0xe]
      %v1922 = vld [vmem:[#allocation2 + $0x10] sm:$0xe]
      %v1923 = vld [vmem:[#allocation2 + $0x18] sm:$0xe]
      %v1924 = vld [vmem:[#allocation2 + $0x20] sm:$0xe]
      %v1925 = vld [vmem:[#allocation2 + $0x28] sm:$0xe]
      %v1926 = vld [vmem:[#allocation2 + $0x30] sm:$0xe]
      %v1927 = vld [vmem:[#allocation2 + $0x38] sm:$0xe]
      %v1928 = vld [vmem:[#allocation2 + $0x40] sm:$0xe]
      %v1929 = vld [vmem:[#allocation2 + $0x48] sm:$0xe]
      %v1950 = vrot.slane %v1920, 5
      %v1951 = vrot.slane %v1950, 4
      %v1952 = vrot.slane %v1770, 5
      %v1953 = vsel %vm572, %v1951, %v1952
      %v1954 = vrot.slane %v1921, 5
      %v1955 = vrot.slane %v1954, 4
      %v1956 = vrot.slane %v1771, 5
      %v1957 = vsel %vm572, %v1955, %v1956
      %v1958 = vrot.slane %v1922, 5
      %v1959 = vrot.slane %v1958, 4
      %v1960 = vrot.slane %v1772, 5
      %v1961 = vsel %vm572, %v1959, %v1960
      %v1962 = vrot.slane %v1923, 5
      %v1963 = vrot.slane %v1962, 4
      %v1964 = vrot.slane %v1773, 5
      %v1965 = vsel %vm572, %v1963, %v1964
      %v1966 = vrot.slane %v1924, 5
      %v1967 = vrot.slane %v1966, 4
      %v1968 = vrot.slane %v1774, 5
      %v1969 = vsel %vm572, %v1967, %v1968
      %v1970 = vrot.slane %v1925, 5
      %v1971 = vrot.slane %v1970, 4
      %v1972 = vrot.slane %v1775, 5
      %v1973 = vsel %vm572, %v1971, %v1972
      %v1974 = vrot.slane %v1926, 5
      %v1975 = vrot.slane %v1974, 4
      %v1976 = vrot.slane %v1776, 5
      %v1977 = vsel %vm572, %v1975, %v1976
      %v1978 = vrot.slane %v1927, 5
      %v1979 = vrot.slane %v1978, 4
      %v1980 = vrot.slane %v1777, 5
      %v1981 = vsel %vm572, %v1979, %v1980
      %v1982 = vrot.slane %v1928, 5
      %v1983 = vrot.slane %v1982, 4
      %v1984 = vrot.slane %v1778, 5
      %v1985 = vsel %vm572, %v1983, %v1984
      %v1986 = vrot.slane %v1929, 5
      %v1987 = vrot.slane %v1986, 4
      %v1988 = vrot.slane %v1779, 5
      %v1989 = vsel %vm572, %v1987, %v1988
      %v1990 = vld [vmem:[%s2] sm:$0xf]
      %v1991 = vld [vmem:[%s2 + $0x4] sm:$0xf]
      %v1992 = vld [vmem:[%s2 + $0x8] sm:$0xf]
      %v1993 = vld [vmem:[%s2 + $0xc] sm:$0xf]
      %v1994 = vld [vmem:[%s2 + $0x10] sm:$0xf]
      %v1995 = vld [vmem:[%s2 + $0x14] sm:$0xf]
      %v1996 = vld [vmem:[%s2 + $0x18] sm:$0xf]
      %v1997 = vld [vmem:[%s2 + $0x1c] sm:$0xf]
      %v1998 = vld [vmem:[%s2 + $0x20] sm:$0xf]
      %v1999 = vld [vmem:[%s2 + $0x24] sm:$0xf]
      %v2000 = vld [vmem:[%s2 + $0x28] sm:$0xf]
      %v2001 = vld [vmem:[%s2 + $0x2c] sm:$0xf]
      %v2002 = vld [vmem:[%s2 + $0x30] sm:$0xf]
      %v2003 = vld [vmem:[%s2 + $0x34] sm:$0xf]
      %v2004 = vld [vmem:[%s2 + $0x38] sm:$0xf]
      %v2005 = vld [vmem:[%s2 + $0x3c] sm:$0xf]
      %v2014 = vunpack.c.l.b16 %v1760
      %v2015 = vunpack.c.l.b16 %v1761
      %v2016 = vunpack.c.l.b16 %v1762
      %v2017 = vunpack.c.l.b16 %v1763
      %v2018 = vunpack.c.l.b16 %v1764
      %v2019 = vunpack.c.l.b16 %v1765
      %v2020 = vunpack.c.l.b16 %v1766
      %v2021 = vunpack.c.l.b16 %v1767
      %v2022 = vpack.c.b16 %v2015, %v2014
      %v2023 = vpack.c.b16 %v2017, %v2016
      %v2024 = vpack.c.b16 %v2019, %v2018
      %v2025 = vpack.c.b16 %v2021, %v2020
      %v2046 = vunpack.c.l.b16 %v1990
      %v2047 = vunpack.c.l.b16 %v1991
      %v2048 = vunpack.c.l.b16 %v1992
      %v2049 = vunpack.c.l.b16 %v1993
      %v2050 = vunpack.c.l.b16 %v1994
      %v2051 = vunpack.c.l.b16 %v1995
      %v2052 = vunpack.c.l.b16 %v1996
      %v2053 = vunpack.c.l.b16 %v1997
      %v2054 = vunpack.c.l.b16 %v1998
      %v2055 = vunpack.c.l.b16 %v1999
      %v2056 = vunpack.c.l.b16 %v2000
      %v2057 = vunpack.c.l.b16 %v2001
      %v2058 = vunpack.c.l.b16 %v2002
      %v2059 = vunpack.c.l.b16 %v2003
      %v2060 = vunpack.c.l.b16 %v2004
      %v2061 = vunpack.c.l.b16 %v2005
      %v2062 = vpack.c.b16 %v2047, %v2046
      %v2063 = vpack.c.b16 %v2049, %v2048
      %v2064 = vpack.c.b16 %v2051, %v2050
      %v2065 = vpack.c.b16 %v2053, %v2052
      %v2066 = vpack.c.b16 %v2055, %v2054
      %v2067 = vpack.c.b16 %v2057, %v2056
      %v2068 = vpack.c.b16 %v2059, %v2058
      %v2069 = vpack.c.b16 %v2061, %v2060
      %2078 = vmatprep.subr.bf16.mxu0 0
      %2079 = vmatpush1.bf16.msra.mxu0 %v2069
      %2080 = vmatprep.subr.bf16.mxu0 0
      %2081 = vmatpush1.bf16.msra.mxu0 %v2068
      %2082 = vmatprep.subr.bf16.mxu0 0
      %2083 = vmatpush1.bf16.msra.mxu0 %v2067
      %2084 = vmatprep.subr.bf16.mxu0 0
      %2085 = vmatpush1.bf16.msra.mxu0 %v2066
      %2086 = vmatprep.subr.bf16.mxu0 0
      %2087 = vmatpush1.bf16.msra.mxu0 %v2065
      %2088 = vmatprep.subr.bf16.mxu0 0
      %2089 = vmatpush1.bf16.msra.mxu0 %v2064
      %2090 = vmatprep.subr.bf16.mxu0 0
      %2091 = vmatpush1.bf16.msra.mxu0 %v2063
      %2092 = vmatprep.subr.bf16.mxu0 0
      %2093 = vmatpush1.bf16.msra.mxu0 %v2062
      %2094 = vmatprep.subr.bf16.mxu0 0
      %2095 = vmatpush2.bf16.msra.mxu0 0
      %2096 = vmatprep.subr.bf16.mxu0 0
      %2097 = vmatpush2.bf16.msra.mxu0 0
      %2098 = vmatprep.subr.bf16.mxu0 0
      %2099 = vmatpush2.bf16.msra.mxu0 0
      %2100 = vmatprep.subr.bf16.mxu0 0
      %2101 = vmatpush2.bf16.msra.mxu0 0
      %2102 = vmatprep.subr.bf16.mxu0 0
      %2103 = vmatpush2.bf16.msra.mxu0 0
      %2104 = vmatprep.subr.bf16.mxu0 0
      %2105 = vmatpush2.bf16.msra.mxu0 0
      %2106 = vmatprep.subr.bf16.mxu0 0
      %2107 = vmatpush2.bf16.msra.mxu0 0
      %2108 = vmatprep.subr.bf16.mxu0 0
      %2109 = vmatpush2.bf16.msra.mxu0 0
      %2110 = vmatprep.mubr.bf16.mxu0 0
      %2111 = vmatmul.mubr.bf16.gmra.mxu0 %v2022
      %v2112 = vpop.f32.mrf.mxu0
      %v2113 = vadd.f32 0.0, %v2112
      %v2114 = vpop.f32.mrf.mxu0
      %v2115 = vpop.f32.mrf.mxu0
      %v2116 = vadd.f32 0.0, %v2115
      %v2117 = vpop.f32.mrf.mxu0
      %2118 = vmatprep.mubr.bf16.mxu0 0
      %2119 = vmatmul.mubr.bf16.gmra.mxu0 %v2023
      %v2120 = vpop.f32.mrf.mxu0
      %v2121 = vadd.f32 0.0, %v2120
      %v2122 = vpop.f32.mrf.mxu0
      %v2123 = vpop.f32.mrf.mxu0
      %v2124 = vadd.f32 0.0, %v2123
      %v2125 = vpop.f32.mrf.mxu0
      %2126 = vmatprep.mubr.bf16.mxu0 0
      %2127 = vmatmul.mubr.bf16.gmra.mxu0 %v2024
      %v2128 = vpop.f32.mrf.mxu0
      %v2129 = vadd.f32 0.0, %v2128
      %v2130 = vpop.f32.mrf.mxu0
      %v2131 = vpop.f32.mrf.mxu0
      %v2132 = vadd.f32 0.0, %v2131
      %v2133 = vpop.f32.mrf.mxu0
      %2134 = vmatprep.mubr.bf16.mxu0 0
      %2135 = vmatmul.mubr.bf16.gmra.mxu0 %v2025
      %v2136 = vpop.f32.mrf.mxu0
      %v2137 = vadd.f32 0.0, %v2136
      %v2138 = vpop.f32.mrf.mxu0
      %v2139 = vpop.f32.mrf.mxu0
      %v2140 = vadd.f32 0.0, %v2139
      %v2141 = vpop.f32.mrf.mxu0
      %2142 = vdwg.mxu0
      %v2147 = vunpack.c.l.b16 %v1756
      %v2148 = vunpack.c.l.b16 %v1757
      %v2149 = vunpack.c.l.b16 %v1758
      %v2150 = vunpack.c.l.b16 %v1759
      %v2151 = vpack.c.b16 %v2148, %v2147
      %v2152 = vpack.c.b16 %v2150, %v2149
      %2155 = vmatprep.subr.bf16.mxu0 0
      %2156 = vmatpush1.bf16.msra.mxu0 0
      %2157 = vmatprep.subr.bf16.mxu0 0
      %2158 = vmatpush1.bf16.msra.mxu0 0
      %2159 = vmatprep.subr.bf16.mxu0 0
      %2160 = vmatpush1.bf16.msra.mxu0 0
      %2161 = vmatprep.subr.bf16.mxu0 0
      %2162 = vmatpush1.bf16.msra.mxu0 0
      %2163 = vmatprep.subr.bf16.mxu0 0
      %2164 = vmatpush1.bf16.msra.mxu0 0
      %2165 = vmatprep.subr.bf16.mxu0 0
      %2166 = vmatpush1.bf16.msra.mxu0 0
      %2167 = vmatprep.subr.bf16.mxu0 0
      %2168 = vmatpush1.bf16.msra.mxu0 %v2152
      %2169 = vmatprep.subr.bf16.mxu0 0
      %2170 = vmatpush1.bf16.msra.mxu0 %v2151
      %2171 = vmatprep.subr.bf16.mxu0 0
      %2172 = vmatpush2.bf16.msra.mxu0 0
      %2173 = vmatprep.subr.bf16.mxu0 0
      %2174 = vmatpush2.bf16.msra.mxu0 0
      %2175 = vmatprep.subr.bf16.mxu0 0
      %2176 = vmatpush2.bf16.msra.mxu0 0
      %2177 = vmatprep.subr.bf16.mxu0 0
      %2178 = vmatpush2.bf16.msra.mxu0 0
      %2179 = vmatprep.subr.bf16.mxu0 0
      %2180 = vmatpush2.bf16.msra.mxu0 0
      %2181 = vmatprep.subr.bf16.mxu0 0
      %2182 = vmatpush2.bf16.msra.mxu0 0
      %2183 = vmatprep.subr.bf16.mxu0 0
      %2184 = vmatpush2.bf16.msra.mxu0 0
      %2185 = vmatprep.subr.bf16.mxu0 0
      %2186 = vmatpush2.bf16.msra.mxu0 0
      %2187 = vmatprep.mubr.bf16.mxu0 0
      %2188 = vmatmul.mubr.bf16.gmra.mxu0 %v1078
      %v2189 = vpop.f32.mrf.mxu0
      %v2190 = vadd.f32 %v2113, %v2189
      %v2191 = vpop.f32.mrf.mxu0
      %v2192 = vpop.f32.mrf.mxu0
      %v2193 = vadd.f32 %v2116, %v2192
      %v2194 = vpop.f32.mrf.mxu0
      %2195 = vmatprep.mubr.bf16.mxu0 0
      %2196 = vmatmul.mubr.bf16.gmra.mxu0 %v1081
      %v2197 = vpop.f32.mrf.mxu0
      %v2198 = vadd.f32 %v2121, %v2197
      %v2199 = vpop.f32.mrf.mxu0
      %v2200 = vpop.f32.mrf.mxu0
      %v2201 = vadd.f32 %v2124, %v2200
      %v2202 = vpop.f32.mrf.mxu0
      %2203 = vmatprep.mubr.bf16.mxu0 0
      %2204 = vmatmul.mubr.bf16.gmra.mxu0 %v1084
      %v2205 = vpop.f32.mrf.mxu0
      %v2206 = vadd.f32 %v2129, %v2205
      %v2207 = vpop.f32.mrf.mxu0
      %v2208 = vpop.f32.mrf.mxu0
      %v2209 = vadd.f32 %v2132, %v2208
      %v2210 = vpop.f32.mrf.mxu0
      %2211 = vmatprep.mubr.bf16.mxu0 0
      %2212 = vmatmul.mubr.bf16.gmra.mxu0 %v1087
      %v2213 = vpop.f32.mrf.mxu0
      %v2214 = vadd.f32 %v2137, %v2213
      %v2215 = vpop.f32.mrf.mxu0
      %v2216 = vpop.f32.mrf.mxu0
      %v2217 = vadd.f32 %v2140, %v2216
      %v2218 = vpop.f32.mrf.mxu0
      %2219 = vdwg.mxu0
      %s2220 = scalar_lea.vmem %s2, 64
      %v2221 = vld [vmem:[%s2220] sm:$0xf]
      %v2222 = vld [vmem:[%s2220 + $0x4] sm:$0xf]
      %v2223 = vld [vmem:[%s2220 + $0x8] sm:$0xf]
      %v2224 = vld [vmem:[%s2220 + $0xc] sm:$0xf]
      %v2225 = vld [vmem:[%s2220 + $0x10] sm:$0xf]
      %v2226 = vld [vmem:[%s2220 + $0x14] sm:$0xf]
      %v2227 = vld [vmem:[%s2220 + $0x18] sm:$0xf]
      %v2228 = vld [vmem:[%s2220 + $0x1c] sm:$0xf]
      %v2229 = vld [vmem:[%s2220 + $0x20] sm:$0xf]
      %v2230 = vld [vmem:[%s2220 + $0x24] sm:$0xf]
      %v2231 = vld [vmem:[%s2220 + $0x28] sm:$0xf]
      %v2232 = vld [vmem:[%s2220 + $0x2c] sm:$0xf]
      %v2233 = vld [vmem:[%s2220 + $0x30] sm:$0xf]
      %v2234 = vld [vmem:[%s2220 + $0x34] sm:$0xf]
      %v2235 = vld [vmem:[%s2220 + $0x38] sm:$0xf]
      %v2236 = vld [vmem:[%s2220 + $0x3c] sm:$0xf]
      %v2237 = vunpack.c.l.b16 %v1793
      %v2238 = vunpack.c.l.b16 %v1807
      %v2239 = vunpack.c.l.b16 %v1821
      %v2240 = vunpack.c.l.b16 %v1835
      %v2241 = vunpack.c.l.b16 %v1849
      %v2242 = vunpack.c.l.b16 %v1863
      %v2243 = vunpack.c.l.b16 %v1877
      %v2244 = vunpack.c.l.b16 %v1891
      %v2245 = vpack.c.b16 %v2238, %v2237
      %v2246 = vpack.c.b16 %v2240, %v2239
      %v2247 = vpack.c.b16 %v2242, %v2241
      %v2248 = vpack.c.b16 %v2244, %v2243
      %v2269 = vunpack.c.l.b16 %v2221
      %v2270 = vunpack.c.l.b16 %v2222
      %v2271 = vunpack.c.l.b16 %v2223
      %v2272 = vunpack.c.l.b16 %v2224
      %v2273 = vunpack.c.l.b16 %v2225
      %v2274 = vunpack.c.l.b16 %v2226
      %v2275 = vunpack.c.l.b16 %v2227
      %v2276 = vunpack.c.l.b16 %v2228
      %v2277 = vunpack.c.l.b16 %v2229
      %v2278 = vunpack.c.l.b16 %v2230
      %v2279 = vunpack.c.l.b16 %v2231
      %v2280 = vunpack.c.l.b16 %v2232
      %v2281 = vunpack.c.l.b16 %v2233
      %v2282 = vunpack.c.l.b16 %v2234
      %v2283 = vunpack.c.l.b16 %v2235
      %v2284 = vunpack.c.l.b16 %v2236
      %v2285 = vpack.c.b16 %v2270, %v2269
      %v2286 = vpack.c.b16 %v2272, %v2271
      %v2287 = vpack.c.b16 %v2274, %v2273
      %v2288 = vpack.c.b16 %v2276, %v2275
      %v2289 = vpack.c.b16 %v2278, %v2277
      %v2290 = vpack.c.b16 %v2280, %v2279
      %v2291 = vpack.c.b16 %v2282, %v2281
      %v2292 = vpack.c.b16 %v2284, %v2283
      %2301 = vmatprep.subr.bf16.mxu0 0
      %2302 = vmatpush1.bf16.msra.mxu0 %v2292
      %2303 = vmatprep.subr.bf16.mxu0 0
      %2304 = vmatpush1.bf16.msra.mxu0 %v2291
      %2305 = vmatprep.subr.bf16.mxu0 0
      %2306 = vmatpush1.bf16.msra.mxu0 %v2290
      %2307 = vmatprep.subr.bf16.mxu0 0
      %2308 = vmatpush1.bf16.msra.mxu0 %v2289
      %2309 = vmatprep.subr.bf16.mxu0 0
      %2310 = vmatpush1.bf16.msra.mxu0 %v2288
      %2311 = vmatprep.subr.bf16.mxu0 0
      %2312 = vmatpush1.bf16.msra.mxu0 %v2287
      %2313 = vmatprep.subr.bf16.mxu0 0
      %2314 = vmatpush1.bf16.msra.mxu0 %v2286
      %2315 = vmatprep.subr.bf16.mxu0 0
      %2316 = vmatpush1.bf16.msra.mxu0 %v2285
      %2317 = vmatprep.subr.bf16.mxu0 0
      %2318 = vmatpush2.bf16.msra.mxu0 0
      %2319 = vmatprep.subr.bf16.mxu0 0
      %2320 = vmatpush2.bf16.msra.mxu0 0
      %2321 = vmatprep.subr.bf16.mxu0 0
      %2322 = vmatpush2.bf16.msra.mxu0 0
      %2323 = vmatprep.subr.bf16.mxu0 0
      %2324 = vmatpush2.bf16.msra.mxu0 0
      %2325 = vmatprep.subr.bf16.mxu0 0
      %2326 = vmatpush2.bf16.msra.mxu0 0
      %2327 = vmatprep.subr.bf16.mxu0 0
      %2328 = vmatpush2.bf16.msra.mxu0 0
      %2329 = vmatprep.subr.bf16.mxu0 0
      %2330 = vmatpush2.bf16.msra.mxu0 0
      %2331 = vmatprep.subr.bf16.mxu0 0
      %2332 = vmatpush2.bf16.msra.mxu0 0
      %2333 = vmatprep.mubr.bf16.mxu0 0
      %2334 = vmatmul.mubr.bf16.gmra.mxu0 %v2245
      %v2335 = vpop.f32.mrf.mxu0
      %v2336 = vadd.f32 0.0, %v2335
      %v2337 = vpop.f32.mrf.mxu0
      %v2338 = vpop.f32.mrf.mxu0
      %v2339 = vadd.f32 0.0, %v2338
      %v2340 = vpop.f32.mrf.mxu0
      %2341 = vmatprep.mubr.bf16.mxu0 0
      %2342 = vmatmul.mubr.bf16.gmra.mxu0 %v2246
      %v2343 = vpop.f32.mrf.mxu0
      %v2344 = vadd.f32 0.0, %v2343
      %v2345 = vpop.f32.mrf.mxu0
      %v2346 = vpop.f32.mrf.mxu0
      %v2347 = vadd.f32 0.0, %v2346
      %v2348 = vpop.f32.mrf.mxu0
      %2349 = vmatprep.mubr.bf16.mxu0 0
      %2350 = vmatmul.mubr.bf16.gmra.mxu0 %v2247
      %v2351 = vpop.f32.mrf.mxu0
      %v2352 = vadd.f32 0.0, %v2351
      %v2353 = vpop.f32.mrf.mxu0
      %v2354 = vpop.f32.mrf.mxu0
      %v2355 = vadd.f32 0.0, %v2354
      %v2356 = vpop.f32.mrf.mxu0
      %2357 = vmatprep.mubr.bf16.mxu0 0
      %2358 = vmatmul.mubr.bf16.gmra.mxu0 %v2248
      %v2359 = vpop.f32.mrf.mxu0
      %v2360 = vadd.f32 0.0, %v2359
      %v2361 = vpop.f32.mrf.mxu0
      %v2362 = vpop.f32.mrf.mxu0
      %v2363 = vadd.f32 0.0, %v2362
      %v2364 = vpop.f32.mrf.mxu0
      %2365 = vdwg.mxu0
      %v2366 = vadd.f32 %v2190, %v2336
      %v2367 = vadd.f32 %v2193, %v2339
      %v2368 = vadd.f32 %v2198, %v2344
      %v2369 = vadd.f32 %v2201, %v2347
      %v2370 = vadd.f32 %v2206, %v2352
      %v2371 = vadd.f32 %v2209, %v2355
      %v2372 = vadd.f32 %v2214, %v2360
      %v2373 = vadd.f32 %v2217, %v2363
      %s2374 = scalar_lea.vmem %s2, 128
      %v2375 = vld [vmem:[%s2374] sm:$0xf]
      %v2376 = vld [vmem:[%s2374 + $0x4] sm:$0xf]
      %v2377 = vld [vmem:[%s2374 + $0x8] sm:$0xf]
      %v2378 = vld [vmem:[%s2374 + $0xc] sm:$0xf]
      %v2379 = vld [vmem:[%s2374 + $0x10] sm:$0xf]
      %v2380 = vld [vmem:[%s2374 + $0x14] sm:$0xf]
      %v2381 = vld [vmem:[%s2374 + $0x18] sm:$0xf]
      %v2382 = vld [vmem:[%s2374 + $0x1c] sm:$0xf]
      %v2383 = vld [vmem:[%s2374 + $0x20] sm:$0xf]
      %v2384 = vld [vmem:[%s2374 + $0x24] sm:$0xf]
      %v2385 = vld [vmem:[%s2374 + $0x28] sm:$0xf]
      %v2386 = vld [vmem:[%s2374 + $0x2c] sm:$0xf]
      %v2387 = vld [vmem:[%s2374 + $0x30] sm:$0xf]
      %v2388 = vld [vmem:[%s2374 + $0x34] sm:$0xf]
      %v2389 = vld [vmem:[%s2374 + $0x38] sm:$0xf]
      %v2390 = vld [vmem:[%s2374 + $0x3c] sm:$0xf]
      %v2391 = vunpack.c.l.b16 %v1953
      %v2392 = vunpack.c.l.b16 %v1957
      %v2393 = vunpack.c.l.b16 %v1961
      %v2394 = vunpack.c.l.b16 %v1965
      %v2395 = vunpack.c.l.b16 %v1969
      %v2396 = vunpack.c.l.b16 %v1973
      %v2397 = vunpack.c.l.b16 %v1977
      %v2398 = vunpack.c.l.b16 %v1981
      %v2399 = vpack.c.b16 %v2392, %v2391
      %v2400 = vpack.c.b16 %v2394, %v2393
      %v2401 = vpack.c.b16 %v2396, %v2395
      %v2402 = vpack.c.b16 %v2398, %v2397
      %v2423 = vunpack.c.l.b16 %v2375
      %v2424 = vunpack.c.l.b16 %v2376
      %v2425 = vunpack.c.l.b16 %v2377
      %v2426 = vunpack.c.l.b16 %v2378
      %v2427 = vunpack.c.l.b16 %v2379
      %v2428 = vunpack.c.l.b16 %v2380
      %v2429 = vunpack.c.l.b16 %v2381
      %v2430 = vunpack.c.l.b16 %v2382
      %v2431 = vunpack.c.l.b16 %v2383
      %v2432 = vunpack.c.l.b16 %v2384
      %v2433 = vunpack.c.l.b16 %v2385
      %v2434 = vunpack.c.l.b16 %v2386
      %v2435 = vunpack.c.l.b16 %v2387
      %v2436 = vunpack.c.l.b16 %v2388
      %v2437 = vunpack.c.l.b16 %v2389
      %v2438 = vunpack.c.l.b16 %v2390
      %v2439 = vpack.c.b16 %v2424, %v2423
      %v2440 = vpack.c.b16 %v2426, %v2425
      %v2441 = vpack.c.b16 %v2428, %v2427
      %v2442 = vpack.c.b16 %v2430, %v2429
      %v2443 = vpack.c.b16 %v2432, %v2431
      %v2444 = vpack.c.b16 %v2434, %v2433
      %v2445 = vpack.c.b16 %v2436, %v2435
      %v2446 = vpack.c.b16 %v2438, %v2437
      %2455 = vmatprep.subr.bf16.mxu0 0
      %2456 = vmatpush1.bf16.msra.mxu0 %v2446
      %2457 = vmatprep.subr.bf16.mxu0 0
      %2458 = vmatpush1.bf16.msra.mxu0 %v2445
      %2459 = vmatprep.subr.bf16.mxu0 0
      %2460 = vmatpush1.bf16.msra.mxu0 %v2444
      %2461 = vmatprep.subr.bf16.mxu0 0
      %2462 = vmatpush1.bf16.msra.mxu0 %v2443
      %2463 = vmatprep.subr.bf16.mxu0 0
      %2464 = vmatpush1.bf16.msra.mxu0 %v2442
      %2465 = vmatprep.subr.bf16.mxu0 0
      %2466 = vmatpush1.bf16.msra.mxu0 %v2441
      %2467 = vmatprep.subr.bf16.mxu0 0
      %2468 = vmatpush1.bf16.msra.mxu0 %v2440
      %2469 = vmatprep.subr.bf16.mxu0 0
      %2470 = vmatpush1.bf16.msra.mxu0 %v2439
      %2471 = vmatprep.subr.bf16.mxu0 0
      %2472 = vmatpush2.bf16.msra.mxu0 0
      %2473 = vmatprep.subr.bf16.mxu0 0
      %2474 = vmatpush2.bf16.msra.mxu0 0
      %2475 = vmatprep.subr.bf16.mxu0 0
      %2476 = vmatpush2.bf16.msra.mxu0 0
      %2477 = vmatprep.subr.bf16.mxu0 0
      %2478 = vmatpush2.bf16.msra.mxu0 0
      %2479 = vmatprep.subr.bf16.mxu0 0
      %2480 = vmatpush2.bf16.msra.mxu0 0
      %2481 = vmatprep.subr.bf16.mxu0 0
      %2482 = vmatpush2.bf16.msra.mxu0 0
      %2483 = vmatprep.subr.bf16.mxu0 0
      %2484 = vmatpush2.bf16.msra.mxu0 0
      %2485 = vmatprep.subr.bf16.mxu0 0
      %2486 = vmatpush2.bf16.msra.mxu0 0
      %2487 = vmatprep.mubr.bf16.mxu0 0
      %2488 = vmatmul.mubr.bf16.gmra.mxu0 %v2399
      %v2489 = vpop.f32.mrf.mxu0
      %v2490 = vadd.f32 0.0, %v2489
      %v2491 = vpop.f32.mrf.mxu0
      %v2492 = vpop.f32.mrf.mxu0
      %v2493 = vadd.f32 0.0, %v2492
      %v2494 = vpop.f32.mrf.mxu0
      %2495 = vmatprep.mubr.bf16.mxu0 0
      %2496 = vmatmul.mubr.bf16.gmra.mxu0 %v2400
      %v2497 = vpop.f32.mrf.mxu0
      %v2498 = vadd.f32 0.0, %v2497
      %v2499 = vpop.f32.mrf.mxu0
      %v2500 = vpop.f32.mrf.mxu0
      %v2501 = vadd.f32 0.0, %v2500
      %v2502 = vpop.f32.mrf.mxu0
      %2503 = vmatprep.mubr.bf16.mxu0 0
      %2504 = vmatmul.mubr.bf16.gmra.mxu0 %v2401
      %v2505 = vpop.f32.mrf.mxu0
      %v2506 = vadd.f32 0.0, %v2505
      %v2507 = vpop.f32.mrf.mxu0
      %v2508 = vpop.f32.mrf.mxu0
      %v2509 = vadd.f32 0.0, %v2508
      %v2510 = vpop.f32.mrf.mxu0
      %2511 = vmatprep.mubr.bf16.mxu0 0
      %2512 = vmatmul.mubr.bf16.gmra.mxu0 %v2402
      %v2513 = vpop.f32.mrf.mxu0
      %v2514 = vadd.f32 0.0, %v2513
      %v2515 = vpop.f32.mrf.mxu0
      %v2516 = vpop.f32.mrf.mxu0
      %v2517 = vadd.f32 0.0, %v2516
      %v2518 = vpop.f32.mrf.mxu0
      %2519 = vdwg.mxu0
      %v2520 = vadd.f32 %v2366, %v2490
      %v2521 = vadd.f32 %v2367, %v2493
      %v2522 = vadd.f32 %v2368, %v2498
      %v2523 = vadd.f32 %v2369, %v2501
      %v2524 = vadd.f32 %v2370, %v2506
      %v2525 = vadd.f32 %v2371, %v2509
      %v2526 = vadd.f32 %v2372, %v2514
      %v2527 = vadd.f32 %v2373, %v2517
      %s2528 = scalar_lea.vmem %s2, 192
      %v2529 = vld [vmem:[%s2528] sm:$0xf]
      %v2530 = vld [vmem:[%s2528 + $0x4] sm:$0xf]
      %v2531 = vld [vmem:[%s2528 + $0x8] sm:$0xf]
      %v2532 = vld [vmem:[%s2528 + $0xc] sm:$0xf]
      %v2533 = vld [vmem:[%s2528 + $0x10] sm:$0xf]
      %v2534 = vld [vmem:[%s2528 + $0x14] sm:$0xf]
      %v2535 = vld [vmem:[%s2528 + $0x18] sm:$0xf]
      %v2536 = vld [vmem:[%s2528 + $0x1c] sm:$0xf]
      %v2537 = vld [vmem:[%s2528 + $0x20] sm:$0xf]
      %v2538 = vld [vmem:[%s2528 + $0x24] sm:$0xf]
      %v2539 = vld [vmem:[%s2528 + $0x28] sm:$0xf]
      %v2540 = vld [vmem:[%s2528 + $0x2c] sm:$0xf]
      %v2541 = vld [vmem:[%s2528 + $0x30] sm:$0xf]
      %v2542 = vld [vmem:[%s2528 + $0x34] sm:$0xf]
      %v2543 = vld [vmem:[%s2528 + $0x38] sm:$0xf]
      %v2544 = vld [vmem:[%s2528 + $0x3c] sm:$0xf]
      %v2546 = vunpack.c.l.b16 %v1768
      %v2547 = vpack.c.b16 %v2016, %v2015
      %v2548 = vpack.c.b16 %v2018, %v2017
      %v2549 = vpack.c.b16 %v2020, %v2019
      %v2550 = vpack.c.b16 %v2546, %v2021
      %v2571 = vunpack.c.l.b16 %v2529
      %v2572 = vunpack.c.l.b16 %v2530
      %v2573 = vunpack.c.l.b16 %v2531
      %v2574 = vunpack.c.l.b16 %v2532
      %v2575 = vunpack.c.l.b16 %v2533
      %v2576 = vunpack.c.l.b16 %v2534
      %v2577 = vunpack.c.l.b16 %v2535
      %v2578 = vunpack.c.l.b16 %v2536
      %v2579 = vunpack.c.l.b16 %v2537
      %v2580 = vunpack.c.l.b16 %v2538
      %v2581 = vunpack.c.l.b16 %v2539
      %v2582 = vunpack.c.l.b16 %v2540
      %v2583 = vunpack.c.l.b16 %v2541
      %v2584 = vunpack.c.l.b16 %v2542
      %v2585 = vunpack.c.l.b16 %v2543
      %v2586 = vunpack.c.l.b16 %v2544
      %v2587 = vpack.c.b16 %v2572, %v2571
      %v2588 = vpack.c.b16 %v2574, %v2573
      %v2589 = vpack.c.b16 %v2576, %v2575
      %v2590 = vpack.c.b16 %v2578, %v2577
      %v2591 = vpack.c.b16 %v2580, %v2579
      %v2592 = vpack.c.b16 %v2582, %v2581
      %v2593 = vpack.c.b16 %v2584, %v2583
      %v2594 = vpack.c.b16 %v2586, %v2585
      %2603 = vmatprep.subr.bf16.mxu0 0
      %2604 = vmatpush1.bf16.msra.mxu0 %v2594
      %2605 = vmatprep.subr.bf16.mxu0 0
      %2606 = vmatpush1.bf16.msra.mxu0 %v2593
      %2607 = vmatprep.subr.bf16.mxu0 0
      %2608 = vmatpush1.bf16.msra.mxu0 %v2592
      %2609 = vmatprep.subr.bf16.mxu0 0
      %2610 = vmatpush1.bf16.msra.mxu0 %v2591
      %2611 = vmatprep.subr.bf16.mxu0 0
      %2612 = vmatpush1.bf16.msra.mxu0 %v2590
      %2613 = vmatprep.subr.bf16.mxu0 0
      %2614 = vmatpush1.bf16.msra.mxu0 %v2589
      %2615 = vmatprep.subr.bf16.mxu0 0
      %2616 = vmatpush1.bf16.msra.mxu0 %v2588
      %2617 = vmatprep.subr.bf16.mxu0 0
      %2618 = vmatpush1.bf16.msra.mxu0 %v2587
      %2619 = vmatprep.subr.bf16.mxu0 0
      %2620 = vmatpush2.bf16.msra.mxu0 0
      %2621 = vmatprep.subr.bf16.mxu0 0
      %2622 = vmatpush2.bf16.msra.mxu0 0
      %2623 = vmatprep.subr.bf16.mxu0 0
      %2624 = vmatpush2.bf16.msra.mxu0 0
      %2625 = vmatprep.subr.bf16.mxu0 0
      %2626 = vmatpush2.bf16.msra.mxu0 0
      %2627 = vmatprep.subr.bf16.mxu0 0
      %2628 = vmatpush2.bf16.msra.mxu0 0
      %2629 = vmatprep.subr.bf16.mxu0 0
      %2630 = vmatpush2.bf16.msra.mxu0 0
      %2631 = vmatprep.subr.bf16.mxu0 0
      %2632 = vmatpush2.bf16.msra.mxu0 0
      %2633 = vmatprep.subr.bf16.mxu0 0
      %2634 = vmatpush2.bf16.msra.mxu0 0
      %2635 = vmatprep.mubr.bf16.mxu0 0
      %2636 = vmatmul.mubr.bf16.gmra.mxu0 %v2547
      %v2637 = vpop.f32.mrf.mxu0
      %v2638 = vadd.f32 0.0, %v2637
      %v2639 = vpop.f32.mrf.mxu0
      %v2640 = vpop.f32.mrf.mxu0
      %v2641 = vadd.f32 0.0, %v2640
      %v2642 = vpop.f32.mrf.mxu0
      %2643 = vmatprep.mubr.bf16.mxu0 0
      %2644 = vmatmul.mubr.bf16.gmra.mxu0 %v2548
      %v2645 = vpop.f32.mrf.mxu0
      %v2646 = vadd.f32 0.0, %v2645
      %v2647 = vpop.f32.mrf.mxu0
      %v2648 = vpop.f32.mrf.mxu0
      %v2649 = vadd.f32 0.0, %v2648
      %v2650 = vpop.f32.mrf.mxu0
      %2651 = vmatprep.mubr.bf16.mxu0 0
      %2652 = vmatmul.mubr.bf16.gmra.mxu0 %v2549
      %v2653 = vpop.f32.mrf.mxu0
      %v2654 = vadd.f32 0.0, %v2653
      %v2655 = vpop.f32.mrf.mxu0
      %v2656 = vpop.f32.mrf.mxu0
      %v2657 = vadd.f32 0.0, %v2656
      %v2658 = vpop.f32.mrf.mxu0
      %2659 = vmatprep.mubr.bf16.mxu0 0
      %2660 = vmatmul.mubr.bf16.gmra.mxu0 %v2550
      %v2661 = vpop.f32.mrf.mxu0
      %v2662 = vadd.f32 0.0, %v2661
      %v2663 = vpop.f32.mrf.mxu0
      %v2664 = vpop.f32.mrf.mxu0
      %v2665 = vadd.f32 0.0, %v2664
      %v2666 = vpop.f32.mrf.mxu0
      %2667 = vdwg.mxu0
      %v2668 = vadd.f32 %v2520, %v2638
      %v2669 = vadd.f32 %v2521, %v2641
      %v2670 = vadd.f32 %v2522, %v2646
      %v2671 = vadd.f32 %v2523, %v2649
      %v2672 = vadd.f32 %v2524, %v2654
      %v2673 = vadd.f32 %v2525, %v2657
      %v2674 = vadd.f32 %v2526, %v2662
      %v2675 = vadd.f32 %v2527, %v2665
      %s2676 = scalar_lea.vmem %s2, 256
      %v2677 = vld [vmem:[%s2676] sm:$0xf]
      %v2678 = vld [vmem:[%s2676 + $0x4] sm:$0xf]
      %v2679 = vld [vmem:[%s2676 + $0x8] sm:$0xf]
      %v2680 = vld [vmem:[%s2676 + $0xc] sm:$0xf]
      %v2681 = vld [vmem:[%s2676 + $0x10] sm:$0xf]
      %v2682 = vld [vmem:[%s2676 + $0x14] sm:$0xf]
      %v2683 = vld [vmem:[%s2676 + $0x18] sm:$0xf]
      %v2684 = vld [vmem:[%s2676 + $0x1c] sm:$0xf]
      %v2685 = vld [vmem:[%s2676 + $0x20] sm:$0xf]
      %v2686 = vld [vmem:[%s2676 + $0x24] sm:$0xf]
      %v2687 = vld [vmem:[%s2676 + $0x28] sm:$0xf]
      %v2688 = vld [vmem:[%s2676 + $0x2c] sm:$0xf]
      %v2689 = vld [vmem:[%s2676 + $0x30] sm:$0xf]
      %v2690 = vld [vmem:[%s2676 + $0x34] sm:$0xf]
      %v2691 = vld [vmem:[%s2676 + $0x38] sm:$0xf]
      %v2692 = vld [vmem:[%s2676 + $0x3c] sm:$0xf]
      %v2693 = vunpack.c.l.b16 %v1905
      %v2694 = vpack.c.b16 %v2239, %v2238
      %v2695 = vpack.c.b16 %v2241, %v2240
      %v2696 = vpack.c.b16 %v2243, %v2242
      %v2697 = vpack.c.b16 %v2693, %v2244
      %v2718 = vunpack.c.l.b16 %v2677
      %v2719 = vunpack.c.l.b16 %v2678
      %v2720 = vunpack.c.l.b16 %v2679
      %v2721 = vunpack.c.l.b16 %v2680
      %v2722 = vunpack.c.l.b16 %v2681
      %v2723 = vunpack.c.l.b16 %v2682
      %v2724 = vunpack.c.l.b16 %v2683
      %v2725 = vunpack.c.l.b16 %v2684
      %v2726 = vunpack.c.l.b16 %v2685
      %v2727 = vunpack.c.l.b16 %v2686
      %v2728 = vunpack.c.l.b16 %v2687
      %v2729 = vunpack.c.l.b16 %v2688
      %v2730 = vunpack.c.l.b16 %v2689
      %v2731 = vunpack.c.l.b16 %v2690
      %v2732 = vunpack.c.l.b16 %v2691
      %v2733 = vunpack.c.l.b16 %v2692
      %v2734 = vpack.c.b16 %v2719, %v2718
      %v2735 = vpack.c.b16 %v2721, %v2720
      %v2736 = vpack.c.b16 %v2723, %v2722
      %v2737 = vpack.c.b16 %v2725, %v2724
      %v2738 = vpack.c.b16 %v2727, %v2726
      %v2739 = vpack.c.b16 %v2729, %v2728
      %v2740 = vpack.c.b16 %v2731, %v2730
      %v2741 = vpack.c.b16 %v2733, %v2732
      %2750 = vmatprep.subr.bf16.mxu0 0
      %2751 = vmatpush1.bf16.msra.mxu0 %v2741
      %2752 = vmatprep.subr.bf16.mxu0 0
      %2753 = vmatpush1.bf16.msra.mxu0 %v2740
      %2754 = vmatprep.subr.bf16.mxu0 0
      %2755 = vmatpush1.bf16.msra.mxu0 %v2739
      %2756 = vmatprep.subr.bf16.mxu0 0
      %2757 = vmatpush1.bf16.msra.mxu0 %v2738
      %2758 = vmatprep.subr.bf16.mxu0 0
      %2759 = vmatpush1.bf16.msra.mxu0 %v2737
      %2760 = vmatprep.subr.bf16.mxu0 0
      %2761 = vmatpush1.bf16.msra.mxu0 %v2736
      %2762 = vmatprep.subr.bf16.mxu0 0
      %2763 = vmatpush1.bf16.msra.mxu0 %v2735
      %2764 = vmatprep.subr.bf16.mxu0 0
      %2765 = vmatpush1.bf16.msra.mxu0 %v2734
      %2766 = vmatprep.subr.bf16.mxu0 0
      %2767 = vmatpush2.bf16.msra.mxu0 0
      %2768 = vmatprep.subr.bf16.mxu0 0
      %2769 = vmatpush2.bf16.msra.mxu0 0
      %2770 = vmatprep.subr.bf16.mxu0 0
      %2771 = vmatpush2.bf16.msra.mxu0 0
      %2772 = vmatprep.subr.bf16.mxu0 0
      %2773 = vmatpush2.bf16.msra.mxu0 0
      %2774 = vmatprep.subr.bf16.mxu0 0
      %2775 = vmatpush2.bf16.msra.mxu0 0
      %2776 = vmatprep.subr.bf16.mxu0 0
      %2777 = vmatpush2.bf16.msra.mxu0 0
      %2778 = vmatprep.subr.bf16.mxu0 0
      %2779 = vmatpush2.bf16.msra.mxu0 0
      %2780 = vmatprep.subr.bf16.mxu0 0
      %2781 = vmatpush2.bf16.msra.mxu0 0
      %2782 = vmatprep.mubr.bf16.mxu0 0
      %2783 = vmatmul.mubr.bf16.gmra.mxu0 %v2694
      %v2784 = vpop.f32.mrf.mxu0
      %v2785 = vadd.f32 0.0, %v2784
      %v2786 = vpop.f32.mrf.mxu0
      %v2787 = vpop.f32.mrf.mxu0
      %v2788 = vadd.f32 0.0, %v2787
      %v2789 = vpop.f32.mrf.mxu0
      %2790 = vmatprep.mubr.bf16.mxu0 0
      %2791 = vmatmul.mubr.bf16.gmra.mxu0 %v2695
      %v2792 = vpop.f32.mrf.mxu0
      %v2793 = vadd.f32 0.0, %v2792
      %v2794 = vpop.f32.mrf.mxu0
      %v2795 = vpop.f32.mrf.mxu0
      %v2796 = vadd.f32 0.0, %v2795
      %v2797 = vpop.f32.mrf.mxu0
      %2798 = vmatprep.mubr.bf16.mxu0 0
      %2799 = vmatmul.mubr.bf16.gmra.mxu0 %v2696
      %v2800 = vpop.f32.mrf.mxu0
      %v2801 = vadd.f32 0.0, %v2800
      %v2802 = vpop.f32.mrf.mxu0
      %v2803 = vpop.f32.mrf.mxu0
      %v2804 = vadd.f32 0.0, %v2803
      %v2805 = vpop.f32.mrf.mxu0
      %2806 = vmatprep.mubr.bf16.mxu0 0
      %2807 = vmatmul.mubr.bf16.gmra.mxu0 %v2697
      %v2808 = vpop.f32.mrf.mxu0
      %v2809 = vadd.f32 0.0, %v2808
      %v2810 = vpop.f32.mrf.mxu0
      %v2811 = vpop.f32.mrf.mxu0
      %v2812 = vadd.f32 0.0, %v2811
      %v2813 = vpop.f32.mrf.mxu0
      %2814 = vdwg.mxu0
      %v2815 = vadd.f32 %v2668, %v2785
      %v2816 = vadd.f32 %v2669, %v2788
      %v2817 = vadd.f32 %v2670, %v2793
      %v2818 = vadd.f32 %v2671, %v2796
      %v2819 = vadd.f32 %v2672, %v2801
      %v2820 = vadd.f32 %v2673, %v2804
      %v2821 = vadd.f32 %v2674, %v2809
      %v2822 = vadd.f32 %v2675, %v2812
      %s2823 = scalar_lea.vmem %s2, 320
      %v2824 = vld [vmem:[%s2823] sm:$0xf]
      %v2825 = vld [vmem:[%s2823 + $0x4] sm:$0xf]
      %v2826 = vld [vmem:[%s2823 + $0x8] sm:$0xf]
      %v2827 = vld [vmem:[%s2823 + $0xc] sm:$0xf]
      %v2828 = vld [vmem:[%s2823 + $0x10] sm:$0xf]
      %v2829 = vld [vmem:[%s2823 + $0x14] sm:$0xf]
      %v2830 = vld [vmem:[%s2823 + $0x18] sm:$0xf]
      %v2831 = vld [vmem:[%s2823 + $0x1c] sm:$0xf]
      %v2832 = vld [vmem:[%s2823 + $0x20] sm:$0xf]
      %v2833 = vld [vmem:[%s2823 + $0x24] sm:$0xf]
      %v2834 = vld [vmem:[%s2823 + $0x28] sm:$0xf]
      %v2835 = vld [vmem:[%s2823 + $0x2c] sm:$0xf]
      %v2836 = vld [vmem:[%s2823 + $0x30] sm:$0xf]
      %v2837 = vld [vmem:[%s2823 + $0x34] sm:$0xf]
      %v2838 = vld [vmem:[%s2823 + $0x38] sm:$0xf]
      %v2839 = vld [vmem:[%s2823 + $0x3c] sm:$0xf]
      %v2840 = vunpack.c.l.b16 %v1985
      %v2841 = vpack.c.b16 %v2393, %v2392
      %v2842 = vpack.c.b16 %v2395, %v2394
      %v2843 = vpack.c.b16 %v2397, %v2396
      %v2844 = vpack.c.b16 %v2840, %v2398
      %v2865 = vunpack.c.l.b16 %v2824
      %v2866 = vunpack.c.l.b16 %v2825
      %v2867 = vunpack.c.l.b16 %v2826
      %v2868 = vunpack.c.l.b16 %v2827
      %v2869 = vunpack.c.l.b16 %v2828
      %v2870 = vunpack.c.l.b16 %v2829
      %v2871 = vunpack.c.l.b16 %v2830
      %v2872 = vunpack.c.l.b16 %v2831
      %v2873 = vunpack.c.l.b16 %v2832
      %v2874 = vunpack.c.l.b16 %v2833
      %v2875 = vunpack.c.l.b16 %v2834
      %v2876 = vunpack.c.l.b16 %v2835
      %v2877 = vunpack.c.l.b16 %v2836
      %v2878 = vunpack.c.l.b16 %v2837
      %v2879 = vunpack.c.l.b16 %v2838
      %v2880 = vunpack.c.l.b16 %v2839
      %v2881 = vpack.c.b16 %v2866, %v2865
      %v2882 = vpack.c.b16 %v2868, %v2867
      %v2883 = vpack.c.b16 %v2870, %v2869
      %v2884 = vpack.c.b16 %v2872, %v2871
      %v2885 = vpack.c.b16 %v2874, %v2873
      %v2886 = vpack.c.b16 %v2876, %v2875
      %v2887 = vpack.c.b16 %v2878, %v2877
      %v2888 = vpack.c.b16 %v2880, %v2879
      %2897 = vmatprep.subr.bf16.mxu0 0
      %2898 = vmatpush1.bf16.msra.mxu0 %v2888
      %2899 = vmatprep.subr.bf16.mxu0 0
      %2900 = vmatpush1.bf16.msra.mxu0 %v2887
      %2901 = vmatprep.subr.bf16.mxu0 0
      %2902 = vmatpush1.bf16.msra.mxu0 %v2886
      %2903 = vmatprep.subr.bf16.mxu0 0
      %2904 = vmatpush1.bf16.msra.mxu0 %v2885
      %2905 = vmatprep.subr.bf16.mxu0 0
      %2906 = vmatpush1.bf16.msra.mxu0 %v2884
      %2907 = vmatprep.subr.bf16.mxu0 0
      %2908 = vmatpush1.bf16.msra.mxu0 %v2883
      %2909 = vmatprep.subr.bf16.mxu0 0
      %2910 = vmatpush1.bf16.msra.mxu0 %v2882
      %2911 = vmatprep.subr.bf16.mxu0 0
      %2912 = vmatpush1.bf16.msra.mxu0 %v2881
      %2913 = vmatprep.subr.bf16.mxu0 0
      %2914 = vmatpush2.bf16.msra.mxu0 0
      %2915 = vmatprep.subr.bf16.mxu0 0
      %2916 = vmatpush2.bf16.msra.mxu0 0
      %2917 = vmatprep.subr.bf16.mxu0 0
      %2918 = vmatpush2.bf16.msra.mxu0 0
      %2919 = vmatprep.subr.bf16.mxu0 0
      %2920 = vmatpush2.bf16.msra.mxu0 0
      %2921 = vmatprep.subr.bf16.mxu0 0
      %2922 = vmatpush2.bf16.msra.mxu0 0
      %2923 = vmatprep.subr.bf16.mxu0 0
      %2924 = vmatpush2.bf16.msra.mxu0 0
      %2925 = vmatprep.subr.bf16.mxu0 0
      %2926 = vmatpush2.bf16.msra.mxu0 0
      %2927 = vmatprep.subr.bf16.mxu0 0
      %2928 = vmatpush2.bf16.msra.mxu0 0
      %2929 = vmatprep.mubr.bf16.mxu0 0
      %2930 = vmatmul.mubr.bf16.gmra.mxu0 %v2841
      %v2931 = vpop.f32.mrf.mxu0
      %v2932 = vadd.f32 0.0, %v2931
      %v2933 = vpop.f32.mrf.mxu0
      %v2934 = vpop.f32.mrf.mxu0
      %v2935 = vadd.f32 0.0, %v2934
      %v2936 = vpop.f32.mrf.mxu0
      %2937 = vmatprep.mubr.bf16.mxu0 0
      %2938 = vmatmul.mubr.bf16.gmra.mxu0 %v2842
      %v2939 = vpop.f32.mrf.mxu0
      %v2940 = vadd.f32 0.0, %v2939
      %v2941 = vpop.f32.mrf.mxu0
      %v2942 = vpop.f32.mrf.mxu0
      %v2943 = vadd.f32 0.0, %v2942
      %v2944 = vpop.f32.mrf.mxu0
      %2945 = vmatprep.mubr.bf16.mxu0 0
      %2946 = vmatmul.mubr.bf16.gmra.mxu0 %v2843
      %v2947 = vpop.f32.mrf.mxu0
      %v2948 = vadd.f32 0.0, %v2947
      %v2949 = vpop.f32.mrf.mxu0
      %v2950 = vpop.f32.mrf.mxu0
      %v2951 = vadd.f32 0.0, %v2950
      %v2952 = vpop.f32.mrf.mxu0
      %2953 = vmatprep.mubr.bf16.mxu0 0
      %2954 = vmatmul.mubr.bf16.gmra.mxu0 %v2844
      %v2955 = vpop.f32.mrf.mxu0
      %v2956 = vadd.f32 0.0, %v2955
      %v2957 = vpop.f32.mrf.mxu0
      %v2958 = vpop.f32.mrf.mxu0
      %v2959 = vadd.f32 0.0, %v2958
      %v2960 = vpop.f32.mrf.mxu0
      %2961 = vdwg.mxu0
      %v2962 = vadd.f32 %v2815, %v2932
      %v2963 = vadd.f32 %v2816, %v2935
      %v2964 = vadd.f32 %v2817, %v2940
      %v2965 = vadd.f32 %v2818, %v2943
      %v2966 = vadd.f32 %v2819, %v2948
      %v2967 = vadd.f32 %v2820, %v2951
      %v2968 = vadd.f32 %v2821, %v2956
      %v2969 = vadd.f32 %v2822, %v2959
      %s2970 = scalar_lea.vmem %s2, 384
      %v2971 = vld [vmem:[%s2970] sm:$0xf]
      %v2972 = vld [vmem:[%s2970 + $0x4] sm:$0xf]
      %v2973 = vld [vmem:[%s2970 + $0x8] sm:$0xf]
      %v2974 = vld [vmem:[%s2970 + $0xc] sm:$0xf]
      %v2975 = vld [vmem:[%s2970 + $0x10] sm:$0xf]
      %v2976 = vld [vmem:[%s2970 + $0x14] sm:$0xf]
      %v2977 = vld [vmem:[%s2970 + $0x18] sm:$0xf]
      %v2978 = vld [vmem:[%s2970 + $0x1c] sm:$0xf]
      %v2979 = vld [vmem:[%s2970 + $0x20] sm:$0xf]
      %v2980 = vld [vmem:[%s2970 + $0x24] sm:$0xf]
      %v2981 = vld [vmem:[%s2970 + $0x28] sm:$0xf]
      %v2982 = vld [vmem:[%s2970 + $0x2c] sm:$0xf]
      %v2983 = vld [vmem:[%s2970 + $0x30] sm:$0xf]
      %v2984 = vld [vmem:[%s2970 + $0x34] sm:$0xf]
      %v2985 = vld [vmem:[%s2970 + $0x38] sm:$0xf]
      %v2986 = vld [vmem:[%s2970 + $0x3c] sm:$0xf]
      %v2988 = vunpack.c.l.b16 %v1769
      %v2989 = vpack.c.b16 %v2988, %v2546
      %v3007 = vunpack.c.l.b16 %v2971
      %v3008 = vunpack.c.l.b16 %v2972
      %v3009 = vunpack.c.l.b16 %v2973
      %v3010 = vunpack.c.l.b16 %v2974
      %v3011 = vunpack.c.l.b16 %v2975
      %v3012 = vunpack.c.l.b16 %v2976
      %v3013 = vunpack.c.l.b16 %v2977
      %v3014 = vunpack.c.l.b16 %v2978
      %v3015 = vunpack.c.l.b16 %v2979
      %v3016 = vunpack.c.l.b16 %v2980
      %v3017 = vunpack.c.l.b16 %v2981
      %v3018 = vunpack.c.l.b16 %v2982
      %v3019 = vunpack.c.l.b16 %v2983
      %v3020 = vunpack.c.l.b16 %v2984
      %v3021 = vunpack.c.l.b16 %v2985
      %v3022 = vunpack.c.l.b16 %v2986
      %v3023 = vpack.c.b16 %v3008, %v3007
      %v3024 = vpack.c.b16 %v3010, %v3009
      %v3025 = vpack.c.b16 %v3012, %v3011
      %v3026 = vpack.c.b16 %v3014, %v3013
      %v3027 = vpack.c.b16 %v3016, %v3015
      %v3028 = vpack.c.b16 %v3018, %v3017
      %v3029 = vpack.c.b16 %v3020, %v3019
      %v3030 = vpack.c.b16 %v3022, %v3021
      %3039 = vmatprep.subr.bf16.mxu0 0
      %3040 = vmatpush1.bf16.msra.mxu0 %v3030
      %3041 = vmatprep.subr.bf16.mxu0 0
      %3042 = vmatpush1.bf16.msra.mxu0 %v3029
      %3043 = vmatprep.subr.bf16.mxu0 0
      %3044 = vmatpush1.bf16.msra.mxu0 %v3028
      %3045 = vmatprep.subr.bf16.mxu0 0
      %3046 = vmatpush1.bf16.msra.mxu0 %v3027
      %3047 = vmatprep.subr.bf16.mxu0 0
      %3048 = vmatpush1.bf16.msra.mxu0 %v3026
      %3049 = vmatprep.subr.bf16.mxu0 0
      %3050 = vmatpush1.bf16.msra.mxu0 %v3025
      %3051 = vmatprep.subr.bf16.mxu0 0
      %3052 = vmatpush1.bf16.msra.mxu0 %v3024
      %3053 = vmatprep.subr.bf16.mxu0 0
      %3054 = vmatpush1.bf16.msra.mxu0 %v3023
      %3055 = vmatprep.subr.bf16.mxu0 0
      %3056 = vmatpush2.bf16.msra.mxu0 0
      %3057 = vmatprep.subr.bf16.mxu0 0
      %3058 = vmatpush2.bf16.msra.mxu0 0
      %3059 = vmatprep.subr.bf16.mxu0 0
      %3060 = vmatpush2.bf16.msra.mxu0 0
      %3061 = vmatprep.subr.bf16.mxu0 0
      %3062 = vmatpush2.bf16.msra.mxu0 0
      %3063 = vmatprep.subr.bf16.mxu0 0
      %3064 = vmatpush2.bf16.msra.mxu0 0
      %3065 = vmatprep.subr.bf16.mxu0 0
      %3066 = vmatpush2.bf16.msra.mxu0 0
      %3067 = vmatprep.subr.bf16.mxu0 0
      %3068 = vmatpush2.bf16.msra.mxu0 0
      %3069 = vmatprep.subr.bf16.mxu0 0
      %3070 = vmatpush2.bf16.msra.mxu0 0
      %3071 = vmatprep.mubr.bf16.mxu0 0
      %3072 = vmatmul.mubr.bf16.gmra.mxu0 %v2023
      %v3073 = vpop.f32.mrf.mxu0
      %v3074 = vadd.f32 0.0, %v3073
      %v3075 = vpop.f32.mrf.mxu0
      %v3076 = vpop.f32.mrf.mxu0
      %v3077 = vadd.f32 0.0, %v3076
      %v3078 = vpop.f32.mrf.mxu0
      %3079 = vmatprep.mubr.bf16.mxu0 0
      %3080 = vmatmul.mubr.bf16.gmra.mxu0 %v2024
      %v3081 = vpop.f32.mrf.mxu0
      %v3082 = vadd.f32 0.0, %v3081
      %v3083 = vpop.f32.mrf.mxu0
      %v3084 = vpop.f32.mrf.mxu0
      %v3085 = vadd.f32 0.0, %v3084
      %v3086 = vpop.f32.mrf.mxu0
      %3087 = vmatprep.mubr.bf16.mxu0 0
      %3088 = vmatmul.mubr.bf16.gmra.mxu0 %v2025
      %v3089 = vpop.f32.mrf.mxu0
      %v3090 = vadd.f32 0.0, %v3089
      %v3091 = vpop.f32.mrf.mxu0
      %v3092 = vpop.f32.mrf.mxu0
      %v3093 = vadd.f32 0.0, %v3092
      %v3094 = vpop.f32.mrf.mxu0
      %3095 = vmatprep.mubr.bf16.mxu0 0
      %3096 = vmatmul.mubr.bf16.gmra.mxu0 %v2989
      %v3097 = vpop.f32.mrf.mxu0
      %v3098 = vadd.f32 0.0, %v3097
      %v3099 = vpop.f32.mrf.mxu0
      %v3100 = vpop.f32.mrf.mxu0
      %v3101 = vadd.f32 0.0, %v3100
      %v3102 = vpop.f32.mrf.mxu0
      %3103 = vdwg.mxu0
      %v3104 = vadd.f32 %v2962, %v3074
      %v3105 = vadd.f32 %v2963, %v3077
      %v3106 = vadd.f32 %v2964, %v3082
      %v3107 = vadd.f32 %v2965, %v3085
      %v3108 = vadd.f32 %v2966, %v3090
      %v3109 = vadd.f32 %v2967, %v3093
      %v3110 = vadd.f32 %v2968, %v3098
      %v3111 = vadd.f32 %v2969, %v3101
      %s3112 = scalar_lea.vmem %s2, 448
      %v3113 = vld [vmem:[%s3112] sm:$0xf]
      %v3114 = vld [vmem:[%s3112 + $0x4] sm:$0xf]
      %v3115 = vld [vmem:[%s3112 + $0x8] sm:$0xf]
      %v3116 = vld [vmem:[%s3112 + $0xc] sm:$0xf]
      %v3117 = vld [vmem:[%s3112 + $0x10] sm:$0xf]
      %v3118 = vld [vmem:[%s3112 + $0x14] sm:$0xf]
      %v3119 = vld [vmem:[%s3112 + $0x18] sm:$0xf]
      %v3120 = vld [vmem:[%s3112 + $0x1c] sm:$0xf]
      %v3121 = vld [vmem:[%s3112 + $0x20] sm:$0xf]
      %v3122 = vld [vmem:[%s3112 + $0x24] sm:$0xf]
      %v3123 = vld [vmem:[%s3112 + $0x28] sm:$0xf]
      %v3124 = vld [vmem:[%s3112 + $0x2c] sm:$0xf]
      %v3125 = vld [vmem:[%s3112 + $0x30] sm:$0xf]
      %v3126 = vld [vmem:[%s3112 + $0x34] sm:$0xf]
      %v3127 = vld [vmem:[%s3112 + $0x38] sm:$0xf]
      %v3128 = vld [vmem:[%s3112 + $0x3c] sm:$0xf]
      %v3129 = vunpack.c.l.b16 %v1919
      %v3130 = vpack.c.b16 %v3129, %v2693
      %v3148 = vunpack.c.l.b16 %v3113
      %v3149 = vunpack.c.l.b16 %v3114
      %v3150 = vunpack.c.l.b16 %v3115
      %v3151 = vunpack.c.l.b16 %v3116
      %v3152 = vunpack.c.l.b16 %v3117
      %v3153 = vunpack.c.l.b16 %v3118
      %v3154 = vunpack.c.l.b16 %v3119
      %v3155 = vunpack.c.l.b16 %v3120
      %v3156 = vunpack.c.l.b16 %v3121
      %v3157 = vunpack.c.l.b16 %v3122
      %v3158 = vunpack.c.l.b16 %v3123
      %v3159 = vunpack.c.l.b16 %v3124
      %v3160 = vunpack.c.l.b16 %v3125
      %v3161 = vunpack.c.l.b16 %v3126
      %v3162 = vunpack.c.l.b16 %v3127
      %v3163 = vunpack.c.l.b16 %v3128
      %v3164 = vpack.c.b16 %v3149, %v3148
      %v3165 = vpack.c.b16 %v3151, %v3150
      %v3166 = vpack.c.b16 %v3153, %v3152
      %v3167 = vpack.c.b16 %v3155, %v3154
      %v3168 = vpack.c.b16 %v3157, %v3156
      %v3169 = vpack.c.b16 %v3159, %v3158
      %v3170 = vpack.c.b16 %v3161, %v3160
      %v3171 = vpack.c.b16 %v3163, %v3162
      %3180 = vmatprep.subr.bf16.mxu0 0
      %3181 = vmatpush1.bf16.msra.mxu0 %v3171
      %3182 = vmatprep.subr.bf16.mxu0 0
      %3183 = vmatpush1.bf16.msra.mxu0 %v3170
      %3184 = vmatprep.subr.bf16.mxu0 0
      %3185 = vmatpush1.bf16.msra.mxu0 %v3169
      %3186 = vmatprep.subr.bf16.mxu0 0
      %3187 = vmatpush1.bf16.msra.mxu0 %v3168
      %3188 = vmatprep.subr.bf16.mxu0 0
      %3189 = vmatpush1.bf16.msra.mxu0 %v3167
      %3190 = vmatprep.subr.bf16.mxu0 0
      %3191 = vmatpush1.bf16.msra.mxu0 %v3166
      %3192 = vmatprep.subr.bf16.mxu0 0
      %3193 = vmatpush1.bf16.msra.mxu0 %v3165
      %3194 = vmatprep.subr.bf16.mxu0 0
      %3195 = vmatpush1.bf16.msra.mxu0 %v3164
      %3196 = vmatprep.subr.bf16.mxu0 0
      %3197 = vmatpush2.bf16.msra.mxu0 0
      %3198 = vmatprep.subr.bf16.mxu0 0
      %3199 = vmatpush2.bf16.msra.mxu0 0
      %3200 = vmatprep.subr.bf16.mxu0 0
      %3201 = vmatpush2.bf16.msra.mxu0 0
      %3202 = vmatprep.subr.bf16.mxu0 0
      %3203 = vmatpush2.bf16.msra.mxu0 0
      %3204 = vmatprep.subr.bf16.mxu0 0
      %3205 = vmatpush2.bf16.msra.mxu0 0
      %3206 = vmatprep.subr.bf16.mxu0 0
      %3207 = vmatpush2.bf16.msra.mxu0 0
      %3208 = vmatprep.subr.bf16.mxu0 0
      %3209 = vmatpush2.bf16.msra.mxu0 0
      %3210 = vmatprep.subr.bf16.mxu0 0
      %3211 = vmatpush2.bf16.msra.mxu0 0
      %3212 = vmatprep.mubr.bf16.mxu0 0
      %3213 = vmatmul.mubr.bf16.gmra.mxu0 %v2246
      %v3214 = vpop.f32.mrf.mxu0
      %v3215 = vadd.f32 0.0, %v3214
      %v3216 = vpop.f32.mrf.mxu0
      %v3217 = vpop.f32.mrf.mxu0
      %v3218 = vadd.f32 0.0, %v3217
      %v3219 = vpop.f32.mrf.mxu0
      %3220 = vmatprep.mubr.bf16.mxu0 0
      %3221 = vmatmul.mubr.bf16.gmra.mxu0 %v2247
      %v3222 = vpop.f32.mrf.mxu0
      %v3223 = vadd.f32 0.0, %v3222
      %v3224 = vpop.f32.mrf.mxu0
      %v3225 = vpop.f32.mrf.mxu0
      %v3226 = vadd.f32 0.0, %v3225
      %v3227 = vpop.f32.mrf.mxu0
      %3228 = vmatprep.mubr.bf16.mxu0 0
      %3229 = vmatmul.mubr.bf16.gmra.mxu0 %v2248
      %v3230 = vpop.f32.mrf.mxu0
      %v3231 = vadd.f32 0.0, %v3230
      %v3232 = vpop.f32.mrf.mxu0
      %v3233 = vpop.f32.mrf.mxu0
      %v3234 = vadd.f32 0.0, %v3233
      %v3235 = vpop.f32.mrf.mxu0
      %3236 = vmatprep.mubr.bf16.mxu0 0
      %3237 = vmatmul.mubr.bf16.gmra.mxu0 %v3130
      %v3238 = vpop.f32.mrf.mxu0
      %v3239 = vadd.f32 0.0, %v3238
      %v3240 = vpop.f32.mrf.mxu0
      %v3241 = vpop.f32.mrf.mxu0
      %v3242 = vadd.f32 0.0, %v3241
      %v3243 = vpop.f32.mrf.mxu0
      %3244 = vdwg.mxu0
      %v3245 = vadd.f32 %v3104, %v3215
      %v3246 = vadd.f32 %v3105, %v3218
      %v3247 = vadd.f32 %v3106, %v3223
      %v3248 = vadd.f32 %v3107, %v3226
      %v3249 = vadd.f32 %v3108, %v3231
      %v3250 = vadd.f32 %v3109, %v3234
      %v3251 = vadd.f32 %v3110, %v3239
      %v3252 = vadd.f32 %v3111, %v3242
      %s3253 = scalar_lea.vmem %s2, 512
      %v3254 = vld [vmem:[%s3253] sm:$0xf]
      %v3255 = vld [vmem:[%s3253 + $0x4] sm:$0xf]
      %v3256 = vld [vmem:[%s3253 + $0x8] sm:$0xf]
      %v3257 = vld [vmem:[%s3253 + $0xc] sm:$0xf]
      %v3258 = vld [vmem:[%s3253 + $0x10] sm:$0xf]
      %v3259 = vld [vmem:[%s3253 + $0x14] sm:$0xf]
      %v3260 = vld [vmem:[%s3253 + $0x18] sm:$0xf]
      %v3261 = vld [vmem:[%s3253 + $0x1c] sm:$0xf]
      %v3262 = vld [vmem:[%s3253 + $0x20] sm:$0xf]
      %v3263 = vld [vmem:[%s3253 + $0x24] sm:$0xf]
      %v3264 = vld [vmem:[%s3253 + $0x28] sm:$0xf]
      %v3265 = vld [vmem:[%s3253 + $0x2c] sm:$0xf]
      %v3266 = vld [vmem:[%s3253 + $0x30] sm:$0xf]
      %v3267 = vld [vmem:[%s3253 + $0x34] sm:$0xf]
      %v3268 = vld [vmem:[%s3253 + $0x38] sm:$0xf]
      %v3269 = vld [vmem:[%s3253 + $0x3c] sm:$0xf]
      %v3270 = vunpack.c.l.b16 %v1989
      %v3271 = vpack.c.b16 %v3270, %v2840
      %v3289 = vunpack.c.l.b16 %v3254
      %v3290 = vunpack.c.l.b16 %v3255
      %v3291 = vunpack.c.l.b16 %v3256
      %v3292 = vunpack.c.l.b16 %v3257
      %v3293 = vunpack.c.l.b16 %v3258
      %v3294 = vunpack.c.l.b16 %v3259
      %v3295 = vunpack.c.l.b16 %v3260
      %v3296 = vunpack.c.l.b16 %v3261
      %v3297 = vunpack.c.l.b16 %v3262
      %v3298 = vunpack.c.l.b16 %v3263
      %v3299 = vunpack.c.l.b16 %v3264
      %v3300 = vunpack.c.l.b16 %v3265
      %v3301 = vunpack.c.l.b16 %v3266
      %v3302 = vunpack.c.l.b16 %v3267
      %v3303 = vunpack.c.l.b16 %v3268
      %v3304 = vunpack.c.l.b16 %v3269
      %v3305 = vpack.c.b16 %v3290, %v3289
      %v3306 = vpack.c.b16 %v3292, %v3291
      %v3307 = vpack.c.b16 %v3294, %v3293
      %v3308 = vpack.c.b16 %v3296, %v3295
      %v3309 = vpack.c.b16 %v3298, %v3297
      %v3310 = vpack.c.b16 %v3300, %v3299
      %v3311 = vpack.c.b16 %v3302, %v3301
      %v3312 = vpack.c.b16 %v3304, %v3303
      %3321 = vmatprep.subr.bf16.mxu0 0
      %3322 = vmatpush1.bf16.msra.mxu0 %v3312
      %3323 = vmatprep.subr.bf16.mxu0 0
      %3324 = vmatpush1.bf16.msra.mxu0 %v3311
      %3325 = vmatprep.subr.bf16.mxu0 0
      %3326 = vmatpush1.bf16.msra.mxu0 %v3310
      %3327 = vmatprep.subr.bf16.mxu0 0
      %3328 = vmatpush1.bf16.msra.mxu0 %v3309
      %3329 = vmatprep.subr.bf16.mxu0 0
      %3330 = vmatpush1.bf16.msra.mxu0 %v3308
      %3331 = vmatprep.subr.bf16.mxu0 0
      %3332 = vmatpush1.bf16.msra.mxu0 %v3307
      %3333 = vmatprep.subr.bf16.mxu0 0
      %3334 = vmatpush1.bf16.msra.mxu0 %v3306
      %3335 = vmatprep.subr.bf16.mxu0 0
      %3336 = vmatpush1.bf16.msra.mxu0 %v3305
      %3337 = vmatprep.subr.bf16.mxu0 0
      %3338 = vmatpush2.bf16.msra.mxu0 0
      %3339 = vmatprep.subr.bf16.mxu0 0
      %3340 = vmatpush2.bf16.msra.mxu0 0
      %3341 = vmatprep.subr.bf16.mxu0 0
      %3342 = vmatpush2.bf16.msra.mxu0 0
      %3343 = vmatprep.subr.bf16.mxu0 0
      %3344 = vmatpush2.bf16.msra.mxu0 0
      %3345 = vmatprep.subr.bf16.mxu0 0
      %3346 = vmatpush2.bf16.msra.mxu0 0
      %3347 = vmatprep.subr.bf16.mxu0 0
      %3348 = vmatpush2.bf16.msra.mxu0 0
      %3349 = vmatprep.subr.bf16.mxu0 0
      %3350 = vmatpush2.bf16.msra.mxu0 0
      %3351 = vmatprep.subr.bf16.mxu0 0
      %3352 = vmatpush2.bf16.msra.mxu0 0
      %3353 = vmatprep.mubr.bf16.mxu0 0
      %3354 = vmatmul.mubr.bf16.gmra.mxu0 %v2400
      %v3355 = vpop.f32.mrf.mxu0
      %v3356 = vadd.f32 0.0, %v3355
      %v3357 = vpop.f32.mrf.mxu0
      %v3358 = vpop.f32.mrf.mxu0
      %v3359 = vadd.f32 0.0, %v3358
      %v3360 = vpop.f32.mrf.mxu0
      %3361 = vmatprep.mubr.bf16.mxu0 0
      %3362 = vmatmul.mubr.bf16.gmra.mxu0 %v2401
      %v3363 = vpop.f32.mrf.mxu0
      %v3364 = vadd.f32 0.0, %v3363
      %v3365 = vpop.f32.mrf.mxu0
      %v3366 = vpop.f32.mrf.mxu0
      %v3367 = vadd.f32 0.0, %v3366
      %v3368 = vpop.f32.mrf.mxu0
      %3369 = vmatprep.mubr.bf16.mxu0 0
      %3370 = vmatmul.mubr.bf16.gmra.mxu0 %v2402
      %v3371 = vpop.f32.mrf.mxu0
      %v3372 = vadd.f32 0.0, %v3371
      %v3373 = vpop.f32.mrf.mxu0
      %v3374 = vpop.f32.mrf.mxu0
      %v3375 = vadd.f32 0.0, %v3374
      %v3376 = vpop.f32.mrf.mxu0
      %3377 = vmatprep.mubr.bf16.mxu0 0
      %3378 = vmatmul.mubr.bf16.gmra.mxu0 %v3271
      %v3379 = vpop.f32.mrf.mxu0
      %v3380 = vadd.f32 0.0, %v3379
      %v3381 = vpop.f32.mrf.mxu0
      %v3382 = vpop.f32.mrf.mxu0
      %v3383 = vadd.f32 0.0, %v3382
      %v3384 = vpop.f32.mrf.mxu0
      %3385 = vdwg.mxu0
      %v3386 = vadd.f32 %v3245, %v3356
      %v3387 = vadd.f32 %v3246, %v3359
      %v3388 = vadd.f32 %v3247, %v3364
      %v3389 = vadd.f32 %v3248, %v3367
      %v3390 = vadd.f32 %v3249, %v3372
      %v3391 = vadd.f32 %v3250, %v3375
      %v3392 = vadd.f32 %v3251, %v3380
      %v3393 = vadd.f32 %v3252, %v3383
      %v3394 = vld [vmem:[%s6] sm:$0x1]
      %v3396 = vlaneseq
      %v3397 = vshrl.u32 %v3396, 7
      %v3398 = vsub.s32 0, %v3397
      %v3399 = vrot.slane %v3394, %v3398
      %v3401 = vmul.f32 %v3386, %v3399
      %v3402 = vmul.f32 %v3387, %v3399
      %v3403 = vmul.f32 %v3388, %v3399
      %v3404 = vmul.f32 %v3389, %v3399
      %v3405 = vmul.f32 %v3390, %v3399
      %v3406 = vmul.f32 %v3391, %v3399
      %v3407 = vmul.f32 %v3392, %v3399
      %v3408 = vmul.f32 %v3393, %v3399
      %v3409 = vld [vmem:[%s7] sm:$0x1]
      %v3411 = vlaneseq
      %v3412 = vshrl.u32 %v3411, 7
      %v3413 = vsub.s32 0, %v3412
      %v3414 = vrot.slane %v3409, %v3413
      %v3416 = vadd.f32 %v3401, %v3414
      %v3417 = vadd.f32 %v3402, %v3414
      %v3418 = vadd.f32 %v3403, %v3414
      %v3419 = vadd.f32 %v3404, %v3414
      %v3420 = vadd.f32 %v3405, %v3414
      %v3421 = vadd.f32 %v3406, %v3414
      %v3422 = vadd.f32 %v3407, %v3414
      %v3423 = vadd.f32 %v3408, %v3414
      %v3424 = vmax.f32 %v3416, 0.0
      %v3425 = vmax.f32 %v3417, 0.0
      %v3426 = vmax.f32 %v3418, 0.0
      %v3427 = vmax.f32 %v3419, 0.0
      %v3428 = vmax.f32 %v3420, 0.0
      %v3429 = vmax.f32 %v3421, 0.0
      %v3430 = vmax.f32 %v3422, 0.0
      %v3431 = vmax.f32 %v3423, 0.0
      %v3432 = vpack.c.bf16 %v3425, %v3424
      %v3433 = vpack.c.bf16 %v3427, %v3426
      %v3434 = vpack.c.bf16 %v3429, %v3428
      %v3435 = vpack.c.bf16 %v3431, %v3430
      %v3440 = vunpack.c.l.b16 %v3432
      %v3441 = vunpack.c.h.b16 %v3432
      %v3442 = vunpack.c.l.b16 %v3433
      %v3443 = vunpack.c.h.b16 %v3433
      %v3444 = vunpack.c.l.b16 %v3434
      %v3445 = vunpack.c.h.b16 %v3434
      %v3446 = vunpack.c.l.b16 %v3435
      %v3447 = vunpack.c.h.b16 %v3435
      %v3448 = vpack.c.b16 %v3440, %v3440
      %v3449 = vpack.c.b16 %v3441, %v3441
      %v3450 = vpack.c.b16 %v3442, %v3442
      %v3451 = vpack.c.b16 %v3443, %v3443
      %v3452 = vpack.c.b16 %v3444, %v3444
      %v3453 = vpack.c.b16 %v3445, %v3445
      %v3454 = vpack.c.b16 %v3446, %v3446
      %v3455 = vpack.c.b16 %v3447, %v3447
      %3464 = vst [vmem:[%s305] sm:$0xf] %v3448
      %3465 = vst [vmem:[%s305 + $0x4] sm:$0xf] %v3449
      %3466 = vst [vmem:[%s305 + $0x8] sm:$0xf] %v3450
      %3467 = vst [vmem:[%s305 + $0xc] sm:$0xf] %v3451
      %3468 = vst [vmem:[%s305 + $0x10] sm:$0xf] %v3452
      %3469 = vst [vmem:[%s305 + $0x14] sm:$0xf] %v3453
      %3470 = vst [vmem:[%s305 + $0x18] sm:$0xf] %v3454
      %3471 = vst [vmem:[%s305 + $0x1c] sm:$0xf] %v3455
      %p3472 = scmp.lt.s32.totalorder %s19, 1
      %s3473 = scalar_select %p3472, %s19, 1
      %s3474 = smul.addr %s3473, 8
      %s3475 = smul.addr %s3474, 4
      %s3476 = scalar_lea.vmem %s8, %s3475
      // Predicated region
      $region53: #{basic3d_resblock_pallas.1} parent=51 // pred_check
        %p3477 = pneg %p210
      $region54: #{basic3d_resblock_pallas.1} parent=51 // pred_check_branch
        %3479 = sbr.rel (%p3477) target = $region56
      $region55: #{basic3d_resblock_pallas.1} parent=51 // pred_region
        _
      $region56: #{basic3d_resblock_pallas.1} parent=51 // pred_fallthru
        _
    $region52: #{basic3d_resblock_pallas.1} parent=5 // pred_fallthru
      _
    %p3480 = scmp.le.s32.totalorder 2, %s14
    // Predicated region
    $region57: #{basic3d_resblock_pallas.1} parent=5 // pred_check
      %p3481 = pneg %p3480
    $region58: #{basic3d_resblock_pallas.1} parent=5 // pred_check_branch
      %3483 = sbr.rel (%p3481) target = $region60
    $region59: #{basic3d_resblock_pallas.1} parent=5 // pred_region
      %s3484 = ssub.s32 %s14, 2
      // Predicated region
      $region61: #{basic3d_resblock_pallas.1} parent=59 // pred_check
        %p3485 = pneg %p216
      $region62: #{basic3d_resblock_pallas.1} parent=59 // pred_check_branch
        %3487 = sbr.rel (%p3485) target = $region64
      $region63: #{basic3d_resblock_pallas.1} parent=59 // pred_region
        %p3488 = scmp.lt.s32.totalorder %s20, 1
        %s3489 = scalar_select %p3488, %s20, 1
        %s3490 = smul.addr %s3489, 8
        %s3491 = smul.addr %s3490, 4
        %s3492 = scalar_lea.vmem %s8, %s3491
      $region64: #{basic3d_resblock_pallas.1} parent=59 // pred_fallthru
        _
    $region60: #{basic3d_resblock_pallas.1} parent=5 // pred_fallthru
      _
  $region6: #{basic3d_resblock_pallas.1} parent=0 // loop_footer
    %s18 = sadd.s32 1, %s14
  $region7: #{basic3d_resblock_pallas.1} parent=0 // loop_footer_branch
    %13 = sbr.rel target = $region3
  $region8: #{basic3d_resblock_pallas.1} parent=0 // loop_exit
    _

</llo_original>
